<compile_context>
chip_gen: v7x
topology: tpu7x:2x2x1
jax: 0.10.0
libtpu: 0.0.40
codegen_flags: <defaults>
</compile_context>

<pallas_src>
import functools
import math

import jax
import jax.numpy as jnp
import numpy as np
from jax.experimental import pallas as pl
from jax.experimental.pallas import tpu as pltpu

NUM_HEADS = 4
EMBED_DIM = 32
HEAD_DIM = EMBED_DIM // NUM_HEADS


def _mha_kernel(q_ref, k_ref, v_ref, wqkv_ref, bqkv_ref, wo_ref, bo_ref,
                mask_ref, out_ref, attn_ref, *, fast_math):
    # Block shapes:
    #   q/k/v_ref : (bb, S, E)      bb = batch elements handled by this step
    #   wqkv_ref  : (3, H, E, dk)   pre-transposed per-head Wq/Wk/Wv (Q scaled)
    #   bqkv_ref  : (3, H, 1, dk)   per-head biases (Q bias scaled)
    #   wo_ref    : (H, dk, E)      per-head rows of Wo.T
    #   bo_ref    : (1, E)
    #   mask_ref  : (bb, 1, S)      key-padding mask (0 => masked)
    #   out_ref   : (bb, S, E)
    #   attn_ref  : (bb, H, S, S)
    bb, S, E = q_ref.shape
    H = wqkv_ref.shape[1]
    mm_dtype = jnp.bfloat16 if fast_math else jnp.float32

    wq = wqkv_ref[0].astype(mm_dtype)
    wk = wqkv_ref[1].astype(mm_dtype)
    wv = wqkv_ref[2].astype(mm_dtype)
    wo = wo_ref[...].astype(mm_dtype)
    bq = bqkv_ref[0]
    bk = bqkv_ref[1]
    bv = bqkv_ref[2]
    bo = bo_ref[...]

    for b in range(bb):  # static unroll: bb is B (collapsed grid) or B/2 (v7x)
        # Broadcast activations across heads (cheap major-dim broadcast) so the
        # head-batched projections land directly in (H, S, dk) layout — no
        # (S, H, dk) -> (H, S, dk) relayout anywhere in the kernel.
        xq = jnp.broadcast_to(q_ref[b].astype(mm_dtype)[None], (H, S, E))
        xk = jnp.broadcast_to(k_ref[b].astype(mm_dtype)[None], (H, S, E))
        xv = jnp.broadcast_to(v_ref[b].astype(mm_dtype)[None], (H, S, E))

        # Head-batched Q/K/V projections: (H,S,E) @ (H,E,dk) -> (H,S,dk).
        qh = jnp.einsum("hse,hed->hsd", xq, wq,
                        preferred_element_type=jnp.float32) + bq
        kh = jnp.einsum("hse,hed->hsd", xk, wk,
                        preferred_element_type=jnp.float32) + bk
        vh = jnp.einsum("hse,hed->hsd", xv, wv,
                        preferred_element_type=jnp.float32) + bv

        # Scores for all heads in one batched contraction (scale already folded
        # into the Q projection in the wrapper).
        scores = jnp.einsum("hqd,hkd->hqk",
                            qh.astype(mm_dtype), kh.astype(mm_dtype),
                            preferred_element_type=jnp.float32)  # (H, S, S)

        # Key-padding mask, applied once to the whole (H, S, S) block.
        key_masked = mask_ref[b] == 0.0                    # (1, S)
        scores = jnp.where(key_masked[None], -1e9, scores)

        # Softmax over keys (f32).
        m = jnp.max(scores, axis=-1, keepdims=True)
        e = jnp.exp(scores - m)
        denom = jnp.sum(e, axis=-1, keepdims=True)
        if fast_math:
            p = e * pl.reciprocal(denom, approx=True)      # EUP slot, near-free
        else:
            p = e / denom

        attn_ref[b] = p                                    # one (H,S,S) store

        # Attention-weighted values, then per-head output projection summed
        # over heads (mathematically identical to concat(heads) @ Wo.T).
        ctx = jnp.einsum("hqk,hkd->hqd",
                         p.astype(mm_dtype), vh.astype(mm_dtype),
                         preferred_element_type=jnp.float32)   # (H, S, dk)
        proj = jnp.einsum("hqd,hde->hqe", ctx.astype(mm_dtype), wo,
                          preferred_element_type=jnp.float32)  # (H, S, E)
        out_ref[b] = jnp.sum(proj, axis=0) + bo


def multihead_attention(q, k, v, weights, biases, mask=None, *,
                        num_batch_blocks=1, fast_math=False):
    """Multi-head attention forward.

    Args:
      q, k, v: (B, S, E) float32.
      weights: (4, E, E) stacked [Wq, Wk, Wv, Wo], nn.Linear convention
        (out_features, in_features); y = x @ W.T + b.
      biases: (4, E) stacked biases.
      mask: optional (B, S) key-padding mask; 0 entries masked (score -> -1e9).
      num_batch_blocks: grid size along the batch axis. 1 (default) collapses
        the grid into a single step (best on single-TC v5e/v6e); 2 lets the two
        TensorCores of a v7x chip each take half of the batch.
      fast_math: bf16 MXU operands (f32 accumulate) + approximate reciprocal.

    Returns:
      (output (B, S, E) f32, attention (B, H, S, S) f32)
    """
    # TODO(synk): per-query (B, S, S) masks are not wired up; only (B, S) key masks.
    B, S, E = q.shape
    H, dk = NUM_HEADS, HEAD_DIM
    assert E == EMBED_DIM and E % H == 0
    assert B % num_batch_blocks == 0
    bb = B // num_batch_blocks

    if mask is None:
        mask = jnp.ones((B, S), dtype=jnp.float32)
    mask3 = mask.astype(jnp.float32).reshape(B, 1, S)

    scale = 1.0 / math.sqrt(dk)

    def per_head(w_t):                         # (E_in, E_out) -> (H, E, dk)
        return w_t.reshape(E, H, dk).transpose(1, 0, 2)

    # Pre-transpose once in the wrapper (no .T inside the kernel), split per
    # head, and fold the attention scale into the Q projection.
    w_t = jnp.swapaxes(weights, 1, 2)          # (4, E_in, E_out)
    w_qkv = jnp.stack([per_head(w_t[0] * scale),
                       per_head(w_t[1]),
                       per_head(w_t[2])])                       # (3, H, E, dk)
    b_qkv = jnp.stack([(biases[0] * scale).reshape(H, 1, dk),
                       biases[1].reshape(H, 1, dk),
                       biases[2].reshape(H, 1, dk)])            # (3, H, 1, dk)
    w_o = w_t[3].reshape(H, dk, E)                              # (H, dk, E)
    b_o = biases[3].reshape(1, E)

    out_shapes = (
        jax.ShapeDtypeStruct((B, S, E), jnp.float32),
        jax.ShapeDtypeStruct((B, H, S, S), jnp.float32),
    )

    grid_spec = pltpu.PrefetchScalarGridSpec(
        num_scalar_prefetch=0,
        grid=(num_batch_blocks,),
        in_specs=[
            pl.BlockSpec((bb, S, E), lambda n: (n, 0, 0)),        # q
            pl.BlockSpec((bb, S, E), lambda n: (n, 0, 0)),        # k
            pl.BlockSpec((bb, S, E), lambda n: (n, 0, 0)),        # v
            pl.BlockSpec((3, H, E, dk), lambda n: (0, 0, 0, 0)),  # Wq/Wk/Wv per head
            pl.BlockSpec((3, H, 1, dk), lambda n: (0, 0, 0, 0)),  # bq/bk/bv per head
            pl.BlockSpec((H, dk, E), lambda n: (0, 0, 0)),        # Wo.T per head
            pl.BlockSpec((1, E), lambda n: (0, 0)),               # bo
            pl.BlockSpec((bb, 1, S), lambda n: (n, 0, 0)),        # key mask
        ],
        out_specs=[
            pl.BlockSpec((bb, S, E), lambda n: (n, 0, 0)),        # output
            pl.BlockSpec((bb, H, S, S), lambda n: (n, 0, 0, 0)),  # attention
        ],
    )

    kernel = functools.partial(_mha_kernel, fast_math=fast_math)
    return pl.pallas_call(
        kernel,
        out_shape=out_shapes,
        grid_spec=grid_spec,
        compiler_params=pltpu.CompilerParams(
            dimension_semantics=("parallel",)),
    )(q, k, v, w_qkv, b_qkv, w_o, b_o, mask3)


def _reference(q, k, v, weights, biases, mask):
    """Pure-JAX reference mirroring the PyTorch forward."""
    B, S, E = q.shape
    H, dk = NUM_HEADS, HEAD_DIM

    def lin(x, i):
        return x @ weights[i].T + biases[i]

    def split(x):
        return x.reshape(B, S, H, dk).transpose(0, 2, 1, 3)  # (B,H,S,dk)

    qh, kh, vh = split(lin(q, 0)), split(lin(k, 1)), split(lin(v, 2))
    scores = jnp.einsum("bhqd,bhkd->bhqk", qh, kh) / math.sqrt(dk)
    m = mask.reshape(B, 1, 1, S)
    scores = jnp.where(m == 0.0, -1e9, scores)
    p = jax.nn.softmax(scores, axis=-1)
    ctx = jnp.einsum("bhqk,bhkd->bhqd", p, vh)
    ctx = ctx.transpose(0, 2, 1, 3).reshape(B, S, E)
    return lin(ctx, 3), p


if __name__ == "__main__":
    B, S, E = 2, 8, EMBED_DIM

    key = jax.random.PRNGKey(0)
    kq, kk, kv, kw, kb, km = jax.random.split(key, 6)

    q = jax.random.normal(kq, (B, S, E), dtype=jnp.float32)
    k = jax.random.normal(kk, (B, S, E), dtype=jnp.float32)
    v = jax.random.normal(kv, (B, S, E), dtype=jnp.float32)

    # Deterministic nn.Linear-like uniform(-1/sqrt(E), 1/sqrt(E)) init.
    bound = 1.0 / math.sqrt(E)
    weights = jax.random.uniform(kw, (4, E, E), jnp.float32, -bound, bound)
    biases = jax.random.uniform(kb, (4, E), jnp.float32, -bound, bound)

    # Key-padding style mask: 0 => masked position.
    mask = (jax.random.uniform(km, (B, S)) > 0.2).astype(jnp.float32)

    ref_out, ref_attn = _reference(q, k, v, weights, biases, mask)

    # 1) Exact f32 path, fully collapsed grid (preferred on single-TC v5e/v6e).
    out, attn = multihead_attention(q, k, v, weights, biases, mask,
                                    num_batch_blocks=1, fast_math=False)
    out, attn = jax.block_until_ready((out, attn))
    np.testing.assert_allclose(np.asarray(out), np.asarray(ref_out),
                               rtol=1e-4, atol=1e-4)
    np.testing.assert_allclose(np.asarray(attn), np.asarray(ref_attn),
                               rtol=1e-4, atol=1e-4)

    # 2) Fast path: bf16 MXU operands + approx reciprocal, 2-way batch split
    #    (the grid shape that engages both TensorCores on v7x).
    out_f, attn_f = multihead_attention(q, k, v, weights, biases, mask,
                                        num_batch_blocks=2, fast_math=True)
    out_f, attn_f = jax.block_until_ready((out_f, attn_f))
    np.testing.assert_allclose(np.asarray(out_f), np.asarray(ref_out),
                               rtol=2e-2, atol=2e-2)
    np.testing.assert_allclose(np.asarray(attn_f), np.asarray(ref_attn),
                               rtol=2e-2, atol=2e-2)

    print("KERNEL_OK")
</pallas_src>

<mosaic_0001>
module attributes {stable_mosaic.version = 11 : i64} {
  func.func @_mha_kernel(%arg0: i32, %arg1: memref<2x8x32xf32, #tpu.memory_space<vmem>>, %arg2: memref<2x8x32xf32, #tpu.memory_space<vmem>>, %arg3: memref<2x8x32xf32, #tpu.memory_space<vmem>>, %arg4: memref<3x4x32x8xf32, #tpu.memory_space<vmem>>, %arg5: memref<3x4x1x8xf32, #tpu.memory_space<vmem>>, %arg6: memref<4x8x32xf32, #tpu.memory_space<vmem>>, %arg7: memref<1x32xf32, #tpu.memory_space<vmem>>, %arg8: memref<2x1x8xf32, #tpu.memory_space<vmem>>, %arg9: memref<2x8x32xf32, #tpu.memory_space<vmem>>, %arg10: memref<2x4x8x8xf32, #tpu.memory_space<vmem>>) attributes {dimension_semantics = [#tpu.dimension_semantics<parallel>], iteration_bounds = array<i64: 1>, scalar_prefetch = 0 : i64, scratch_operands = 0 : i64, tpu.core_type = #tpu.core_type<tc>, window_params = [{transform_indices = @transform_0, window_bounds = array<i64: 2, 8, 32>}, {transform_indices = @transform_1, window_bounds = array<i64: 2, 8, 32>}, {transform_indices = @transform_2, window_bounds = array<i64: 2, 8, 32>}, {pipeline_mode = #tpu.pipeline_mode<synchronous>, transform_indices = @transform_3, window_bounds = array<i64: 3, 4, 32, 8>}, {pipeline_mode = #tpu.pipeline_mode<synchronous>, transform_indices = @transform_4, window_bounds = array<i64: 3, 4, 1, 8>}, {pipeline_mode = #tpu.pipeline_mode<synchronous>, transform_indices = @transform_5, window_bounds = array<i64: 4, 8, 32>}, {pipeline_mode = #tpu.pipeline_mode<synchronous>, transform_indices = @transform_6, window_bounds = array<i64: 1, 32>}, {transform_indices = @transform_7, window_bounds = array<i64: 2, 1, 8>}, {transform_indices = @transform_8, window_bounds = array<i64: 2, 8, 32>}, {transform_indices = @transform_9, window_bounds = array<i64: 2, 4, 8, 8>}]} {
    %c0 = arith.constant 0 : index
    %c0_0 = arith.constant 0 : index
    %c0_1 = arith.constant 0 : index
    %c0_2 = arith.constant 0 : index
    %0 = vector.load %arg4[%c0, %c0_0, %c0_1, %c0_2] : memref<3x4x32x8xf32, #tpu.memory_space<vmem>>, vector<1x4x32x8xf32>
    %1 = vector.shape_cast %0 : vector<1x4x32x8xf32> to vector<4x32x8xf32>
    %c1 = arith.constant 1 : index
    %c0_3 = arith.constant 0 : index
    %c0_4 = arith.constant 0 : index
    %c0_5 = arith.constant 0 : index
    %2 = vector.load %arg4[%c1, %c0_3, %c0_4, %c0_5] : memref<3x4x32x8xf32, #tpu.memory_space<vmem>>, vector<1x4x32x8xf32>
    %3 = vector.shape_cast %2 : vector<1x4x32x8xf32> to vector<4x32x8xf32>
    %c2 = arith.constant 2 : index
    %c0_6 = arith.constant 0 : index
    %c0_7 = arith.constant 0 : index
    %c0_8 = arith.constant 0 : index
    %4 = vector.load %arg4[%c2, %c0_6, %c0_7, %c0_8] : memref<3x4x32x8xf32, #tpu.memory_space<vmem>>, vector<1x4x32x8xf32>
    %5 = vector.shape_cast %4 : vector<1x4x32x8xf32> to vector<4x32x8xf32>
    %c0_9 = arith.constant 0 : index
    %c0_10 = arith.constant 0 : index
    %c0_11 = arith.constant 0 : index
    %6 = vector.load %arg6[%c0_9, %c0_10, %c0_11] : memref<4x8x32xf32, #tpu.memory_space<vmem>>, vector<4x8x32xf32>
    %c0_12 = arith.constant 0 : index
    %c0_13 = arith.constant 0 : index
    %c0_14 = arith.constant 0 : index
    %c0_15 = arith.constant 0 : index
    %7 = vector.load %arg5[%c0_12, %c0_13, %c0_14, %c0_15] : memref<3x4x1x8xf32, #tpu.memory_space<vmem>>, vector<1x4x1x8xf32>
    %8 = vector.shape_cast %7 : vector<1x4x1x8xf32> to vector<4x1x8xf32>
    %c1_16 = arith.constant 1 : index
    %c0_17 = arith.constant 0 : index
    %c0_18 = arith.constant 0 : index
    %c0_19 = arith.constant 0 : index
    %9 = vector.load %arg5[%c1_16, %c0_17, %c0_18, %c0_19] : memref<3x4x1x8xf32, #tpu.memory_space<vmem>>, vector<1x4x1x8xf32>
    %10 = vector.shape_cast %9 : vector<1x4x1x8xf32> to vector<4x1x8xf32>
    %c2_20 = arith.constant 2 : index
    %c0_21 = arith.constant 0 : index
    %c0_22 = arith.constant 0 : index
    %c0_23 = arith.constant 0 : index
    %11 = vector.load %arg5[%c2_20, %c0_21, %c0_22, %c0_23] : memref<3x4x1x8xf32, #tpu.memory_space<vmem>>, vector<1x4x1x8xf32>
    %12 = vector.shape_cast %11 : vector<1x4x1x8xf32> to vector<4x1x8xf32>
    %c0_24 = arith.constant 0 : index
    %c0_25 = arith.constant 0 : index
    %13 = vector.load %arg7[%c0_24, %c0_25] : memref<1x32xf32, #tpu.memory_space<vmem>>, vector<1x32xf32>
    %c0_26 = arith.constant 0 : index
    %c0_27 = arith.constant 0 : index
    %c0_28 = arith.constant 0 : index
    %14 = vector.load %arg1[%c0_26, %c0_27, %c0_28] : memref<2x8x32xf32, #tpu.memory_space<vmem>>, vector<1x8x32xf32>
    %15 = vector.shape_cast %14 : vector<1x8x32xf32> to vector<8x32xf32>
    %16 = vector.shape_cast %15 : vector<8x32xf32> to vector<1x8x32xf32>
    %17 = vector.shape_cast %16 : vector<1x8x32xf32> to vector<1x8x32xf32>
    %18 = vector.broadcast %17 : vector<1x8x32xf32> to vector<4x8x32xf32>
    %c0_29 = arith.constant 0 : index
    %c0_30 = arith.constant 0 : index
    %c0_31 = arith.constant 0 : index
    %19 = vector.load %arg2[%c0_29, %c0_30, %c0_31] : memref<2x8x32xf32, #tpu.memory_space<vmem>>, vector<1x8x32xf32>
    %20 = vector.shape_cast %19 : vector<1x8x32xf32> to vector<8x32xf32>
    %21 = vector.shape_cast %20 : vector<8x32xf32> to vector<1x8x32xf32>
    %22 = vector.shape_cast %21 : vector<1x8x32xf32> to vector<1x8x32xf32>
    %23 = vector.broadcast %22 : vector<1x8x32xf32> to vector<4x8x32xf32>
    %c0_32 = arith.constant 0 : index
    %c0_33 = arith.constant 0 : index
    %c0_34 = arith.constant 0 : index
    %24 = vector.load %arg3[%c0_32, %c0_33, %c0_34] : memref<2x8x32xf32, #tpu.memory_space<vmem>>, vector<1x8x32xf32>
    %25 = vector.shape_cast %24 : vector<1x8x32xf32> to vector<8x32xf32>
    %26 = vector.shape_cast %25 : vector<8x32xf32> to vector<1x8x32xf32>
    %27 = vector.shape_cast %26 : vector<1x8x32xf32> to vector<1x8x32xf32>
    %28 = vector.broadcast %27 : vector<1x8x32xf32> to vector<4x8x32xf32>
    "tpu.trace_start"() <{level = 10 : i32, message = "hse,hed->hsd"}> : () -> ()
    %cst = arith.constant dense<0.000000e+00> : vector<4x8x8xf32>
    %29 = tpu.matmul %18, %1, %cst {dimension_numbers = #tpu.dot_dimension_numbers<[2], [1], [1], [2], [0, 0, 0, 1, 1, 2], [0], [0]>} : vector<4x8x32xf32>, vector<4x32x8xf32>, vector<4x8x8xf32> -> vector<4x8x8xf32>
    "tpu.trace_stop"() : () -> ()
    %30 = vector.broadcast %8 : vector<4x1x8xf32> to vector<4x8x8xf32>
    %31 = arith.addf %29, %30 : vector<4x8x8xf32>
    "tpu.trace_start"() <{level = 10 : i32, message = "hse,hed->hsd"}> : () -> ()
    %cst_35 = arith.constant dense<0.000000e+00> : vector<4x8x8xf32>
    %32 = tpu.matmul %23, %3, %cst_35 {dimension_numbers = #tpu.dot_dimension_numbers<[2], [1], [1], [2], [0, 0, 0, 1, 1, 2], [0], [0]>} : vector<4x8x32xf32>, vector<4x32x8xf32>, vector<4x8x8xf32> -> vector<4x8x8xf32>
    "tpu.trace_stop"() : () -> ()
    %33 = vector.broadcast %10 : vector<4x1x8xf32> to vector<4x8x8xf32>
    %34 = arith.addf %32, %33 : vector<4x8x8xf32>
    "tpu.trace_start"() <{level = 10 : i32, message = "hse,hed->hsd"}> : () -> ()
    %cst_36 = arith.constant dense<0.000000e+00> : vector<4x8x8xf32>
    %35 = tpu.matmul %28, %5, %cst_36 {dimension_numbers = #tpu.dot_dimension_numbers<[2], [1], [1], [2], [0, 0, 0, 1, 1, 2], [0], [0]>} : vector<4x8x32xf32>, vector<4x32x8xf32>, vector<4x8x8xf32> -> vector<4x8x8xf32>
    "tpu.trace_stop"() : () -> ()
    %36 = vector.broadcast %12 : vector<4x1x8xf32> to vector<4x8x8xf32>
    %37 = arith.addf %35, %36 : vector<4x8x8xf32>
    "tpu.trace_start"() <{level = 10 : i32, message = "hqd,hkd->hqk"}> : () -> ()
    %cst_37 = arith.constant dense<0.000000e+00> : vector<4x8x8xf32>
    %38 = tpu.matmul %31, %34, %cst_37 {dimension_numbers = #tpu.dot_dimension_numbers<[2], [2], [1], [1], [0, 0, 0, 1, 1, 1], [0], [0]>} : vector<4x8x8xf32>, vector<4x8x8xf32>, vector<4x8x8xf32> -> vector<4x8x8xf32>
    "tpu.trace_stop"() : () -> ()
    %c0_38 = arith.constant 0 : index
    %c0_39 = arith.constant 0 : index
    %c0_40 = arith.constant 0 : index
    %39 = vector.load %arg8[%c0_38, %c0_39, %c0_40] : memref<2x1x8xf32, #tpu.memory_space<vmem>>, vector<1x1x8xf32>
    %40 = vector.shape_cast %39 : vector<1x1x8xf32> to vector<1x8xf32>
    %cst_41 = arith.constant 0.000000e+00 : f32
    %41 = vector.broadcast %cst_41 : f32 to vector<1x8xf32>
    %42 = arith.cmpf oeq, %40, %41 : vector<1x8xf32>
    %43 = vector.shape_cast %42 : vector<1x8xi1> to vector<1x1x8xi1>
    %cst_42 = arith.constant -1.000000e+09 : f32
    %44 = vector.shape_cast %43 : vector<1x1x8xi1> to vector<1x1x8xi1>
    %45 = vector.broadcast %44 : vector<1x1x8xi1> to vector<4x8x8xi1>
    %46 = vector.broadcast %cst_42 : f32 to vector<4x8x8xf32>
    %47 = arith.select %45, %46, %38 : vector<4x8x8xi1>, vector<4x8x8xf32>
    %cst_43 = arith.constant dense<0xFF800000> : vector<4x8xf32>
    %48 = vector.multi_reduction <maximumf>, %47, %cst_43 [2] : vector<4x8x8xf32> to vector<4x8xf32>
    %49 = vector.shape_cast %48 : vector<4x8xf32> to vector<4x8x1xf32>
    %50 = vector.broadcast %49 : vector<4x8x1xf32> to vector<4x8x8xf32>
    %51 = arith.subf %47, %50 : vector<4x8x8xf32>
    %52 = math.exp %51 : vector<4x8x8xf32>
    %cst_44 = arith.constant dense<0.000000e+00> : vector<4x8xf32>
    %53 = vector.multi_reduction <add>, %52, %cst_44 [2] : vector<4x8x8xf32> to vector<4x8xf32>
    %54 = vector.shape_cast %53 : vector<4x8xf32> to vector<4x8x1xf32>
    %55 = vector.broadcast %54 : vector<4x8x1xf32> to vector<4x8x8xf32>
    %56 = arith.divf %52, %55 : vector<4x8x8xf32>
    %c0_45 = arith.constant 0 : index
    %c0_46 = arith.constant 0 : index
    %c0_47 = arith.constant 0 : index
    %c0_48 = arith.constant 0 : index
    %57 = vector.load %arg10[%c0_45, %c0_46, %c0_47, %c0_48] : memref<2x4x8x8xf32, #tpu.memory_space<vmem>>, vector<1x4x8x8xf32>
    %58 = vector.shape_cast %57 : vector<1x4x8x8xf32> to vector<4x8x8xf32>
    %59 = vector.shape_cast %56 : vector<4x8x8xf32> to vector<1x4x8x8xf32>
    tpu.vector_store %arg10[%c0_45, %c0_46, %c0_47, %c0_48], %59 {strides = array<i32>} : memref<2x4x8x8xf32, #tpu.memory_space<vmem>>, vector<1x4x8x8xf32>,
    "tpu.trace_start"() <{level = 10 : i32, message = "hqk,hkd->hqd"}> : () -> ()
    %cst_49 = arith.constant dense<0.000000e+00> : vector<4x8x8xf32>
    %60 = tpu.matmul %56, %37, %cst_49 {dimension_numbers = #tpu.dot_dimension_numbers<[2], [1], [1], [2], [0, 0, 0, 1, 1, 2], [0], [0]>} : vector<4x8x8xf32>, vector<4x8x8xf32>, vector<4x8x8xf32> -> vector<4x8x8xf32>
    "tpu.trace_stop"() : () -> ()
    "tpu.trace_start"() <{level = 10 : i32, message = "hqd,hde->hqe"}> : () -> ()
    %cst_50 = arith.constant dense<0.000000e+00> : vector<4x8x32xf32>
    %61 = tpu.matmul %60, %6, %cst_50 {dimension_numbers = #tpu.dot_dimension_numbers<[2], [1], [1], [2], [0, 0, 0, 1, 1, 2], [0], [0]>} : vector<4x8x8xf32>, vector<4x8x32xf32>, vector<4x8x32xf32> -> vector<4x8x32xf32>
    "tpu.trace_stop"() : () -> ()
    %cst_51 = arith.constant dense<0.000000e+00> : vector<8x32xf32>
    %62 = vector.multi_reduction <add>, %61, %cst_51 [0] : vector<4x8x32xf32> to vector<8x32xf32>
    %63 = vector.broadcast %13 : vector<1x32xf32> to vector<8x32xf32>
    %64 = arith.addf %62, %63 : vector<8x32xf32>
    %c0_52 = arith.constant 0 : index
    %c0_53 = arith.constant 0 : index
    %c0_54 = arith.constant 0 : index
    %65 = vector.load %arg9[%c0_52, %c0_53, %c0_54] : memref<2x8x32xf32, #tpu.memory_space<vmem>>, vector<1x8x32xf32>
    %66 = vector.shape_cast %65 : vector<1x8x32xf32> to vector<8x32xf32>
    %67 = vector.shape_cast %64 : vector<8x32xf32> to vector<1x8x32xf32>
    tpu.vector_store %arg9[%c0_52, %c0_53, %c0_54], %67 {strides = array<i32>} : memref<2x8x32xf32, #tpu.memory_space<vmem>>, vector<1x8x32xf32>,
    %c1_55 = arith.constant 1 : index
    %c0_56 = arith.constant 0 : index
    %c0_57 = arith.constant 0 : index
    %68 = vector.load %arg1[%c1_55, %c0_56, %c0_57] : memref<2x8x32xf32, #tpu.memory_space<vmem>>, vector<1x8x32xf32>
    %69 = vector.shape_cast %68 : vector<1x8x32xf32> to vector<8x32xf32>
    %70 = vector.shape_cast %69 : vector<8x32xf32> to vector<1x8x32xf32>
    %71 = vector.shape_cast %70 : vector<1x8x32xf32> to vector<1x8x32xf32>
    %72 = vector.broadcast %71 : vector<1x8x32xf32> to vector<4x8x32xf32>
    %c1_58 = arith.constant 1 : index
    %c0_59 = arith.constant 0 : index
    %c0_60 = arith.constant 0 : index
    %73 = vector.load %arg2[%c1_58, %c0_59, %c0_60] : memref<2x8x32xf32, #tpu.memory_space<vmem>>, vector<1x8x32xf32>
    %74 = vector.shape_cast %73 : vector<1x8x32xf32> to vector<8x32xf32>
    %75 = vector.shape_cast %74 : vector<8x32xf32> to vector<1x8x32xf32>
    %76 = vector.shape_cast %75 : vector<1x8x32xf32> to vector<1x8x32xf32>
    %77 = vector.broadcast %76 : vector<1x8x32xf32> to vector<4x8x32xf32>
    %c1_61 = arith.constant 1 : index
    %c0_62 = arith.constant 0 : index
    %c0_63 = arith.constant 0 : index
    %78 = vector.load %arg3[%c1_61, %c0_62, %c0_63] : memref<2x8x32xf32, #tpu.memory_space<vmem>>, vector<1x8x32xf32>
    %79 = vector.shape_cast %78 : vector<1x8x32xf32> to vector<8x32xf32>
    %80 = vector.shape_cast %79 : vector<8x32xf32> to vector<1x8x32xf32>
    %81 = vector.shape_cast %80 : vector<1x8x32xf32> to vector<1x8x32xf32>
    %82 = vector.broadcast %81 : vector<1x8x32xf32> to vector<4x8x32xf32>
    "tpu.trace_start"() <{level = 10 : i32, message = "hse,hed->hsd"}> : () -> ()
    %cst_64 = arith.constant dense<0.000000e+00> : vector<4x8x8xf32>
    %83 = tpu.matmul %72, %1, %cst_64 {dimension_numbers = #tpu.dot_dimension_numbers<[2], [1], [1], [2], [0, 0, 0, 1, 1, 2], [0], [0]>} : vector<4x8x32xf32>, vector<4x32x8xf32>, vector<4x8x8xf32> -> vector<4x8x8xf32>
    "tpu.trace_stop"() : () -> ()
    %84 = vector.broadcast %8 : vector<4x1x8xf32> to vector<4x8x8xf32>
    %85 = arith.addf %83, %84 : vector<4x8x8xf32>
    "tpu.trace_start"() <{level = 10 : i32, message = "hse,hed->hsd"}> : () -> ()
    %cst_65 = arith.constant dense<0.000000e+00> : vector<4x8x8xf32>
    %86 = tpu.matmul %77, %3, %cst_65 {dimension_numbers = #tpu.dot_dimension_numbers<[2], [1], [1], [2], [0, 0, 0, 1, 1, 2], [0], [0]>} : vector<4x8x32xf32>, vector<4x32x8xf32>, vector<4x8x8xf32> -> vector<4x8x8xf32>
    "tpu.trace_stop"() : () -> ()
    %87 = vector.broadcast %10 : vector<4x1x8xf32> to vector<4x8x8xf32>
    %88 = arith.addf %86, %87 : vector<4x8x8xf32>
    "tpu.trace_start"() <{level = 10 : i32, message = "hse,hed->hsd"}> : () -> ()
    %cst_66 = arith.constant dense<0.000000e+00> : vector<4x8x8xf32>
    %89 = tpu.matmul %82, %5, %cst_66 {dimension_numbers = #tpu.dot_dimension_numbers<[2], [1], [1], [2], [0, 0, 0, 1, 1, 2], [0], [0]>} : vector<4x8x32xf32>, vector<4x32x8xf32>, vector<4x8x8xf32> -> vector<4x8x8xf32>
    "tpu.trace_stop"() : () -> ()
    %90 = vector.broadcast %12 : vector<4x1x8xf32> to vector<4x8x8xf32>
    %91 = arith.addf %89, %90 : vector<4x8x8xf32>
    "tpu.trace_start"() <{level = 10 : i32, message = "hqd,hkd->hqk"}> : () -> ()
    %cst_67 = arith.constant dense<0.000000e+00> : vector<4x8x8xf32>
    %92 = tpu.matmul %85, %88, %cst_67 {dimension_numbers = #tpu.dot_dimension_numbers<[2], [2], [1], [1], [0, 0, 0, 1, 1, 1], [0], [0]>} : vector<4x8x8xf32>, vector<4x8x8xf32>, vector<4x8x8xf32> -> vector<4x8x8xf32>
    "tpu.trace_stop"() : () -> ()
    %c1_68 = arith.constant 1 : index
    %c0_69 = arith.constant 0 : index
    %c0_70 = arith.constant 0 : index
    %93 = vector.load %arg8[%c1_68, %c0_69, %c0_70] : memref<2x1x8xf32, #tpu.memory_space<vmem>>, vector<1x1x8xf32>
    %94 = vector.shape_cast %93 : vector<1x1x8xf32> to vector<1x8xf32>
    %cst_71 = arith.constant 0.000000e+00 : f32
    %95 = vector.broadcast %cst_71 : f32 to vector<1x8xf32>
    %96 = arith.cmpf oeq, %94, %95 : vector<1x8xf32>
    %97 = vector.shape_cast %96 : vector<1x8xi1> to vector<1x1x8xi1>
    %cst_72 = arith.constant -1.000000e+09 : f32
    %98 = vector.shape_cast %97 : vector<1x1x8xi1> to vector<1x1x8xi1>
    %99 = vector.broadcast %98 : vector<1x1x8xi1> to vector<4x8x8xi1>
    %100 = vector.broadcast %cst_72 : f32 to vector<4x8x8xf32>
    %101 = arith.select %99, %100, %92 : vector<4x8x8xi1>, vector<4x8x8xf32>
    %cst_73 = arith.constant dense<0xFF800000> : vector<4x8xf32>
    %102 = vector.multi_reduction <maximumf>, %101, %cst_73 [2] : vector<4x8x8xf32> to vector<4x8xf32>
    %103 = vector.shape_cast %102 : vector<4x8xf32> to vector<4x8x1xf32>
    %104 = vector.broadcast %103 : vector<4x8x1xf32> to vector<4x8x8xf32>
    %105 = arith.subf %101, %104 : vector<4x8x8xf32>
    %106 = math.exp %105 : vector<4x8x8xf32>
    %cst_74 = arith.constant dense<0.000000e+00> : vector<4x8xf32>
    %107 = vector.multi_reduction <add>, %106, %cst_74 [2] : vector<4x8x8xf32> to vector<4x8xf32>
    %108 = vector.shape_cast %107 : vector<4x8xf32> to vector<4x8x1xf32>
    %109 = vector.broadcast %108 : vector<4x8x1xf32> to vector<4x8x8xf32>
    %110 = arith.divf %106, %109 : vector<4x8x8xf32>
    %c1_75 = arith.constant 1 : index
    %c0_76 = arith.constant 0 : index
    %c0_77 = arith.constant 0 : index
    %c0_78 = arith.constant 0 : index
    %111 = vector.load %arg10[%c1_75, %c0_76, %c0_77, %c0_78] : memref<2x4x8x8xf32, #tpu.memory_space<vmem>>, vector<1x4x8x8xf32>
    %112 = vector.shape_cast %111 : vector<1x4x8x8xf32> to vector<4x8x8xf32>
    %113 = vector.shape_cast %110 : vector<4x8x8xf32> to vector<1x4x8x8xf32>
    tpu.vector_store %arg10[%c1_75, %c0_76, %c0_77, %c0_78], %113 {strides = array<i32>} : memref<2x4x8x8xf32, #tpu.memory_space<vmem>>, vector<1x4x8x8xf32>,
    "tpu.trace_start"() <{level = 10 : i32, message = "hqk,hkd->hqd"}> : () -> ()
    %cst_79 = arith.constant dense<0.000000e+00> : vector<4x8x8xf32>
    %114 = tpu.matmul %110, %91, %cst_79 {dimension_numbers = #tpu.dot_dimension_numbers<[2], [1], [1], [2], [0, 0, 0, 1, 1, 2], [0], [0]>} : vector<4x8x8xf32>, vector<4x8x8xf32>, vector<4x8x8xf32> -> vector<4x8x8xf32>
    "tpu.trace_stop"() : () -> ()
    "tpu.trace_start"() <{level = 10 : i32, message = "hqd,hde->hqe"}> : () -> ()
    %cst_80 = arith.constant dense<0.000000e+00> : vector<4x8x32xf32>
    %115 = tpu.matmul %114, %6, %cst_80 {dimension_numbers = #tpu.dot_dimension_numbers<[2], [1], [1], [2], [0, 0, 0, 1, 1, 2], [0], [0]>} : vector<4x8x8xf32>, vector<4x8x32xf32>, vector<4x8x32xf32> -> vector<4x8x32xf32>
    "tpu.trace_stop"() : () -> ()
    %cst_81 = arith.constant dense<0.000000e+00> : vector<8x32xf32>
    %116 = vector.multi_reduction <add>, %115, %cst_81 [0] : vector<4x8x32xf32> to vector<8x32xf32>
    %117 = vector.broadcast %13 : vector<1x32xf32> to vector<8x32xf32>
    %118 = arith.addf %116, %117 : vector<8x32xf32>
    %c1_82 = arith.constant 1 : index
    %c0_83 = arith.constant 0 : index
    %c0_84 = arith.constant 0 : index
    %119 = vector.load %arg9[%c1_82, %c0_83, %c0_84] : memref<2x8x32xf32, #tpu.memory_space<vmem>>, vector<1x8x32xf32>
    %120 = vector.shape_cast %119 : vector<1x8x32xf32> to vector<8x32xf32>
    %121 = vector.shape_cast %118 : vector<8x32xf32> to vector<1x8x32xf32>
    tpu.vector_store %arg9[%c1_82, %c0_83, %c0_84], %121 {strides = array<i32>} : memref<2x8x32xf32, #tpu.memory_space<vmem>>, vector<1x8x32xf32>,
    return
  }
  func.func @transform_0(%arg0: i32) -> (i32, i32, i32) {
    %c0_i32 = arith.constant 0 : i32
    %c0_i32_0 = arith.constant 0 : i32
    %c0_i32_1 = arith.constant 0 : i32
    return %arg0, %c0_i32, %c0_i32_0 : i32, i32, i32
  }
  func.func @transform_1(%arg0: i32) -> (i32, i32, i32) {
    %c0_i32 = arith.constant 0 : i32
    %c0_i32_0 = arith.constant 0 : i32
    %c0_i32_1 = arith.constant 0 : i32
    return %arg0, %c0_i32, %c0_i32_0 : i32, i32, i32
  }
  func.func @transform_2(%arg0: i32) -> (i32, i32, i32) {
    %c0_i32 = arith.constant 0 : i32
    %c0_i32_0 = arith.constant 0 : i32
    %c0_i32_1 = arith.constant 0 : i32
    return %arg0, %c0_i32, %c0_i32_0 : i32, i32, i32
  }
  func.func @transform_3(%arg0: i32) -> (i32, i32, i32, i32) {
    %c0_i32 = arith.constant 0 : i32
    %c0_i32_0 = arith.constant 0 : i32
    %c0_i32_1 = arith.constant 0 : i32
    %c0_i32_2 = arith.constant 0 : i32
    %c0_i32_3 = arith.constant 0 : i32
    return %c0_i32, %c0_i32_0, %c0_i32_1, %c0_i32_2 : i32, i32, i32, i32
  }
  func.func @transform_4(%arg0: i32) -> (i32, i32, i32, i32) {
    %c0_i32 = arith.constant 0 : i32
    %c0_i32_0 = arith.constant 0 : i32
    %c0_i32_1 = arith.constant 0 : i32
    %c0_i32_2 = arith.constant 0 : i32
    %c0_i32_3 = arith.constant 0 : i32
    return %c0_i32, %c0_i32_0, %c0_i32_1, %c0_i32_2 : i32, i32, i32, i32
  }
  func.func @transform_5(%arg0: i32) -> (i32, i32, i32) {
    %c0_i32 = arith.constant 0 : i32
    %c0_i32_0 = arith.constant 0 : i32
    %c0_i32_1 = arith.constant 0 : i32
    %c0_i32_2 = arith.constant 0 : i32
    return %c0_i32, %c0_i32_0, %c0_i32_1 : i32, i32, i32
  }
  func.func @transform_6(%arg0: i32) -> (i32, i32) {
    %c0_i32 = arith.constant 0 : i32
    %c0_i32_0 = arith.constant 0 : i32
    %c0_i32_1 = arith.constant 0 : i32
    return %c0_i32, %c0_i32_0 : i32, i32
  }
  func.func @transform_7(%arg0: i32) -> (i32, i32, i32) {
    %c0_i32 = arith.constant 0 : i32
    %c0_i32_0 = arith.constant 0 : i32
    %c0_i32_1 = arith.constant 0 : i32
    return %arg0, %c0_i32, %c0_i32_0 : i32, i32, i32
  }
  func.func @transform_8(%arg0: i32) -> (i32, i32, i32) {
    %c0_i32 = arith.constant 0 : i32
    %c0_i32_0 = arith.constant 0 : i32
    %c0_i32_1 = arith.constant 0 : i32
    return %arg0, %c0_i32, %c0_i32_0 : i32, i32, i32
  }
  func.func @transform_9(%arg0: i32) -> (i32, i32, i32, i32) {
    %c0_i32 = arith.constant 0 : i32
    %c0_i32_0 = arith.constant 0 : i32
    %c0_i32_1 = arith.constant 0 : i32
    %c0_i32_2 = arith.constant 0 : i32
    return %arg0, %c0_i32, %c0_i32_0, %c0_i32_1 : i32, i32, i32, i32
  }
}

</mosaic_0001>

<llo_original>
// kernel: tpu_custom_call.1
$region0: #{tpu_custom_call.1}
  #allocation0 [shape = 'u32[]', space=smem, size = 0x4, offset = 0x4, fixed_abs, tag = 'smem constant byte address 0x4 - core index']
  #allocation1 [shape = 'u32[144,128]{1,0:T(1,128)}', space=vmem, size = 0x12000, scoped, tag = 'internal scratch']
  %s0 = inlined_call_operand.vmem [shape: f32[2,8,32], index: 0, kind: input, shape index: {}]
  %s1 = inlined_call_operand.vmem [shape: f32[2,8,32], index: 1, kind: input, shape index: {}]
  %s2 = inlined_call_operand.vmem [shape: f32[2,8,32], index: 2, kind: input, shape index: {}]
  %s3 = inlined_call_operand.vmem [shape: f32[3,4,32,8], index: 3, kind: input, shape index: {}]
  %s4 = inlined_call_operand.vmem [shape: f32[3,4,1,8], index: 4, kind: input, shape index: {}]
  %s5 = inlined_call_operand.vmem [shape: f32[4,8,32], index: 5, kind: input, shape index: {}]
  %s6 = inlined_call_operand.vmem [shape: f32[1,32], index: 6, kind: input, shape index: {}]
  %s7 = inlined_call_operand.vmem [shape: f32[2,1,8], index: 7, kind: input, shape index: {}]
  %s8 = inlined_call_operand.hbm [shape: f32[2,8,32], index: 8, kind: output, shape index: {0}]
  %s9 = inlined_call_operand.hbm [shape: f32[2,4,8,8], index: 9, kind: output, shape index: {1}]
  %10 = xla_tuple %s8, %s9
  %s11 = sld [smem:[#allocation0]]
  $region50: #{tpu_custom_call.1} parent=0
    _
  %s13 = ssub.s32 1, %s11
  %s14 = scalar_select 0, %s13, %s11
  $region1: #{tpu_custom_call.1} parent=0
    #allocation2 [shape = 'u8[8192]{0}', space=vmem, size = 0x2000, scoped, tag = 'output window, operand 0, single buffered']
    #allocation3 [shape = 's32[1]{0}', space=sflag, size = 0x4, scoped, tag = 'scoped memory for tpu_custom_call.1']
    #allocation4 [shape = 'u8[32768]{0}', space=vmem, size = 0x8000, scoped, tag = 'output window, operand 1, single buffered']
    #allocation5 [shape = 's32[1]{0}', space=sflag, size = 0x4, scoped, tag = 'scoped memory for tpu_custom_call.1']
    %15 = vsyncpa [#allocation3], 0
    %16 = vsyncpa [#allocation5], 0
    // Predicated region
    $region2: #{tpu_custom_call.1} parent=1 // pred_check
      _
    $region3: #{tpu_custom_call.1} parent=1 // pred_check_branch
      %18 = sbr.rel (0) target = $region5
    $region4: #{tpu_custom_call.1} parent=1 // pred_region
      _
    $region5: #{tpu_custom_call.1} parent=1 // pred_fallthru
      _
    // Predicated region
    $region6: #{tpu_custom_call.1} parent=1 // pred_check
      _
    $region7: #{tpu_custom_call.1} parent=1 // pred_check_branch
      %20 = sbr.rel (0) target = $region9
    $region8: #{tpu_custom_call.1} parent=1 // pred_region
      _
    $region9: #{tpu_custom_call.1} parent=1 // pred_fallthru
      _
    // Predicated region
    $region10: #{tpu_custom_call.1} parent=1 // pred_check
      _
    $region11: #{tpu_custom_call.1} parent=1 // pred_check_branch
      %22 = sbr.rel (0) target = $region13
    $region12: #{tpu_custom_call.1} parent=1 // pred_region
      _
    $region13: #{tpu_custom_call.1} parent=1 // pred_fallthru
      _
    // Predicated region
    $region14: #{tpu_custom_call.1} parent=1 // pred_check
      _
    $region15: #{tpu_custom_call.1} parent=1 // pred_check_branch
      %24 = sbr.rel (0) target = $region17
    $region16: #{tpu_custom_call.1} parent=1 // pred_region
      _
    $region17: #{tpu_custom_call.1} parent=1 // pred_fallthru
      _
    // Predicated region
    $region18: #{tpu_custom_call.1} parent=1 // pred_check
      _
    $region19: #{tpu_custom_call.1} parent=1 // pred_check_branch
      %26 = sbr.rel (0) target = $region21
    $region20: #{tpu_custom_call.1} parent=1 // pred_region
      _
    $region21: #{tpu_custom_call.1} parent=1 // pred_fallthru
      _
    // Predicated region
    $region22: #{tpu_custom_call.1} parent=1 // pred_check
      _
    $region23: #{tpu_custom_call.1} parent=1 // pred_check_branch
      %28 = sbr.rel (0) target = $region25
    $region24: #{tpu_custom_call.1} parent=1 // pred_region
      _
    $region25: #{tpu_custom_call.1} parent=1 // pred_fallthru
      _
    // Predicated region
    $region26: #{tpu_custom_call.1} parent=1 // pred_check
      _
    $region27: #{tpu_custom_call.1} parent=1 // pred_check_branch
      %30 = sbr.rel (0) target = $region29
    $region28: #{tpu_custom_call.1} parent=1 // pred_region
      _
    $region29: #{tpu_custom_call.1} parent=1 // pred_fallthru
      _
    // Predicated region
    $region30: #{tpu_custom_call.1} parent=1 // pred_check
      _
    $region31: #{tpu_custom_call.1} parent=1 // pred_check_branch
      %32 = sbr.rel (0) target = $region33
    $region32: #{tpu_custom_call.1} parent=1 // pred_region
      _
    $region33: #{tpu_custom_call.1} parent=1 // pred_fallthru
      _
    %v33 = vld [vmem:[%s3] sm:$0xff]
    %v34 = vld [vmem:[%s3 + $0x8] sm:$0xff]
    %v35 = vld [vmem:[%s3 + $0x10] sm:$0xff]
    %v36 = vld [vmem:[%s3 + $0x18] sm:$0xff]
    %v37 = vld [vmem:[%s3 + $0x20] sm:$0xff]
    %v38 = vld [vmem:[%s3 + $0x28] sm:$0xff]
    %v39 = vld [vmem:[%s3 + $0x30] sm:$0xff]
    %v40 = vld [vmem:[%s3 + $0x38] sm:$0xff]
    %v41 = vld [vmem:[%s3 + $0x40] sm:$0xff]
    %v42 = vld [vmem:[%s3 + $0x48] sm:$0xff]
    %v43 = vld [vmem:[%s3 + $0x50] sm:$0xff]
    %v44 = vld [vmem:[%s3 + $0x58] sm:$0xff]
    %v45 = vld [vmem:[%s3 + $0x60] sm:$0xff]
    %v46 = vld [vmem:[%s3 + $0x68] sm:$0xff]
    %v47 = vld [vmem:[%s3 + $0x70] sm:$0xff]
    %v48 = vld [vmem:[%s3 + $0x78] sm:$0xff]
    %s49 = scalar_lea.vmem %s3, 128
    %v50 = vld [vmem:[%s49] sm:$0xff]
    %v51 = vld [vmem:[%s49 + $0x8] sm:$0xff]
    %v52 = vld [vmem:[%s49 + $0x10] sm:$0xff]
    %v53 = vld [vmem:[%s49 + $0x18] sm:$0xff]
    %v54 = vld [vmem:[%s49 + $0x20] sm:$0xff]
    %v55 = vld [vmem:[%s49 + $0x28] sm:$0xff]
    %v56 = vld [vmem:[%s49 + $0x30] sm:$0xff]
    %v57 = vld [vmem:[%s49 + $0x38] sm:$0xff]
    %v58 = vld [vmem:[%s49 + $0x40] sm:$0xff]
    %v59 = vld [vmem:[%s49 + $0x48] sm:$0xff]
    %v60 = vld [vmem:[%s49 + $0x50] sm:$0xff]
    %v61 = vld [vmem:[%s49 + $0x58] sm:$0xff]
    %v62 = vld [vmem:[%s49 + $0x60] sm:$0xff]
    %v63 = vld [vmem:[%s49 + $0x68] sm:$0xff]
    %v64 = vld [vmem:[%s49 + $0x70] sm:$0xff]
    %v65 = vld [vmem:[%s49 + $0x78] sm:$0xff]
    %s66 = scalar_lea.vmem %s3, 256
    %v67 = vld [vmem:[%s66] sm:$0xff]
    %v68 = vld [vmem:[%s66 + $0x8] sm:$0xff]
    %v69 = vld [vmem:[%s66 + $0x10] sm:$0xff]
    %v70 = vld [vmem:[%s66 + $0x18] sm:$0xff]
    %v71 = vld [vmem:[%s66 + $0x20] sm:$0xff]
    %v72 = vld [vmem:[%s66 + $0x28] sm:$0xff]
    %v73 = vld [vmem:[%s66 + $0x30] sm:$0xff]
    %v74 = vld [vmem:[%s66 + $0x38] sm:$0xff]
    %v75 = vld [vmem:[%s66 + $0x40] sm:$0xff]
    %v76 = vld [vmem:[%s66 + $0x48] sm:$0xff]
    %v77 = vld [vmem:[%s66 + $0x50] sm:$0xff]
    %v78 = vld [vmem:[%s66 + $0x58] sm:$0xff]
    %v79 = vld [vmem:[%s66 + $0x60] sm:$0xff]
    %v80 = vld [vmem:[%s66 + $0x68] sm:$0xff]
    %v81 = vld [vmem:[%s66 + $0x70] sm:$0xff]
    %v82 = vld [vmem:[%s66 + $0x78] sm:$0xff]
    %v83 = vld [vmem:[%s5] sm:$0xff]
    %v84 = vld [vmem:[%s5 + $0x8] sm:$0xff]
    %v85 = vld [vmem:[%s5 + $0x10] sm:$0xff]
    %v86 = vld [vmem:[%s5 + $0x18] sm:$0xff]
    %v87 = vld [vmem:[%s4] sm:$0x1]
    %v88 = vld [vmem:[%s4 + $0x1] sm:$0x1]
    %v89 = vld [vmem:[%s4 + $0x2] sm:$0x1]
    %v90 = vld [vmem:[%s4 + $0x3] sm:$0x1]
    %s91 = scalar_lea.vmem %s4, 4
    %v92 = vld [vmem:[%s91] sm:$0x1]
    %v93 = vld [vmem:[%s91 + $0x1] sm:$0x1]
    %v94 = vld [vmem:[%s91 + $0x2] sm:$0x1]
    %v95 = vld [vmem:[%s91 + $0x3] sm:$0x1]
    %s96 = scalar_lea.vmem %s4, 8
    %v97 = vld [vmem:[%s96] sm:$0x1]
    %v98 = vld [vmem:[%s96 + $0x1] sm:$0x1]
    %v99 = vld [vmem:[%s96 + $0x2] sm:$0x1]
    %v100 = vld [vmem:[%s96 + $0x3] sm:$0x1]
    %v101 = vld [vmem:[%s6] sm:$0x1]
    %v102 = vld [vmem:[%s0] sm:$0xff]
    %v103 = vld [vmem:[%s1] sm:$0xff]
    %v104 = vld [vmem:[%s2] sm:$0xff]
    %v109 = vlaneseq
    %v110 = vshrl.u32 %v109, 7
    %v111 = vsub.s32 0, %v110
    %v112 = vrot.slane %v87, %v111
    %v113 = vlaneseq
    %v114 = vshrl.u32 %v113, 7
    %v115 = vsub.s32 0, %v114
    %v116 = vrot.slane %v88, %v115
    %v117 = vlaneseq
    %v118 = vshrl.u32 %v117, 7
    %v119 = vsub.s32 0, %v118
    %v120 = vrot.slane %v89, %v119
    %v121 = vlaneseq
    %v122 = vshrl.u32 %v121, 7
    %v123 = vsub.s32 0, %v122
    %v124 = vrot.slane %v90, %v123
    %vm129 = vcmask 261120
    %v131 = vsel %vm129, %v102, 0
    %133 = vmatprep.subr.mxu0 0.0
    %134 = vmatpush1.msra.mxu0 %v33
    %135 = vmatprep.subr.mxu0 0.0
    %136 = vmatpush1.msra.mxu0 %v34
    %137 = vmatprep.subr.mxu0 0.0
    %138 = vmatpush1.msra.mxu0 %v35
    %139 = vmatprep.subr.mxu0 0.0
    %140 = vmatpush1.msra.mxu0 %v36
    %141 = vmatprep.subr.mxu0 0.0
    %142 = vmatpush1.msra.mxu0 0.0
    %143 = vmatprep.subr.mxu0 0.0
    %144 = vmatpush1.msra.mxu0 0.0
    %145 = vmatprep.subr.mxu0 0.0
    %146 = vmatpush1.msra.mxu0 0.0
    %147 = vmatprep.subr.mxu0 0.0
    %148 = vmatpush1.msra.mxu0 0.0
    %149 = vmatprep.subr.mxu0 0.0
    %150 = vmatpush1.msra.mxu0 0.0
    %151 = vmatprep.subr.mxu0 0.0
    %152 = vmatpush1.msra.mxu0 0.0
    %153 = vmatprep.subr.mxu0 0.0
    %154 = vmatpush1.msra.mxu0 0.0
    %155 = vmatprep.subr.mxu0 0.0
    %156 = vmatpush1.msra.mxu0 0.0
    %157 = vmatprep.subr.mxu0 0.0
    %158 = vmatpush1.msra.mxu0 0.0
    %159 = vmatprep.subr.mxu0 0.0
    %160 = vmatpush1.msra.mxu0 0.0
    %161 = vmatprep.subr.mxu0 0.0
    %162 = vmatpush1.msra.mxu0 0.0
    %163 = vmatprep.subr.mxu0 0.0
    %164 = vmatpush1.msra.mxu0 0.0
    %165 = vmatprep.subr.mxu0 0.0
    %166 = vmatpush1.msra.mxu0 0.0
    %167 = vmatprep.subr.mxu0 0.0
    %168 = vmatpush1.msra.mxu0 0.0
    %169 = vmatprep.subr.mxu0 0.0
    %170 = vmatpush1.msra.mxu0 0.0
    %171 = vmatprep.subr.mxu0 0.0
    %172 = vmatpush1.msra.mxu0 0.0
    %173 = vmatprep.subr.mxu0 0.0
    %174 = vmatpush1.msra.mxu0 0.0
    %175 = vmatprep.subr.mxu0 0.0
    %176 = vmatpush1.msra.mxu0 0.0
    %177 = vmatprep.subr.mxu0 0.0
    %178 = vmatpush1.msra.mxu0 0.0
    %179 = vmatprep.subr.mxu0 0.0
    %180 = vmatpush1.msra.mxu0 0.0
    %181 = vmatprep.subr.mxu0 0.0
    %182 = vmatpush1.msra.mxu0 0.0
    %183 = vmatprep.subr.mxu0 0.0
    %184 = vmatpush1.msra.mxu0 0.0
    %185 = vmatprep.subr.mxu0 0.0
    %186 = vmatpush1.msra.mxu0 0.0
    %187 = vmatprep.subr.mxu0 0.0
    %188 = vmatpush1.msra.mxu0 0.0
    %189 = vmatprep.subr.mxu0 0.0
    %190 = vmatpush1.msra.mxu0 0.0
    %191 = vmatprep.subr.mxu0 0.0
    %192 = vmatpush1.msra.mxu0 0.0
    %193 = vmatprep.subr.mxu0 0.0
    %194 = vmatpush1.msra.mxu0 0.0
    %195 = vmatprep.subr.mxu0 0.0
    %196 = vmatpush1.msra.mxu0 0.0
    %197 = vmatprep.mubr.f32.mxu0 0.0
    %198 = vmatmul.mubr.f32.gmra.mrb[0].mxu0 %v131
    %v199 = vpop.f32.mrb[0].mxu0
    %v200 = vadd.f32 %v112, %v199
    %v201 = vpop.f32.mrb[0].mxu0
    %202 = vdwg.mxu0
    %203 = vmatprep.subr.mxu0 0.0
    %204 = vmatpush1.msra.mxu0 %v37
    %205 = vmatprep.subr.mxu0 0.0
    %206 = vmatpush1.msra.mxu0 %v38
    %207 = vmatprep.subr.mxu0 0.0
    %208 = vmatpush1.msra.mxu0 %v39
    %209 = vmatprep.subr.mxu0 0.0
    %210 = vmatpush1.msra.mxu0 %v40
    %211 = vmatprep.subr.mxu0 0.0
    %212 = vmatpush1.msra.mxu0 0.0
    %213 = vmatprep.subr.mxu0 0.0
    %214 = vmatpush1.msra.mxu0 0.0
    %215 = vmatprep.subr.mxu0 0.0
    %216 = vmatpush1.msra.mxu0 0.0
    %217 = vmatprep.subr.mxu0 0.0
    %218 = vmatpush1.msra.mxu0 0.0
    %219 = vmatprep.subr.mxu0 0.0
    %220 = vmatpush1.msra.mxu0 0.0
    %221 = vmatprep.subr.mxu0 0.0
    %222 = vmatpush1.msra.mxu0 0.0
    %223 = vmatprep.subr.mxu0 0.0
    %224 = vmatpush1.msra.mxu0 0.0
    %225 = vmatprep.subr.mxu0 0.0
    %226 = vmatpush1.msra.mxu0 0.0
    %227 = vmatprep.subr.mxu0 0.0
    %228 = vmatpush1.msra.mxu0 0.0
    %229 = vmatprep.subr.mxu0 0.0
    %230 = vmatpush1.msra.mxu0 0.0
    %231 = vmatprep.subr.mxu0 0.0
    %232 = vmatpush1.msra.mxu0 0.0
    %233 = vmatprep.subr.mxu0 0.0
    %234 = vmatpush1.msra.mxu0 0.0
    %235 = vmatprep.subr.mxu0 0.0
    %236 = vmatpush1.msra.mxu0 0.0
    %237 = vmatprep.subr.mxu0 0.0
    %238 = vmatpush1.msra.mxu0 0.0
    %239 = vmatprep.subr.mxu0 0.0
    %240 = vmatpush1.msra.mxu0 0.0
    %241 = vmatprep.subr.mxu0 0.0
    %242 = vmatpush1.msra.mxu0 0.0
    %243 = vmatprep.subr.mxu0 0.0
    %244 = vmatpush1.msra.mxu0 0.0
    %245 = vmatprep.subr.mxu0 0.0
    %246 = vmatpush1.msra.mxu0 0.0
    %247 = vmatprep.subr.mxu0 0.0
    %248 = vmatpush1.msra.mxu0 0.0
    %249 = vmatprep.subr.mxu0 0.0
    %250 = vmatpush1.msra.mxu0 0.0
    %251 = vmatprep.subr.mxu0 0.0
    %252 = vmatpush1.msra.mxu0 0.0
    %253 = vmatprep.subr.mxu0 0.0
    %254 = vmatpush1.msra.mxu0 0.0
    %255 = vmatprep.subr.mxu0 0.0
    %256 = vmatpush1.msra.mxu0 0.0
    %257 = vmatprep.subr.mxu0 0.0
    %258 = vmatpush1.msra.mxu0 0.0
    %259 = vmatprep.subr.mxu0 0.0
    %260 = vmatpush1.msra.mxu0 0.0
    %261 = vmatprep.subr.mxu0 0.0
    %262 = vmatpush1.msra.mxu0 0.0
    %263 = vmatprep.subr.mxu0 0.0
    %264 = vmatpush1.msra.mxu0 0.0
    %265 = vmatprep.subr.mxu0 0.0
    %266 = vmatpush1.msra.mxu0 0.0
    %267 = vmatprep.mubr.f32.mxu0 0.0
    %268 = vmatmul.mubr.f32.gmra.mrb[0].mxu0 %v131
    %v269 = vpop.f32.mrb[0].mxu0
    %v270 = vadd.f32 %v116, %v269
    %v271 = vpop.f32.mrb[0].mxu0
    %272 = vdwg.mxu0
    %273 = vmatprep.subr.mxu0 0.0
    %274 = vmatpush1.msra.mxu0 %v41
    %275 = vmatprep.subr.mxu0 0.0
    %276 = vmatpush1.msra.mxu0 %v42
    %277 = vmatprep.subr.mxu0 0.0
    %278 = vmatpush1.msra.mxu0 %v43
    %279 = vmatprep.subr.mxu0 0.0
    %280 = vmatpush1.msra.mxu0 %v44
    %281 = vmatprep.subr.mxu0 0.0
    %282 = vmatpush1.msra.mxu0 0.0
    %283 = vmatprep.subr.mxu0 0.0
    %284 = vmatpush1.msra.mxu0 0.0
    %285 = vmatprep.subr.mxu0 0.0
    %286 = vmatpush1.msra.mxu0 0.0
    %287 = vmatprep.subr.mxu0 0.0
    %288 = vmatpush1.msra.mxu0 0.0
    %289 = vmatprep.subr.mxu0 0.0
    %290 = vmatpush1.msra.mxu0 0.0
    %291 = vmatprep.subr.mxu0 0.0
    %292 = vmatpush1.msra.mxu0 0.0
    %293 = vmatprep.subr.mxu0 0.0
    %294 = vmatpush1.msra.mxu0 0.0
    %295 = vmatprep.subr.mxu0 0.0
    %296 = vmatpush1.msra.mxu0 0.0
    %297 = vmatprep.subr.mxu0 0.0
    %298 = vmatpush1.msra.mxu0 0.0
    %299 = vmatprep.subr.mxu0 0.0
    %300 = vmatpush1.msra.mxu0 0.0
    %301 = vmatprep.subr.mxu0 0.0
    %302 = vmatpush1.msra.mxu0 0.0
    %303 = vmatprep.subr.mxu0 0.0
    %304 = vmatpush1.msra.mxu0 0.0
    %305 = vmatprep.subr.mxu0 0.0
    %306 = vmatpush1.msra.mxu0 0.0
    %307 = vmatprep.subr.mxu0 0.0
    %308 = vmatpush1.msra.mxu0 0.0
    %309 = vmatprep.subr.mxu0 0.0
    %310 = vmatpush1.msra.mxu0 0.0
    %311 = vmatprep.subr.mxu0 0.0
    %312 = vmatpush1.msra.mxu0 0.0
    %313 = vmatprep.subr.mxu0 0.0
    %314 = vmatpush1.msra.mxu0 0.0
    %315 = vmatprep.subr.mxu0 0.0
    %316 = vmatpush1.msra.mxu0 0.0
    %317 = vmatprep.subr.mxu0 0.0
    %318 = vmatpush1.msra.mxu0 0.0
    %319 = vmatprep.subr.mxu0 0.0
    %320 = vmatpush1.msra.mxu0 0.0
    %321 = vmatprep.subr.mxu0 0.0
    %322 = vmatpush1.msra.mxu0 0.0
    %323 = vmatprep.subr.mxu0 0.0
    %324 = vmatpush1.msra.mxu0 0.0
    %325 = vmatprep.subr.mxu0 0.0
    %326 = vmatpush1.msra.mxu0 0.0
    %327 = vmatprep.subr.mxu0 0.0
    %328 = vmatpush1.msra.mxu0 0.0
    %329 = vmatprep.subr.mxu0 0.0
    %330 = vmatpush1.msra.mxu0 0.0
    %331 = vmatprep.subr.mxu0 0.0
    %332 = vmatpush1.msra.mxu0 0.0
    %333 = vmatprep.subr.mxu0 0.0
    %334 = vmatpush1.msra.mxu0 0.0
    %335 = vmatprep.subr.mxu0 0.0
    %336 = vmatpush1.msra.mxu0 0.0
    %337 = vmatprep.mubr.f32.mxu0 0.0
    %338 = vmatmul.mubr.f32.gmra.mrb[0].mxu0 %v131
    %v339 = vpop.f32.mrb[0].mxu0
    %v340 = vadd.f32 %v120, %v339
    %v341 = vpop.f32.mrb[0].mxu0
    %342 = vdwg.mxu0
    %343 = vmatprep.subr.mxu0 0.0
    %344 = vmatpush1.msra.mxu0 %v45
    %345 = vmatprep.subr.mxu0 0.0
    %346 = vmatpush1.msra.mxu0 %v46
    %347 = vmatprep.subr.mxu0 0.0
    %348 = vmatpush1.msra.mxu0 %v47
    %349 = vmatprep.subr.mxu0 0.0
    %350 = vmatpush1.msra.mxu0 %v48
    %351 = vmatprep.subr.mxu0 0.0
    %352 = vmatpush1.msra.mxu0 0.0
    %353 = vmatprep.subr.mxu0 0.0
    %354 = vmatpush1.msra.mxu0 0.0
    %355 = vmatprep.subr.mxu0 0.0
    %356 = vmatpush1.msra.mxu0 0.0
    %357 = vmatprep.subr.mxu0 0.0
    %358 = vmatpush1.msra.mxu0 0.0
    %359 = vmatprep.subr.mxu0 0.0
    %360 = vmatpush1.msra.mxu0 0.0
    %361 = vmatprep.subr.mxu0 0.0
    %362 = vmatpush1.msra.mxu0 0.0
    %363 = vmatprep.subr.mxu0 0.0
    %364 = vmatpush1.msra.mxu0 0.0
    %365 = vmatprep.subr.mxu0 0.0
    %366 = vmatpush1.msra.mxu0 0.0
    %367 = vmatprep.subr.mxu0 0.0
    %368 = vmatpush1.msra.mxu0 0.0
    %369 = vmatprep.subr.mxu0 0.0
    %370 = vmatpush1.msra.mxu0 0.0
    %371 = vmatprep.subr.mxu0 0.0
    %372 = vmatpush1.msra.mxu0 0.0
    %373 = vmatprep.subr.mxu0 0.0
    %374 = vmatpush1.msra.mxu0 0.0
    %375 = vmatprep.subr.mxu0 0.0
    %376 = vmatpush1.msra.mxu0 0.0
    %377 = vmatprep.subr.mxu0 0.0
    %378 = vmatpush1.msra.mxu0 0.0
    %379 = vmatprep.subr.mxu0 0.0
    %380 = vmatpush1.msra.mxu0 0.0
    %381 = vmatprep.subr.mxu0 0.0
    %382 = vmatpush1.msra.mxu0 0.0
    %383 = vmatprep.subr.mxu0 0.0
    %384 = vmatpush1.msra.mxu0 0.0
    %385 = vmatprep.subr.mxu0 0.0
    %386 = vmatpush1.msra.mxu0 0.0
    %387 = vmatprep.subr.mxu0 0.0
    %388 = vmatpush1.msra.mxu0 0.0
    %389 = vmatprep.subr.mxu0 0.0
    %390 = vmatpush1.msra.mxu0 0.0
    %391 = vmatprep.subr.mxu0 0.0
    %392 = vmatpush1.msra.mxu0 0.0
    %393 = vmatprep.subr.mxu0 0.0
    %394 = vmatpush1.msra.mxu0 0.0
    %395 = vmatprep.subr.mxu0 0.0
    %396 = vmatpush1.msra.mxu0 0.0
    %397 = vmatprep.subr.mxu0 0.0
    %398 = vmatpush1.msra.mxu0 0.0
    %399 = vmatprep.subr.mxu0 0.0
    %400 = vmatpush1.msra.mxu0 0.0
    %401 = vmatprep.subr.mxu0 0.0
    %402 = vmatpush1.msra.mxu0 0.0
    %403 = vmatprep.subr.mxu0 0.0
    %404 = vmatpush1.msra.mxu0 0.0
    %405 = vmatprep.subr.mxu0 0.0
    %406 = vmatpush1.msra.mxu0 0.0
    %407 = vmatprep.mubr.f32.mxu0 0.0
    %408 = vmatmul.mubr.f32.gmra.mrb[0].mxu0 %v131
    %v409 = vpop.f32.mrb[0].mxu0
    %v410 = vadd.f32 %v124, %v409
    %v411 = vpop.f32.mrb[0].mxu0
    %412 = vdwg.mxu0
    %v417 = vlaneseq
    %v418 = vshrl.u32 %v417, 7
    %v419 = vsub.s32 0, %v418
    %v420 = vrot.slane %v92, %v419
    %v421 = vlaneseq
    %v422 = vshrl.u32 %v421, 7
    %v423 = vsub.s32 0, %v422
    %v424 = vrot.slane %v93, %v423
    %v425 = vlaneseq
    %v426 = vshrl.u32 %v425, 7
    %v427 = vsub.s32 0, %v426
    %v428 = vrot.slane %v94, %v427
    %v429 = vlaneseq
    %v430 = vshrl.u32 %v429, 7
    %v431 = vsub.s32 0, %v430
    %v432 = vrot.slane %v95, %v431
    %v438 = vsel %vm129, %v103, 0
    %440 = vmatprep.subr.mxu0 0.0
    %441 = vmatpush1.msra.mxu0 %v50
    %442 = vmatprep.subr.mxu0 0.0
    %443 = vmatpush1.msra.mxu0 %v51
    %444 = vmatprep.subr.mxu0 0.0
    %445 = vmatpush1.msra.mxu0 %v52
    %446 = vmatprep.subr.mxu0 0.0
    %447 = vmatpush1.msra.mxu0 %v53
    %448 = vmatprep.subr.mxu0 0.0
    %449 = vmatpush1.msra.mxu0 0.0
    %450 = vmatprep.subr.mxu0 0.0
    %451 = vmatpush1.msra.mxu0 0.0
    %452 = vmatprep.subr.mxu0 0.0
    %453 = vmatpush1.msra.mxu0 0.0
    %454 = vmatprep.subr.mxu0 0.0
    %455 = vmatpush1.msra.mxu0 0.0
    %456 = vmatprep.subr.mxu0 0.0
    %457 = vmatpush1.msra.mxu0 0.0
    %458 = vmatprep.subr.mxu0 0.0
    %459 = vmatpush1.msra.mxu0 0.0
    %460 = vmatprep.subr.mxu0 0.0
    %461 = vmatpush1.msra.mxu0 0.0
    %462 = vmatprep.subr.mxu0 0.0
    %463 = vmatpush1.msra.mxu0 0.0
    %464 = vmatprep.subr.mxu0 0.0
    %465 = vmatpush1.msra.mxu0 0.0
    %466 = vmatprep.subr.mxu0 0.0
    %467 = vmatpush1.msra.mxu0 0.0
    %468 = vmatprep.subr.mxu0 0.0
    %469 = vmatpush1.msra.mxu0 0.0
    %470 = vmatprep.subr.mxu0 0.0
    %471 = vmatpush1.msra.mxu0 0.0
    %472 = vmatprep.subr.mxu0 0.0
    %473 = vmatpush1.msra.mxu0 0.0
    %474 = vmatprep.subr.mxu0 0.0
    %475 = vmatpush1.msra.mxu0 0.0
    %476 = vmatprep.subr.mxu0 0.0
    %477 = vmatpush1.msra.mxu0 0.0
    %478 = vmatprep.subr.mxu0 0.0
    %479 = vmatpush1.msra.mxu0 0.0
    %480 = vmatprep.subr.mxu0 0.0
    %481 = vmatpush1.msra.mxu0 0.0
    %482 = vmatprep.subr.mxu0 0.0
    %483 = vmatpush1.msra.mxu0 0.0
    %484 = vmatprep.subr.mxu0 0.0
    %485 = vmatpush1.msra.mxu0 0.0
    %486 = vmatprep.subr.mxu0 0.0
    %487 = vmatpush1.msra.mxu0 0.0
    %488 = vmatprep.subr.mxu0 0.0
    %489 = vmatpush1.msra.mxu0 0.0
    %490 = vmatprep.subr.mxu0 0.0
    %491 = vmatpush1.msra.mxu0 0.0
    %492 = vmatprep.subr.mxu0 0.0
    %493 = vmatpush1.msra.mxu0 0.0
    %494 = vmatprep.subr.mxu0 0.0
    %495 = vmatpush1.msra.mxu0 0.0
    %496 = vmatprep.subr.mxu0 0.0
    %497 = vmatpush1.msra.mxu0 0.0
    %498 = vmatprep.subr.mxu0 0.0
    %499 = vmatpush1.msra.mxu0 0.0
    %500 = vmatprep.subr.mxu0 0.0
    %501 = vmatpush1.msra.mxu0 0.0
    %502 = vmatprep.subr.mxu0 0.0
    %503 = vmatpush1.msra.mxu0 0.0
    %504 = vmatprep.mubr.f32.mxu0 0.0
    %505 = vmatmul.mubr.f32.gmra.mrb[0].mxu0 %v438
    %v506 = vpop.f32.mrb[0].mxu0
    %v507 = vadd.f32 %v420, %v506
    %v508 = vpop.f32.mrb[0].mxu0
    %509 = vdwg.mxu0
    %510 = vmatprep.subr.mxu0 0.0
    %511 = vmatpush1.msra.mxu0 %v54
    %512 = vmatprep.subr.mxu0 0.0
    %513 = vmatpush1.msra.mxu0 %v55
    %514 = vmatprep.subr.mxu0 0.0
    %515 = vmatpush1.msra.mxu0 %v56
    %516 = vmatprep.subr.mxu0 0.0
    %517 = vmatpush1.msra.mxu0 %v57
    %518 = vmatprep.subr.mxu0 0.0
    %519 = vmatpush1.msra.mxu0 0.0
    %520 = vmatprep.subr.mxu0 0.0
    %521 = vmatpush1.msra.mxu0 0.0
    %522 = vmatprep.subr.mxu0 0.0
    %523 = vmatpush1.msra.mxu0 0.0
    %524 = vmatprep.subr.mxu0 0.0
    %525 = vmatpush1.msra.mxu0 0.0
    %526 = vmatprep.subr.mxu0 0.0
    %527 = vmatpush1.msra.mxu0 0.0
    %528 = vmatprep.subr.mxu0 0.0
    %529 = vmatpush1.msra.mxu0 0.0
    %530 = vmatprep.subr.mxu0 0.0
    %531 = vmatpush1.msra.mxu0 0.0
    %532 = vmatprep.subr.mxu0 0.0
    %533 = vmatpush1.msra.mxu0 0.0
    %534 = vmatprep.subr.mxu0 0.0
    %535 = vmatpush1.msra.mxu0 0.0
    %536 = vmatprep.subr.mxu0 0.0
    %537 = vmatpush1.msra.mxu0 0.0
    %538 = vmatprep.subr.mxu0 0.0
    %539 = vmatpush1.msra.mxu0 0.0
    %540 = vmatprep.subr.mxu0 0.0
    %541 = vmatpush1.msra.mxu0 0.0
    %542 = vmatprep.subr.mxu0 0.0
    %543 = vmatpush1.msra.mxu0 0.0
    %544 = vmatprep.subr.mxu0 0.0
    %545 = vmatpush1.msra.mxu0 0.0
    %546 = vmatprep.subr.mxu0 0.0
    %547 = vmatpush1.msra.mxu0 0.0
    %548 = vmatprep.subr.mxu0 0.0
    %549 = vmatpush1.msra.mxu0 0.0
    %550 = vmatprep.subr.mxu0 0.0
    %551 = vmatpush1.msra.mxu0 0.0
    %552 = vmatprep.subr.mxu0 0.0
    %553 = vmatpush1.msra.mxu0 0.0
    %554 = vmatprep.subr.mxu0 0.0
    %555 = vmatpush1.msra.mxu0 0.0
    %556 = vmatprep.subr.mxu0 0.0
    %557 = vmatpush1.msra.mxu0 0.0
    %558 = vmatprep.subr.mxu0 0.0
    %559 = vmatpush1.msra.mxu0 0.0
    %560 = vmatprep.subr.mxu0 0.0
    %561 = vmatpush1.msra.mxu0 0.0
    %562 = vmatprep.subr.mxu0 0.0
    %563 = vmatpush1.msra.mxu0 0.0
    %564 = vmatprep.subr.mxu0 0.0
    %565 = vmatpush1.msra.mxu0 0.0
    %566 = vmatprep.subr.mxu0 0.0
    %567 = vmatpush1.msra.mxu0 0.0
    %568 = vmatprep.subr.mxu0 0.0
    %569 = vmatpush1.msra.mxu0 0.0
    %570 = vmatprep.subr.mxu0 0.0
    %571 = vmatpush1.msra.mxu0 0.0
    %572 = vmatprep.subr.mxu0 0.0
    %573 = vmatpush1.msra.mxu0 0.0
    %574 = vmatprep.mubr.f32.mxu0 0.0
    %575 = vmatmul.mubr.f32.gmra.mrb[0].mxu0 %v438
    %v576 = vpop.f32.mrb[0].mxu0
    %v577 = vadd.f32 %v424, %v576
    %v578 = vpop.f32.mrb[0].mxu0
    %579 = vdwg.mxu0
    %580 = vmatprep.subr.mxu0 0.0
    %581 = vmatpush1.msra.mxu0 %v58
    %582 = vmatprep.subr.mxu0 0.0
    %583 = vmatpush1.msra.mxu0 %v59
    %584 = vmatprep.subr.mxu0 0.0
    %585 = vmatpush1.msra.mxu0 %v60
    %586 = vmatprep.subr.mxu0 0.0
    %587 = vmatpush1.msra.mxu0 %v61
    %588 = vmatprep.subr.mxu0 0.0
    %589 = vmatpush1.msra.mxu0 0.0
    %590 = vmatprep.subr.mxu0 0.0
    %591 = vmatpush1.msra.mxu0 0.0
    %592 = vmatprep.subr.mxu0 0.0
    %593 = vmatpush1.msra.mxu0 0.0
    %594 = vmatprep.subr.mxu0 0.0
    %595 = vmatpush1.msra.mxu0 0.0
    %596 = vmatprep.subr.mxu0 0.0
    %597 = vmatpush1.msra.mxu0 0.0
    %598 = vmatprep.subr.mxu0 0.0
    %599 = vmatpush1.msra.mxu0 0.0
    %600 = vmatprep.subr.mxu0 0.0
    %601 = vmatpush1.msra.mxu0 0.0
    %602 = vmatprep.subr.mxu0 0.0
    %603 = vmatpush1.msra.mxu0 0.0
    %604 = vmatprep.subr.mxu0 0.0
    %605 = vmatpush1.msra.mxu0 0.0
    %606 = vmatprep.subr.mxu0 0.0
    %607 = vmatpush1.msra.mxu0 0.0
    %608 = vmatprep.subr.mxu0 0.0
    %609 = vmatpush1.msra.mxu0 0.0
    %610 = vmatprep.subr.mxu0 0.0
    %611 = vmatpush1.msra.mxu0 0.0
    %612 = vmatprep.subr.mxu0 0.0
    %613 = vmatpush1.msra.mxu0 0.0
    %614 = vmatprep.subr.mxu0 0.0
    %615 = vmatpush1.msra.mxu0 0.0
    %616 = vmatprep.subr.mxu0 0.0
    %617 = vmatpush1.msra.mxu0 0.0
    %618 = vmatprep.subr.mxu0 0.0
    %619 = vmatpush1.msra.mxu0 0.0
    %620 = vmatprep.subr.mxu0 0.0
    %621 = vmatpush1.msra.mxu0 0.0
    %622 = vmatprep.subr.mxu0 0.0
    %623 = vmatpush1.msra.mxu0 0.0
    %624 = vmatprep.subr.mxu0 0.0
    %625 = vmatpush1.msra.mxu0 0.0
    %626 = vmatprep.subr.mxu0 0.0
    %627 = vmatpush1.msra.mxu0 0.0
    %628 = vmatprep.subr.mxu0 0.0
    %629 = vmatpush1.msra.mxu0 0.0
    %630 = vmatprep.subr.mxu0 0.0
    %631 = vmatpush1.msra.mxu0 0.0
    %632 = vmatprep.subr.mxu0 0.0
    %633 = vmatpush1.msra.mxu0 0.0
    %634 = vmatprep.subr.mxu0 0.0
    %635 = vmatpush1.msra.mxu0 0.0
    %636 = vmatprep.subr.mxu0 0.0
    %637 = vmatpush1.msra.mxu0 0.0
    %638 = vmatprep.subr.mxu0 0.0
    %639 = vmatpush1.msra.mxu0 0.0
    %640 = vmatprep.subr.mxu0 0.0
    %641 = vmatpush1.msra.mxu0 0.0
    %642 = vmatprep.subr.mxu0 0.0
    %643 = vmatpush1.msra.mxu0 0.0
    %644 = vmatprep.mubr.f32.mxu0 0.0
    %645 = vmatmul.mubr.f32.gmra.mrb[0].mxu0 %v438
    %v646 = vpop.f32.mrb[0].mxu0
    %v647 = vadd.f32 %v428, %v646
    %v648 = vpop.f32.mrb[0].mxu0
    %649 = vdwg.mxu0
    %650 = vmatprep.subr.mxu0 0.0
    %651 = vmatpush1.msra.mxu0 %v62
    %652 = vmatprep.subr.mxu0 0.0
    %653 = vmatpush1.msra.mxu0 %v63
    %654 = vmatprep.subr.mxu0 0.0
    %655 = vmatpush1.msra.mxu0 %v64
    %656 = vmatprep.subr.mxu0 0.0
    %657 = vmatpush1.msra.mxu0 %v65
    %658 = vmatprep.subr.mxu0 0.0
    %659 = vmatpush1.msra.mxu0 0.0
    %660 = vmatprep.subr.mxu0 0.0
    %661 = vmatpush1.msra.mxu0 0.0
    %662 = vmatprep.subr.mxu0 0.0
    %663 = vmatpush1.msra.mxu0 0.0
    %664 = vmatprep.subr.mxu0 0.0
    %665 = vmatpush1.msra.mxu0 0.0
    %666 = vmatprep.subr.mxu0 0.0
    %667 = vmatpush1.msra.mxu0 0.0
    %668 = vmatprep.subr.mxu0 0.0
    %669 = vmatpush1.msra.mxu0 0.0
    %670 = vmatprep.subr.mxu0 0.0
    %671 = vmatpush1.msra.mxu0 0.0
    %672 = vmatprep.subr.mxu0 0.0
    %673 = vmatpush1.msra.mxu0 0.0
    %674 = vmatprep.subr.mxu0 0.0
    %675 = vmatpush1.msra.mxu0 0.0
    %676 = vmatprep.subr.mxu0 0.0
    %677 = vmatpush1.msra.mxu0 0.0
    %678 = vmatprep.subr.mxu0 0.0
    %679 = vmatpush1.msra.mxu0 0.0
    %680 = vmatprep.subr.mxu0 0.0
    %681 = vmatpush1.msra.mxu0 0.0
    %682 = vmatprep.subr.mxu0 0.0
    %683 = vmatpush1.msra.mxu0 0.0
    %684 = vmatprep.subr.mxu0 0.0
    %685 = vmatpush1.msra.mxu0 0.0
    %686 = vmatprep.subr.mxu0 0.0
    %687 = vmatpush1.msra.mxu0 0.0
    %688 = vmatprep.subr.mxu0 0.0
    %689 = vmatpush1.msra.mxu0 0.0
    %690 = vmatprep.subr.mxu0 0.0
    %691 = vmatpush1.msra.mxu0 0.0
    %692 = vmatprep.subr.mxu0 0.0
    %693 = vmatpush1.msra.mxu0 0.0
    %694 = vmatprep.subr.mxu0 0.0
    %695 = vmatpush1.msra.mxu0 0.0
    %696 = vmatprep.subr.mxu0 0.0
    %697 = vmatpush1.msra.mxu0 0.0
    %698 = vmatprep.subr.mxu0 0.0
    %699 = vmatpush1.msra.mxu0 0.0
    %700 = vmatprep.subr.mxu0 0.0
    %701 = vmatpush1.msra.mxu0 0.0
    %702 = vmatprep.subr.mxu0 0.0
    %703 = vmatpush1.msra.mxu0 0.0
    %704 = vmatprep.subr.mxu0 0.0
    %705 = vmatpush1.msra.mxu0 0.0
    %706 = vmatprep.subr.mxu0 0.0
    %707 = vmatpush1.msra.mxu0 0.0
    %708 = vmatprep.subr.mxu0 0.0
    %709 = vmatpush1.msra.mxu0 0.0
    %710 = vmatprep.subr.mxu0 0.0
    %711 = vmatpush1.msra.mxu0 0.0
    %712 = vmatprep.subr.mxu0 0.0
    %713 = vmatpush1.msra.mxu0 0.0
    %714 = vmatprep.mubr.f32.mxu0 0.0
    %715 = vmatmul.mubr.f32.gmra.mrb[0].mxu0 %v438
    %v716 = vpop.f32.mrb[0].mxu0
    %v717 = vadd.f32 %v432, %v716
    %v718 = vpop.f32.mrb[0].mxu0
    %719 = vdwg.mxu0
    %v724 = vlaneseq
    %v725 = vshrl.u32 %v724, 7
    %v726 = vsub.s32 0, %v725
    %v727 = vrot.slane %v97, %v726
    %v728 = vlaneseq
    %v729 = vshrl.u32 %v728, 7
    %v730 = vsub.s32 0, %v729
    %v731 = vrot.slane %v98, %v730
    %v732 = vlaneseq
    %v733 = vshrl.u32 %v732, 7
    %v734 = vsub.s32 0, %v733
    %v735 = vrot.slane %v99, %v734
    %v736 = vlaneseq
    %v737 = vshrl.u32 %v736, 7
    %v738 = vsub.s32 0, %v737
    %v739 = vrot.slane %v100, %v738
    %v745 = vsel %vm129, %v104, 0
    %747 = vmatprep.subr.mxu0 0.0
    %748 = vmatpush1.msra.mxu0 %v67
    %749 = vmatprep.subr.mxu0 0.0
    %750 = vmatpush1.msra.mxu0 %v68
    %751 = vmatprep.subr.mxu0 0.0
    %752 = vmatpush1.msra.mxu0 %v69
    %753 = vmatprep.subr.mxu0 0.0
    %754 = vmatpush1.msra.mxu0 %v70
    %755 = vmatprep.subr.mxu0 0.0
    %756 = vmatpush1.msra.mxu0 0.0
    %757 = vmatprep.subr.mxu0 0.0
    %758 = vmatpush1.msra.mxu0 0.0
    %759 = vmatprep.subr.mxu0 0.0
    %760 = vmatpush1.msra.mxu0 0.0
    %761 = vmatprep.subr.mxu0 0.0
    %762 = vmatpush1.msra.mxu0 0.0
    %763 = vmatprep.subr.mxu0 0.0
    %764 = vmatpush1.msra.mxu0 0.0
    %765 = vmatprep.subr.mxu0 0.0
    %766 = vmatpush1.msra.mxu0 0.0
    %767 = vmatprep.subr.mxu0 0.0
    %768 = vmatpush1.msra.mxu0 0.0
    %769 = vmatprep.subr.mxu0 0.0
    %770 = vmatpush1.msra.mxu0 0.0
    %771 = vmatprep.subr.mxu0 0.0
    %772 = vmatpush1.msra.mxu0 0.0
    %773 = vmatprep.subr.mxu0 0.0
    %774 = vmatpush1.msra.mxu0 0.0
    %775 = vmatprep.subr.mxu0 0.0
    %776 = vmatpush1.msra.mxu0 0.0
    %777 = vmatprep.subr.mxu0 0.0
    %778 = vmatpush1.msra.mxu0 0.0
    %779 = vmatprep.subr.mxu0 0.0
    %780 = vmatpush1.msra.mxu0 0.0
    %781 = vmatprep.subr.mxu0 0.0
    %782 = vmatpush1.msra.mxu0 0.0
    %783 = vmatprep.subr.mxu0 0.0
    %784 = vmatpush1.msra.mxu0 0.0
    %785 = vmatprep.subr.mxu0 0.0
    %786 = vmatpush1.msra.mxu0 0.0
    %787 = vmatprep.subr.mxu0 0.0
    %788 = vmatpush1.msra.mxu0 0.0
    %789 = vmatprep.subr.mxu0 0.0
    %790 = vmatpush1.msra.mxu0 0.0
    %791 = vmatprep.subr.mxu0 0.0
    %792 = vmatpush1.msra.mxu0 0.0
    %793 = vmatprep.subr.mxu0 0.0
    %794 = vmatpush1.msra.mxu0 0.0
    %795 = vmatprep.subr.mxu0 0.0
    %796 = vmatpush1.msra.mxu0 0.0
    %797 = vmatprep.subr.mxu0 0.0
    %798 = vmatpush1.msra.mxu0 0.0
    %799 = vmatprep.subr.mxu0 0.0
    %800 = vmatpush1.msra.mxu0 0.0
    %801 = vmatprep.subr.mxu0 0.0
    %802 = vmatpush1.msra.mxu0 0.0
    %803 = vmatprep.subr.mxu0 0.0
    %804 = vmatpush1.msra.mxu0 0.0
    %805 = vmatprep.subr.mxu0 0.0
    %806 = vmatpush1.msra.mxu0 0.0
    %807 = vmatprep.subr.mxu0 0.0
    %808 = vmatpush1.msra.mxu0 0.0
    %809 = vmatprep.subr.mxu0 0.0
    %810 = vmatpush1.msra.mxu0 0.0
    %811 = vmatprep.mubr.f32.mxu0 0.0
    %812 = vmatmul.mubr.f32.gmra.mrb[0].mxu0 %v745
    %v813 = vpop.f32.mrb[0].mxu0
    %v814 = vadd.f32 %v727, %v813
    %v815 = vpop.f32.mrb[0].mxu0
    %816 = vdwg.mxu0
    %817 = vmatprep.subr.mxu0 0.0
    %818 = vmatpush1.msra.mxu0 %v71
    %819 = vmatprep.subr.mxu0 0.0
    %820 = vmatpush1.msra.mxu0 %v72
    %821 = vmatprep.subr.mxu0 0.0
    %822 = vmatpush1.msra.mxu0 %v73
    %823 = vmatprep.subr.mxu0 0.0
    %824 = vmatpush1.msra.mxu0 %v74
    %825 = vmatprep.subr.mxu0 0.0
    %826 = vmatpush1.msra.mxu0 0.0
    %827 = vmatprep.subr.mxu0 0.0
    %828 = vmatpush1.msra.mxu0 0.0
    %829 = vmatprep.subr.mxu0 0.0
    %830 = vmatpush1.msra.mxu0 0.0
    %831 = vmatprep.subr.mxu0 0.0
    %832 = vmatpush1.msra.mxu0 0.0
    %833 = vmatprep.subr.mxu0 0.0
    %834 = vmatpush1.msra.mxu0 0.0
    %835 = vmatprep.subr.mxu0 0.0
    %836 = vmatpush1.msra.mxu0 0.0
    %837 = vmatprep.subr.mxu0 0.0
    %838 = vmatpush1.msra.mxu0 0.0
    %839 = vmatprep.subr.mxu0 0.0
    %840 = vmatpush1.msra.mxu0 0.0
    %841 = vmatprep.subr.mxu0 0.0
    %842 = vmatpush1.msra.mxu0 0.0
    %843 = vmatprep.subr.mxu0 0.0
    %844 = vmatpush1.msra.mxu0 0.0
    %845 = vmatprep.subr.mxu0 0.0
    %846 = vmatpush1.msra.mxu0 0.0
    %847 = vmatprep.subr.mxu0 0.0
    %848 = vmatpush1.msra.mxu0 0.0
    %849 = vmatprep.subr.mxu0 0.0
    %850 = vmatpush1.msra.mxu0 0.0
    %851 = vmatprep.subr.mxu0 0.0
    %852 = vmatpush1.msra.mxu0 0.0
    %853 = vmatprep.subr.mxu0 0.0
    %854 = vmatpush1.msra.mxu0 0.0
    %855 = vmatprep.subr.mxu0 0.0
    %856 = vmatpush1.msra.mxu0 0.0
    %857 = vmatprep.subr.mxu0 0.0
    %858 = vmatpush1.msra.mxu0 0.0
    %859 = vmatprep.subr.mxu0 0.0
    %860 = vmatpush1.msra.mxu0 0.0
    %861 = vmatprep.subr.mxu0 0.0
    %862 = vmatpush1.msra.mxu0 0.0
    %863 = vmatprep.subr.mxu0 0.0
    %864 = vmatpush1.msra.mxu0 0.0
    %865 = vmatprep.subr.mxu0 0.0
    %866 = vmatpush1.msra.mxu0 0.0
    %867 = vmatprep.subr.mxu0 0.0
    %868 = vmatpush1.msra.mxu0 0.0
    %869 = vmatprep.subr.mxu0 0.0
    %870 = vmatpush1.msra.mxu0 0.0
    %871 = vmatprep.subr.mxu0 0.0
    %872 = vmatpush1.msra.mxu0 0.0
    %873 = vmatprep.subr.mxu0 0.0
    %874 = vmatpush1.msra.mxu0 0.0
    %875 = vmatprep.subr.mxu0 0.0
    %876 = vmatpush1.msra.mxu0 0.0
    %877 = vmatprep.subr.mxu0 0.0
    %878 = vmatpush1.msra.mxu0 0.0
    %879 = vmatprep.subr.mxu0 0.0
    %880 = vmatpush1.msra.mxu0 0.0
    %881 = vmatprep.mubr.f32.mxu0 0.0
    %882 = vmatmul.mubr.f32.gmra.mrb[0].mxu0 %v745
    %v883 = vpop.f32.mrb[0].mxu0
    %v884 = vadd.f32 %v731, %v883
    %v885 = vpop.f32.mrb[0].mxu0
    %886 = vdwg.mxu0
    %887 = vmatprep.subr.mxu0 0.0
    %888 = vmatpush1.msra.mxu0 %v75
    %889 = vmatprep.subr.mxu0 0.0
    %890 = vmatpush1.msra.mxu0 %v76
    %891 = vmatprep.subr.mxu0 0.0
    %892 = vmatpush1.msra.mxu0 %v77
    %893 = vmatprep.subr.mxu0 0.0
    %894 = vmatpush1.msra.mxu0 %v78
    %895 = vmatprep.subr.mxu0 0.0
    %896 = vmatpush1.msra.mxu0 0.0
    %897 = vmatprep.subr.mxu0 0.0
    %898 = vmatpush1.msra.mxu0 0.0
    %899 = vmatprep.subr.mxu0 0.0
    %900 = vmatpush1.msra.mxu0 0.0
    %901 = vmatprep.subr.mxu0 0.0
    %902 = vmatpush1.msra.mxu0 0.0
    %903 = vmatprep.subr.mxu0 0.0
    %904 = vmatpush1.msra.mxu0 0.0
    %905 = vmatprep.subr.mxu0 0.0
    %906 = vmatpush1.msra.mxu0 0.0
    %907 = vmatprep.subr.mxu0 0.0
    %908 = vmatpush1.msra.mxu0 0.0
    %909 = vmatprep.subr.mxu0 0.0
    %910 = vmatpush1.msra.mxu0 0.0
    %911 = vmatprep.subr.mxu0 0.0
    %912 = vmatpush1.msra.mxu0 0.0
    %913 = vmatprep.subr.mxu0 0.0
    %914 = vmatpush1.msra.mxu0 0.0
    %915 = vmatprep.subr.mxu0 0.0
    %916 = vmatpush1.msra.mxu0 0.0
    %917 = vmatprep.subr.mxu0 0.0
    %918 = vmatpush1.msra.mxu0 0.0
    %919 = vmatprep.subr.mxu0 0.0
    %920 = vmatpush1.msra.mxu0 0.0
    %921 = vmatprep.subr.mxu0 0.0
    %922 = vmatpush1.msra.mxu0 0.0
    %923 = vmatprep.subr.mxu0 0.0
    %924 = vmatpush1.msra.mxu0 0.0
    %925 = vmatprep.subr.mxu0 0.0
    %926 = vmatpush1.msra.mxu0 0.0
    %927 = vmatprep.subr.mxu0 0.0
    %928 = vmatpush1.msra.mxu0 0.0
    %929 = vmatprep.subr.mxu0 0.0
    %930 = vmatpush1.msra.mxu0 0.0
    %931 = vmatprep.subr.mxu0 0.0
    %932 = vmatpush1.msra.mxu0 0.0
    %933 = vmatprep.subr.mxu0 0.0
    %934 = vmatpush1.msra.mxu0 0.0
    %935 = vmatprep.subr.mxu0 0.0
    %936 = vmatpush1.msra.mxu0 0.0
    %937 = vmatprep.subr.mxu0 0.0
    %938 = vmatpush1.msra.mxu0 0.0
    %939 = vmatprep.subr.mxu0 0.0
    %940 = vmatpush1.msra.mxu0 0.0
    %941 = vmatprep.subr.mxu0 0.0
    %942 = vmatpush1.msra.mxu0 0.0
    %943 = vmatprep.subr.mxu0 0.0
    %944 = vmatpush1.msra.mxu0 0.0
    %945 = vmatprep.subr.mxu0 0.0
    %946 = vmatpush1.msra.mxu0 0.0
    %947 = vmatprep.subr.mxu0 0.0
    %948 = vmatpush1.msra.mxu0 0.0
    %949 = vmatprep.subr.mxu0 0.0
    %950 = vmatpush1.msra.mxu0 0.0
    %951 = vmatprep.mubr.f32.mxu0 0.0
    %952 = vmatmul.mubr.f32.gmra.mrb[0].mxu0 %v745
    %v953 = vpop.f32.mrb[0].mxu0
    %v954 = vadd.f32 %v735, %v953
    %v955 = vpop.f32.mrb[0].mxu0
    %956 = vdwg.mxu0
    %957 = vmatprep.subr.mxu0 0.0
    %958 = vmatpush1.msra.mxu0 %v79
    %959 = vmatprep.subr.mxu0 0.0
    %960 = vmatpush1.msra.mxu0 %v80
    %961 = vmatprep.subr.mxu0 0.0
    %962 = vmatpush1.msra.mxu0 %v81
    %963 = vmatprep.subr.mxu0 0.0
    %964 = vmatpush1.msra.mxu0 %v82
    %965 = vmatprep.subr.mxu0 0.0
    %966 = vmatpush1.msra.mxu0 0.0
    %967 = vmatprep.subr.mxu0 0.0
    %968 = vmatpush1.msra.mxu0 0.0
    %969 = vmatprep.subr.mxu0 0.0
    %970 = vmatpush1.msra.mxu0 0.0
    %971 = vmatprep.subr.mxu0 0.0
    %972 = vmatpush1.msra.mxu0 0.0
    %973 = vmatprep.subr.mxu0 0.0
    %974 = vmatpush1.msra.mxu0 0.0
    %975 = vmatprep.subr.mxu0 0.0
    %976 = vmatpush1.msra.mxu0 0.0
    %977 = vmatprep.subr.mxu0 0.0
    %978 = vmatpush1.msra.mxu0 0.0
    %979 = vmatprep.subr.mxu0 0.0
    %980 = vmatpush1.msra.mxu0 0.0
    %981 = vmatprep.subr.mxu0 0.0
    %982 = vmatpush1.msra.mxu0 0.0
    %983 = vmatprep.subr.mxu0 0.0
    %984 = vmatpush1.msra.mxu0 0.0
    %985 = vmatprep.subr.mxu0 0.0
    %986 = vmatpush1.msra.mxu0 0.0
    %987 = vmatprep.subr.mxu0 0.0
    %988 = vmatpush1.msra.mxu0 0.0
    %989 = vmatprep.subr.mxu0 0.0
    %990 = vmatpush1.msra.mxu0 0.0
    %991 = vmatprep.subr.mxu0 0.0
    %992 = vmatpush1.msra.mxu0 0.0
    %993 = vmatprep.subr.mxu0 0.0
    %994 = vmatpush1.msra.mxu0 0.0
    %995 = vmatprep.subr.mxu0 0.0
    %996 = vmatpush1.msra.mxu0 0.0
    %997 = vmatprep.subr.mxu0 0.0
    %998 = vmatpush1.msra.mxu0 0.0
    %999 = vmatprep.subr.mxu0 0.0
    %1000 = vmatpush1.msra.mxu0 0.0
    %1001 = vmatprep.subr.mxu0 0.0
    %1002 = vmatpush1.msra.mxu0 0.0
    %1003 = vmatprep.subr.mxu0 0.0
    %1004 = vmatpush1.msra.mxu0 0.0
    %1005 = vmatprep.subr.mxu0 0.0
    %1006 = vmatpush1.msra.mxu0 0.0
    %1007 = vmatprep.subr.mxu0 0.0
    %1008 = vmatpush1.msra.mxu0 0.0
    %1009 = vmatprep.subr.mxu0 0.0
    %1010 = vmatpush1.msra.mxu0 0.0
    %1011 = vmatprep.subr.mxu0 0.0
    %1012 = vmatpush1.msra.mxu0 0.0
    %1013 = vmatprep.subr.mxu0 0.0
    %1014 = vmatpush1.msra.mxu0 0.0
    %1015 = vmatprep.subr.mxu0 0.0
    %1016 = vmatpush1.msra.mxu0 0.0
    %1017 = vmatprep.subr.mxu0 0.0
    %1018 = vmatpush1.msra.mxu0 0.0
    %1019 = vmatprep.subr.mxu0 0.0
    %1020 = vmatpush1.msra.mxu0 0.0
    %1021 = vmatprep.mubr.f32.mxu0 0.0
    %1022 = vmatmul.mubr.f32.gmra.mrb[0].mxu0 %v745
    %v1023 = vpop.f32.mrb[0].mxu0
    %v1024 = vadd.f32 %v739, %v1023
    %v1025 = vpop.f32.mrb[0].mxu0
    %1026 = vdwg.mxu0
    %vm1027 = vcmask 64512
    %v1029 = vsel %vm1027, %v200, 0
    %v1032 = vsel %vm1027, %v507, 0
    %1034 = vmatprep.subr.mxu0 0.0
    %1035 = vmatpush1.xpose.msra.mxu0 %v1032
    %1036 = vmatprep.subr.mxu0 0.0
    %1037 = vmatpush1.xpose.msra.mxu0 0.0
    %1038 = vmatprep.subr.mxu0 0.0
    %1039 = vmatpush1.xpose.msra.mxu0 0.0
    %1040 = vmatprep.subr.mxu0 0.0
    %1041 = vmatpush1.xpose.msra.mxu0 0.0
    %1042 = vmatprep.subr.mxu0 0.0
    %1043 = vmatpush1.xpose.msra.mxu0 0.0
    %1044 = vmatprep.subr.mxu0 0.0
    %1045 = vmatpush1.xpose.msra.mxu0 0.0
    %1046 = vmatprep.subr.mxu0 0.0
    %1047 = vmatpush1.xpose.msra.mxu0 0.0
    %1048 = vmatprep.subr.mxu0 0.0
    %1049 = vmatpush1.xpose.msra.mxu0 0.0
    %1050 = vmatprep.subr.mxu0 0.0
    %1051 = vmatpush1.xpose.msra.mxu0 0.0
    %1052 = vmatprep.subr.mxu0 0.0
    %1053 = vmatpush1.xpose.msra.mxu0 0.0
    %1054 = vmatprep.subr.mxu0 0.0
    %1055 = vmatpush1.xpose.msra.mxu0 0.0
    %1056 = vmatprep.subr.mxu0 0.0
    %1057 = vmatpush1.xpose.msra.mxu0 0.0
    %1058 = vmatprep.subr.mxu0 0.0
    %1059 = vmatpush1.xpose.msra.mxu0 0.0
    %1060 = vmatprep.subr.mxu0 0.0
    %1061 = vmatpush1.xpose.msra.mxu0 0.0
    %1062 = vmatprep.subr.mxu0 0.0
    %1063 = vmatpush1.xpose.msra.mxu0 0.0
    %1064 = vmatprep.subr.mxu0 0.0
    %1065 = vmatpush1.xpose.msra.mxu0 0.0
    %1066 = vmatprep.subr.mxu0 0.0
    %1067 = vmatpush1.xpose.msra.mxu0 0.0
    %1068 = vmatprep.subr.mxu0 0.0
    %1069 = vmatpush1.xpose.msra.mxu0 0.0
    %1070 = vmatprep.subr.mxu0 0.0
    %1071 = vmatpush1.xpose.msra.mxu0 0.0
    %1072 = vmatprep.subr.mxu0 0.0
    %1073 = vmatpush1.xpose.msra.mxu0 0.0
    %1074 = vmatprep.subr.mxu0 0.0
    %1075 = vmatpush1.xpose.msra.mxu0 0.0
    %1076 = vmatprep.subr.mxu0 0.0
    %1077 = vmatpush1.xpose.msra.mxu0 0.0
    %1078 = vmatprep.subr.mxu0 0.0
    %1079 = vmatpush1.xpose.msra.mxu0 0.0
    %1080 = vmatprep.subr.mxu0 0.0
    %1081 = vmatpush1.xpose.msra.mxu0 0.0
    %1082 = vmatprep.subr.mxu0 0.0
    %1083 = vmatpush1.xpose.msra.mxu0 0.0
    %1084 = vmatprep.subr.mxu0 0.0
    %1085 = vmatpush1.xpose.msra.mxu0 0.0
    %1086 = vmatprep.subr.mxu0 0.0
    %1087 = vmatpush1.xpose.msra.mxu0 0.0
    %1088 = vmatprep.subr.mxu0 0.0
    %1089 = vmatpush1.xpose.msra.mxu0 0.0
    %1090 = vmatprep.subr.mxu0 0.0
    %1091 = vmatpush1.xpose.msra.mxu0 0.0
    %1092 = vmatprep.subr.mxu0 0.0
    %1093 = vmatpush1.xpose.msra.mxu0 0.0
    %1094 = vmatprep.subr.mxu0 0.0
    %1095 = vmatpush1.xpose.msra.mxu0 0.0
    %1096 = vmatprep.subr.mxu0 0.0
    %1097 = vmatpush1.xpose.msra.mxu0 0.0
    %1098 = vmatprep.mubr.f32.mxu0 0.0
    %1099 = vmatmul.mubr.f32.gmra.mrb[0].mxu0 %v1029
    %v1100 = vpop.f32.mrb[0].mxu0
    %v1101 = vadd.f32 0.0, %v1100
    %v1102 = vpop.f32.mrb[0].mxu0
    %1103 = vdwg.mxu0
    %v1105 = vsel %vm1027, %v270, 0
    %v1108 = vsel %vm1027, %v577, 0
    %1110 = vmatprep.subr.mxu0 0.0
    %1111 = vmatpush1.xpose.msra.mxu0 %v1108
    %1112 = vmatprep.subr.mxu0 0.0
    %1113 = vmatpush1.xpose.msra.mxu0 0.0
    %1114 = vmatprep.subr.mxu0 0.0
    %1115 = vmatpush1.xpose.msra.mxu0 0.0
    %1116 = vmatprep.subr.mxu0 0.0
    %1117 = vmatpush1.xpose.msra.mxu0 0.0
    %1118 = vmatprep.subr.mxu0 0.0
    %1119 = vmatpush1.xpose.msra.mxu0 0.0
    %1120 = vmatprep.subr.mxu0 0.0
    %1121 = vmatpush1.xpose.msra.mxu0 0.0
    %1122 = vmatprep.subr.mxu0 0.0
    %1123 = vmatpush1.xpose.msra.mxu0 0.0
    %1124 = vmatprep.subr.mxu0 0.0
    %1125 = vmatpush1.xpose.msra.mxu0 0.0
    %1126 = vmatprep.subr.mxu0 0.0
    %1127 = vmatpush1.xpose.msra.mxu0 0.0
    %1128 = vmatprep.subr.mxu0 0.0
    %1129 = vmatpush1.xpose.msra.mxu0 0.0
    %1130 = vmatprep.subr.mxu0 0.0
    %1131 = vmatpush1.xpose.msra.mxu0 0.0
    %1132 = vmatprep.subr.mxu0 0.0
    %1133 = vmatpush1.xpose.msra.mxu0 0.0
    %1134 = vmatprep.subr.mxu0 0.0
    %1135 = vmatpush1.xpose.msra.mxu0 0.0
    %1136 = vmatprep.subr.mxu0 0.0
    %1137 = vmatpush1.xpose.msra.mxu0 0.0
    %1138 = vmatprep.subr.mxu0 0.0
    %1139 = vmatpush1.xpose.msra.mxu0 0.0
    %1140 = vmatprep.subr.mxu0 0.0
    %1141 = vmatpush1.xpose.msra.mxu0 0.0
    %1142 = vmatprep.subr.mxu0 0.0
    %1143 = vmatpush1.xpose.msra.mxu0 0.0
    %1144 = vmatprep.subr.mxu0 0.0
    %1145 = vmatpush1.xpose.msra.mxu0 0.0
    %1146 = vmatprep.subr.mxu0 0.0
    %1147 = vmatpush1.xpose.msra.mxu0 0.0
    %1148 = vmatprep.subr.mxu0 0.0
    %1149 = vmatpush1.xpose.msra.mxu0 0.0
    %1150 = vmatprep.subr.mxu0 0.0
    %1151 = vmatpush1.xpose.msra.mxu0 0.0
    %1152 = vmatprep.subr.mxu0 0.0
    %1153 = vmatpush1.xpose.msra.mxu0 0.0
    %1154 = vmatprep.subr.mxu0 0.0
    %1155 = vmatpush1.xpose.msra.mxu0 0.0
    %1156 = vmatprep.subr.mxu0 0.0
    %1157 = vmatpush1.xpose.msra.mxu0 0.0
    %1158 = vmatprep.subr.mxu0 0.0
    %1159 = vmatpush1.xpose.msra.mxu0 0.0
    %1160 = vmatprep.subr.mxu0 0.0
    %1161 = vmatpush1.xpose.msra.mxu0 0.0
    %1162 = vmatprep.subr.mxu0 0.0
    %1163 = vmatpush1.xpose.msra.mxu0 0.0
    %1164 = vmatprep.subr.mxu0 0.0
    %1165 = vmatpush1.xpose.msra.mxu0 0.0
    %1166 = vmatprep.subr.mxu0 0.0
    %1167 = vmatpush1.xpose.msra.mxu0 0.0
    %1168 = vmatprep.subr.mxu0 0.0
    %1169 = vmatpush1.xpose.msra.mxu0 0.0
    %1170 = vmatprep.subr.mxu0 0.0
    %1171 = vmatpush1.xpose.msra.mxu0 0.0
    %1172 = vmatprep.subr.mxu0 0.0
    %1173 = vmatpush1.xpose.msra.mxu0 0.0
    %1174 = vmatprep.mubr.f32.mxu0 0.0
    %1175 = vmatmul.mubr.f32.gmra.mrb[0].mxu0 %v1105
    %v1176 = vpop.f32.mrb[0].mxu0
    %v1177 = vadd.f32 0.0, %v1176
    %v1178 = vpop.f32.mrb[0].mxu0
    %1179 = vdwg.mxu0
    %v1181 = vsel %vm1027, %v340, 0
    %v1184 = vsel %vm1027, %v647, 0
    %1186 = vmatprep.subr.mxu0 0.0
    %1187 = vmatpush1.xpose.msra.mxu0 %v1184
    %1188 = vmatprep.subr.mxu0 0.0
    %1189 = vmatpush1.xpose.msra.mxu0 0.0
    %1190 = vmatprep.subr.mxu0 0.0
    %1191 = vmatpush1.xpose.msra.mxu0 0.0
    %1192 = vmatprep.subr.mxu0 0.0
    %1193 = vmatpush1.xpose.msra.mxu0 0.0
    %1194 = vmatprep.subr.mxu0 0.0
    %1195 = vmatpush1.xpose.msra.mxu0 0.0
    %1196 = vmatprep.subr.mxu0 0.0
    %1197 = vmatpush1.xpose.msra.mxu0 0.0
    %1198 = vmatprep.subr.mxu0 0.0
    %1199 = vmatpush1.xpose.msra.mxu0 0.0
    %1200 = vmatprep.subr.mxu0 0.0
    %1201 = vmatpush1.xpose.msra.mxu0 0.0
    %1202 = vmatprep.subr.mxu0 0.0
    %1203 = vmatpush1.xpose.msra.mxu0 0.0
    %1204 = vmatprep.subr.mxu0 0.0
    %1205 = vmatpush1.xpose.msra.mxu0 0.0
    %1206 = vmatprep.subr.mxu0 0.0
    %1207 = vmatpush1.xpose.msra.mxu0 0.0
    %1208 = vmatprep.subr.mxu0 0.0
    %1209 = vmatpush1.xpose.msra.mxu0 0.0
    %1210 = vmatprep.subr.mxu0 0.0
    %1211 = vmatpush1.xpose.msra.mxu0 0.0
    %1212 = vmatprep.subr.mxu0 0.0
    %1213 = vmatpush1.xpose.msra.mxu0 0.0
    %1214 = vmatprep.subr.mxu0 0.0
    %1215 = vmatpush1.xpose.msra.mxu0 0.0
    %1216 = vmatprep.subr.mxu0 0.0
    %1217 = vmatpush1.xpose.msra.mxu0 0.0
    %1218 = vmatprep.subr.mxu0 0.0
    %1219 = vmatpush1.xpose.msra.mxu0 0.0
    %1220 = vmatprep.subr.mxu0 0.0
    %1221 = vmatpush1.xpose.msra.mxu0 0.0
    %1222 = vmatprep.subr.mxu0 0.0
    %1223 = vmatpush1.xpose.msra.mxu0 0.0
    %1224 = vmatprep.subr.mxu0 0.0
    %1225 = vmatpush1.xpose.msra.mxu0 0.0
    %1226 = vmatprep.subr.mxu0 0.0
    %1227 = vmatpush1.xpose.msra.mxu0 0.0
    %1228 = vmatprep.subr.mxu0 0.0
    %1229 = vmatpush1.xpose.msra.mxu0 0.0
    %1230 = vmatprep.subr.mxu0 0.0
    %1231 = vmatpush1.xpose.msra.mxu0 0.0
    %1232 = vmatprep.subr.mxu0 0.0
    %1233 = vmatpush1.xpose.msra.mxu0 0.0
    %1234 = vmatprep.subr.mxu0 0.0
    %1235 = vmatpush1.xpose.msra.mxu0 0.0
    %1236 = vmatprep.subr.mxu0 0.0
    %1237 = vmatpush1.xpose.msra.mxu0 0.0
    %1238 = vmatprep.subr.mxu0 0.0
    %1239 = vmatpush1.xpose.msra.mxu0 0.0
    %1240 = vmatprep.subr.mxu0 0.0
    %1241 = vmatpush1.xpose.msra.mxu0 0.0
    %1242 = vmatprep.subr.mxu0 0.0
    %1243 = vmatpush1.xpose.msra.mxu0 0.0
    %1244 = vmatprep.subr.mxu0 0.0
    %1245 = vmatpush1.xpose.msra.mxu0 0.0
    %1246 = vmatprep.subr.mxu0 0.0
    %1247 = vmatpush1.xpose.msra.mxu0 0.0
    %1248 = vmatprep.subr.mxu0 0.0
    %1249 = vmatpush1.xpose.msra.mxu0 0.0
    %1250 = vmatprep.mubr.f32.mxu0 0.0
    %1251 = vmatmul.mubr.f32.gmra.mrb[0].mxu0 %v1181
    %v1252 = vpop.f32.mrb[0].mxu0
    %v1253 = vadd.f32 0.0, %v1252
    %v1254 = vpop.f32.mrb[0].mxu0
    %1255 = vdwg.mxu0
    %v1257 = vsel %vm1027, %v410, 0
    %v1260 = vsel %vm1027, %v717, 0
    %1262 = vmatprep.subr.mxu0 0.0
    %1263 = vmatpush1.xpose.msra.mxu0 %v1260
    %1264 = vmatprep.subr.mxu0 0.0
    %1265 = vmatpush1.xpose.msra.mxu0 0.0
    %1266 = vmatprep.subr.mxu0 0.0
    %1267 = vmatpush1.xpose.msra.mxu0 0.0
    %1268 = vmatprep.subr.mxu0 0.0
    %1269 = vmatpush1.xpose.msra.mxu0 0.0
    %1270 = vmatprep.subr.mxu0 0.0
    %1271 = vmatpush1.xpose.msra.mxu0 0.0
    %1272 = vmatprep.subr.mxu0 0.0
    %1273 = vmatpush1.xpose.msra.mxu0 0.0
    %1274 = vmatprep.subr.mxu0 0.0
    %1275 = vmatpush1.xpose.msra.mxu0 0.0
    %1276 = vmatprep.subr.mxu0 0.0
    %1277 = vmatpush1.xpose.msra.mxu0 0.0
    %1278 = vmatprep.subr.mxu0 0.0
    %1279 = vmatpush1.xpose.msra.mxu0 0.0
    %1280 = vmatprep.subr.mxu0 0.0
    %1281 = vmatpush1.xpose.msra.mxu0 0.0
    %1282 = vmatprep.subr.mxu0 0.0
    %1283 = vmatpush1.xpose.msra.mxu0 0.0
    %1284 = vmatprep.subr.mxu0 0.0
    %1285 = vmatpush1.xpose.msra.mxu0 0.0
    %1286 = vmatprep.subr.mxu0 0.0
    %1287 = vmatpush1.xpose.msra.mxu0 0.0
    %1288 = vmatprep.subr.mxu0 0.0
    %1289 = vmatpush1.xpose.msra.mxu0 0.0
    %1290 = vmatprep.subr.mxu0 0.0
    %1291 = vmatpush1.xpose.msra.mxu0 0.0
    %1292 = vmatprep.subr.mxu0 0.0
    %1293 = vmatpush1.xpose.msra.mxu0 0.0
    %1294 = vmatprep.subr.mxu0 0.0
    %1295 = vmatpush1.xpose.msra.mxu0 0.0
    %1296 = vmatprep.subr.mxu0 0.0
    %1297 = vmatpush1.xpose.msra.mxu0 0.0
    %1298 = vmatprep.subr.mxu0 0.0
    %1299 = vmatpush1.xpose.msra.mxu0 0.0
    %1300 = vmatprep.subr.mxu0 0.0
    %1301 = vmatpush1.xpose.msra.mxu0 0.0
    %1302 = vmatprep.subr.mxu0 0.0
    %1303 = vmatpush1.xpose.msra.mxu0 0.0
    %1304 = vmatprep.subr.mxu0 0.0
    %1305 = vmatpush1.xpose.msra.mxu0 0.0
    %1306 = vmatprep.subr.mxu0 0.0
    %1307 = vmatpush1.xpose.msra.mxu0 0.0
    %1308 = vmatprep.subr.mxu0 0.0
    %1309 = vmatpush1.xpose.msra.mxu0 0.0
    %1310 = vmatprep.subr.mxu0 0.0
    %1311 = vmatpush1.xpose.msra.mxu0 0.0
    %1312 = vmatprep.subr.mxu0 0.0
    %1313 = vmatpush1.xpose.msra.mxu0 0.0
    %1314 = vmatprep.subr.mxu0 0.0
    %1315 = vmatpush1.xpose.msra.mxu0 0.0
    %1316 = vmatprep.subr.mxu0 0.0
    %1317 = vmatpush1.xpose.msra.mxu0 0.0
    %1318 = vmatprep.subr.mxu0 0.0
    %1319 = vmatpush1.xpose.msra.mxu0 0.0
    %1320 = vmatprep.subr.mxu0 0.0
    %1321 = vmatpush1.xpose.msra.mxu0 0.0
    %1322 = vmatprep.subr.mxu0 0.0
    %1323 = vmatpush1.xpose.msra.mxu0 0.0
    %1324 = vmatprep.subr.mxu0 0.0
    %1325 = vmatpush1.xpose.msra.mxu0 0.0
    %1326 = vmatprep.mubr.f32.mxu0 0.0
    %1327 = vmatmul.mubr.f32.gmra.mrb[0].mxu0 %v1257
    %v1328 = vpop.f32.mrb[0].mxu0
    %v1329 = vadd.f32 0.0, %v1328
    %v1330 = vpop.f32.mrb[0].mxu0
    %1331 = vdwg.mxu0
    %v1332 = vld [vmem:[%s7] sm:$0x1]
    %vm1333 = vcmp.eq.f32.partialorder %v1332, 0.0
    %v1334 = vsel %vm1333, 1, 0
    %v1335 = vlaneseq
    %v1336 = vshrl.u32 %v1335, 7
    %v1337 = vsub.s32 0, %v1336
    %v1338 = vrot.slane %v1334, %v1337
    %vm1339 = vcmp.eq.s32.totalorder %v1338, 1
    %v1340 = vsel %vm1339, -1e+09, %v1101
    %v1341 = vsel %vm1339, -1e+09, %v1177
    %v1342 = vsel %vm1339, -1e+09, %v1253
    %v1343 = vsel %vm1339, -1e+09, %v1329
    %v1344 = vsel %vm1027, %v1340, -inf
    %1345 = vmax.xlane.f32.xlu0 %v1344
    %v1346 = vpop.xlane.xlu0 %1345
    %v1347 = vsel %vm1027, %v1341, -inf
    %1348 = vmax.xlane.f32.xlu0 %v1347
    %v1349 = vpop.xlane.xlu0 %1348
    %v1350 = vsel %vm1027, %v1342, -inf
    %1351 = vmax.xlane.f32.xlu0 %v1350
    %v1352 = vpop.xlane.xlu0 %1351
    %v1353 = vsel %vm1027, %v1343, -inf
    %1354 = vmax.xlane.f32.xlu0 %v1353
    %v1355 = vpop.xlane.xlu0 %1354
    %v1356 = vsub.f32 %v1340, %v1346
    %v1357 = vsub.f32 %v1341, %v1349
    %v1358 = vsub.f32 %v1342, %v1352
    %v1359 = vsub.f32 %v1343, %v1355
    %v1360 = vmul.f32 %v1356, 1.442695
    %v1361 = vpow.pop %v1360
    %v1362 = vmul.f32 %v1357, 1.442695
    %v1363 = vpow.pop %v1362
    %v1364 = vmul.f32 %v1358, 1.442695
    %v1365 = vpow.pop %v1364
    %v1366 = vmul.f32 %v1359, 1.442695
    %v1367 = vpow.pop %v1366
    %v1368 = vsel %vm1027, %v1361, 0.0
    %1369 = vadd.xlane.f32.xlu0 %v1368
    %v1370 = vpop.xlane.xlu0 %1369
    %v1371 = vsel %vm1027, %v1363, 0.0
    %1372 = vadd.xlane.f32.xlu0 %v1371
    %v1373 = vpop.xlane.xlu0 %1372
    %v1374 = vsel %vm1027, %v1365, 0.0
    %1375 = vadd.xlane.f32.xlu0 %v1374
    %v1376 = vpop.xlane.xlu0 %1375
    %v1377 = vsel %vm1027, %v1367, 0.0
    %1378 = vadd.xlane.f32.xlu0 %v1377
    %v1379 = vpop.xlane.xlu0 %1378
    %v1380 = vrcp.pop %v1370
    %v1381 = vmul.f32 %v1361, %v1380
    %v1382 = vrcp.pop %v1373
    %v1383 = vmul.f32 %v1363, %v1382
    %v1384 = vrcp.pop %v1376
    %v1385 = vmul.f32 %v1365, %v1384
    %v1386 = vrcp.pop %v1379
    %v1387 = vmul.f32 %v1367, %v1386
    %1388 = vst.msk [vmem:[#allocation4] sm:$0xff] %vm1027, %v1381
    %1389 = vst.msk [vmem:[#allocation4 + $0x8] sm:$0xff] %vm1027, %v1383
    %1390 = vst.msk [vmem:[#allocation4 + $0x10] sm:$0xff] %vm1027, %v1385
    %1391 = vst.msk [vmem:[#allocation4 + $0x18] sm:$0xff] %vm1027, %v1387
    %v1393 = vsel %vm1027, %v1381, 0
    %1395 = vmatprep.subr.mxu0 0.0
    %1396 = vmatpush1.msra.mxu0 %v814
    %1397 = vmatprep.subr.mxu0 0.0
    %1398 = vmatpush1.msra.mxu0 0.0
    %1399 = vmatprep.subr.mxu0 0.0
    %1400 = vmatpush1.msra.mxu0 0.0
    %1401 = vmatprep.subr.mxu0 0.0
    %1402 = vmatpush1.msra.mxu0 0.0
    %1403 = vmatprep.subr.mxu0 0.0
    %1404 = vmatpush1.msra.mxu0 0.0
    %1405 = vmatprep.subr.mxu0 0.0
    %1406 = vmatpush1.msra.mxu0 0.0
    %1407 = vmatprep.subr.mxu0 0.0
    %1408 = vmatpush1.msra.mxu0 0.0
    %1409 = vmatprep.subr.mxu0 0.0
    %1410 = vmatpush1.msra.mxu0 0.0
    %1411 = vmatprep.subr.mxu0 0.0
    %1412 = vmatpush1.msra.mxu0 0.0
    %1413 = vmatprep.subr.mxu0 0.0
    %1414 = vmatpush1.msra.mxu0 0.0
    %1415 = vmatprep.subr.mxu0 0.0
    %1416 = vmatpush1.msra.mxu0 0.0
    %1417 = vmatprep.subr.mxu0 0.0
    %1418 = vmatpush1.msra.mxu0 0.0
    %1419 = vmatprep.subr.mxu0 0.0
    %1420 = vmatpush1.msra.mxu0 0.0
    %1421 = vmatprep.subr.mxu0 0.0
    %1422 = vmatpush1.msra.mxu0 0.0
    %1423 = vmatprep.subr.mxu0 0.0
    %1424 = vmatpush1.msra.mxu0 0.0
    %1425 = vmatprep.subr.mxu0 0.0
    %1426 = vmatpush1.msra.mxu0 0.0
    %1427 = vmatprep.subr.mxu0 0.0
    %1428 = vmatpush1.msra.mxu0 0.0
    %1429 = vmatprep.subr.mxu0 0.0
    %1430 = vmatpush1.msra.mxu0 0.0
    %1431 = vmatprep.subr.mxu0 0.0
    %1432 = vmatpush1.msra.mxu0 0.0
    %1433 = vmatprep.subr.mxu0 0.0
    %1434 = vmatpush1.msra.mxu0 0.0
    %1435 = vmatprep.subr.mxu0 0.0
    %1436 = vmatpush1.msra.mxu0 0.0
    %1437 = vmatprep.subr.mxu0 0.0
    %1438 = vmatpush1.msra.mxu0 0.0
    %1439 = vmatprep.subr.mxu0 0.0
    %1440 = vmatpush1.msra.mxu0 0.0
    %1441 = vmatprep.subr.mxu0 0.0
    %1442 = vmatpush1.msra.mxu0 0.0
    %1443 = vmatprep.subr.mxu0 0.0
    %1444 = vmatpush1.msra.mxu0 0.0
    %1445 = vmatprep.subr.mxu0 0.0
    %1446 = vmatpush1.msra.mxu0 0.0
    %1447 = vmatprep.subr.mxu0 0.0
    %1448 = vmatpush1.msra.mxu0 0.0
    %1449 = vmatprep.subr.mxu0 0.0
    %1450 = vmatpush1.msra.mxu0 0.0
    %1451 = vmatprep.subr.mxu0 0.0
    %1452 = vmatpush1.msra.mxu0 0.0
    %1453 = vmatprep.subr.mxu0 0.0
    %1454 = vmatpush1.msra.mxu0 0.0
    %1455 = vmatprep.subr.mxu0 0.0
    %1456 = vmatpush1.msra.mxu0 0.0
    %1457 = vmatprep.subr.mxu0 0.0
    %1458 = vmatpush1.msra.mxu0 0.0
    %1459 = vmatprep.mubr.f32.mxu0 0.0
    %1460 = vmatmul.mubr.f32.gmra.mrb[0].mxu0 %v1393
    %v1461 = vpop.f32.mrb[0].mxu0
    %v1462 = vadd.f32 0.0, %v1461
    %v1463 = vpop.f32.mrb[0].mxu0
    %1464 = vdwg.mxu0
    %v1466 = vsel %vm1027, %v1383, 0
    %1468 = vmatprep.subr.mxu0 0.0
    %1469 = vmatpush1.msra.mxu0 %v884
    %1470 = vmatprep.subr.mxu0 0.0
    %1471 = vmatpush1.msra.mxu0 0.0
    %1472 = vmatprep.subr.mxu0 0.0
    %1473 = vmatpush1.msra.mxu0 0.0
    %1474 = vmatprep.subr.mxu0 0.0
    %1475 = vmatpush1.msra.mxu0 0.0
    %1476 = vmatprep.subr.mxu0 0.0
    %1477 = vmatpush1.msra.mxu0 0.0
    %1478 = vmatprep.subr.mxu0 0.0
    %1479 = vmatpush1.msra.mxu0 0.0
    %1480 = vmatprep.subr.mxu0 0.0
    %1481 = vmatpush1.msra.mxu0 0.0
    %1482 = vmatprep.subr.mxu0 0.0
    %1483 = vmatpush1.msra.mxu0 0.0
    %1484 = vmatprep.subr.mxu0 0.0
    %1485 = vmatpush1.msra.mxu0 0.0
    %1486 = vmatprep.subr.mxu0 0.0
    %1487 = vmatpush1.msra.mxu0 0.0
    %1488 = vmatprep.subr.mxu0 0.0
    %1489 = vmatpush1.msra.mxu0 0.0
    %1490 = vmatprep.subr.mxu0 0.0
    %1491 = vmatpush1.msra.mxu0 0.0
    %1492 = vmatprep.subr.mxu0 0.0
    %1493 = vmatpush1.msra.mxu0 0.0
    %1494 = vmatprep.subr.mxu0 0.0
    %1495 = vmatpush1.msra.mxu0 0.0
    %1496 = vmatprep.subr.mxu0 0.0
    %1497 = vmatpush1.msra.mxu0 0.0
    %1498 = vmatprep.subr.mxu0 0.0
    %1499 = vmatpush1.msra.mxu0 0.0
    %1500 = vmatprep.subr.mxu0 0.0
    %1501 = vmatpush1.msra.mxu0 0.0
    %1502 = vmatprep.subr.mxu0 0.0
    %1503 = vmatpush1.msra.mxu0 0.0
    %1504 = vmatprep.subr.mxu0 0.0
    %1505 = vmatpush1.msra.mxu0 0.0
    %1506 = vmatprep.subr.mxu0 0.0
    %1507 = vmatpush1.msra.mxu0 0.0
    %1508 = vmatprep.subr.mxu0 0.0
    %1509 = vmatpush1.msra.mxu0 0.0
    %1510 = vmatprep.subr.mxu0 0.0
    %1511 = vmatpush1.msra.mxu0 0.0
    %1512 = vmatprep.subr.mxu0 0.0
    %1513 = vmatpush1.msra.mxu0 0.0
    %1514 = vmatprep.subr.mxu0 0.0
    %1515 = vmatpush1.msra.mxu0 0.0
    %1516 = vmatprep.subr.mxu0 0.0
    %1517 = vmatpush1.msra.mxu0 0.0
    %1518 = vmatprep.subr.mxu0 0.0
    %1519 = vmatpush1.msra.mxu0 0.0
    %1520 = vmatprep.subr.mxu0 0.0
    %1521 = vmatpush1.msra.mxu0 0.0
    %1522 = vmatprep.subr.mxu0 0.0
    %1523 = vmatpush1.msra.mxu0 0.0
    %1524 = vmatprep.subr.mxu0 0.0
    %1525 = vmatpush1.msra.mxu0 0.0
    %1526 = vmatprep.subr.mxu0 0.0
    %1527 = vmatpush1.msra.mxu0 0.0
    %1528 = vmatprep.subr.mxu0 0.0
    %1529 = vmatpush1.msra.mxu0 0.0
    %1530 = vmatprep.subr.mxu0 0.0
    %1531 = vmatpush1.msra.mxu0 0.0
    %1532 = vmatprep.mubr.f32.mxu0 0.0
    %1533 = vmatmul.mubr.f32.gmra.mrb[0].mxu0 %v1466
    %v1534 = vpop.f32.mrb[0].mxu0
    %v1535 = vadd.f32 0.0, %v1534
    %v1536 = vpop.f32.mrb[0].mxu0
    %1537 = vdwg.mxu0
    %v1539 = vsel %vm1027, %v1385, 0
    %1541 = vmatprep.subr.mxu0 0.0
    %1542 = vmatpush1.msra.mxu0 %v954
    %1543 = vmatprep.subr.mxu0 0.0
    %1544 = vmatpush1.msra.mxu0 0.0
    %1545 = vmatprep.subr.mxu0 0.0
    %1546 = vmatpush1.msra.mxu0 0.0
    %1547 = vmatprep.subr.mxu0 0.0
    %1548 = vmatpush1.msra.mxu0 0.0
    %1549 = vmatprep.subr.mxu0 0.0
    %1550 = vmatpush1.msra.mxu0 0.0
    %1551 = vmatprep.subr.mxu0 0.0
    %1552 = vmatpush1.msra.mxu0 0.0
    %1553 = vmatprep.subr.mxu0 0.0
    %1554 = vmatpush1.msra.mxu0 0.0
    %1555 = vmatprep.subr.mxu0 0.0
    %1556 = vmatpush1.msra.mxu0 0.0
    %1557 = vmatprep.subr.mxu0 0.0
    %1558 = vmatpush1.msra.mxu0 0.0
    %1559 = vmatprep.subr.mxu0 0.0
    %1560 = vmatpush1.msra.mxu0 0.0
    %1561 = vmatprep.subr.mxu0 0.0
    %1562 = vmatpush1.msra.mxu0 0.0
    %1563 = vmatprep.subr.mxu0 0.0
    %1564 = vmatpush1.msra.mxu0 0.0
    %1565 = vmatprep.subr.mxu0 0.0
    %1566 = vmatpush1.msra.mxu0 0.0
    %1567 = vmatprep.subr.mxu0 0.0
    %1568 = vmatpush1.msra.mxu0 0.0
    %1569 = vmatprep.subr.mxu0 0.0
    %1570 = vmatpush1.msra.mxu0 0.0
    %1571 = vmatprep.subr.mxu0 0.0
    %1572 = vmatpush1.msra.mxu0 0.0
    %1573 = vmatprep.subr.mxu0 0.0
    %1574 = vmatpush1.msra.mxu0 0.0
    %1575 = vmatprep.subr.mxu0 0.0
    %1576 = vmatpush1.msra.mxu0 0.0
    %1577 = vmatprep.subr.mxu0 0.0
    %1578 = vmatpush1.msra.mxu0 0.0
    %1579 = vmatprep.subr.mxu0 0.0
    %1580 = vmatpush1.msra.mxu0 0.0
    %1581 = vmatprep.subr.mxu0 0.0
    %1582 = vmatpush1.msra.mxu0 0.0
    %1583 = vmatprep.subr.mxu0 0.0
    %1584 = vmatpush1.msra.mxu0 0.0
    %1585 = vmatprep.subr.mxu0 0.0
    %1586 = vmatpush1.msra.mxu0 0.0
    %1587 = vmatprep.subr.mxu0 0.0
    %1588 = vmatpush1.msra.mxu0 0.0
    %1589 = vmatprep.subr.mxu0 0.0
    %1590 = vmatpush1.msra.mxu0 0.0
    %1591 = vmatprep.subr.mxu0 0.0
    %1592 = vmatpush1.msra.mxu0 0.0
    %1593 = vmatprep.subr.mxu0 0.0
    %1594 = vmatpush1.msra.mxu0 0.0
    %1595 = vmatprep.subr.mxu0 0.0
    %1596 = vmatpush1.msra.mxu0 0.0
    %1597 = vmatprep.subr.mxu0 0.0
    %1598 = vmatpush1.msra.mxu0 0.0
    %1599 = vmatprep.subr.mxu0 0.0
    %1600 = vmatpush1.msra.mxu0 0.0
    %1601 = vmatprep.subr.mxu0 0.0
    %1602 = vmatpush1.msra.mxu0 0.0
    %1603 = vmatprep.subr.mxu0 0.0
    %1604 = vmatpush1.msra.mxu0 0.0
    %1605 = vmatprep.mubr.f32.mxu0 0.0
    %1606 = vmatmul.mubr.f32.gmra.mrb[0].mxu0 %v1539
    %v1607 = vpop.f32.mrb[0].mxu0
    %v1608 = vadd.f32 0.0, %v1607
    %v1609 = vpop.f32.mrb[0].mxu0
    %1610 = vdwg.mxu0
    %v1612 = vsel %vm1027, %v1387, 0
    %1614 = vmatprep.subr.mxu0 0.0
    %1615 = vmatpush1.msra.mxu0 %v1024
    %1616 = vmatprep.subr.mxu0 0.0
    %1617 = vmatpush1.msra.mxu0 0.0
    %1618 = vmatprep.subr.mxu0 0.0
    %1619 = vmatpush1.msra.mxu0 0.0
    %1620 = vmatprep.subr.mxu0 0.0
    %1621 = vmatpush1.msra.mxu0 0.0
    %1622 = vmatprep.subr.mxu0 0.0
    %1623 = vmatpush1.msra.mxu0 0.0
    %1624 = vmatprep.subr.mxu0 0.0
    %1625 = vmatpush1.msra.mxu0 0.0
    %1626 = vmatprep.subr.mxu0 0.0
    %1627 = vmatpush1.msra.mxu0 0.0
    %1628 = vmatprep.subr.mxu0 0.0
    %1629 = vmatpush1.msra.mxu0 0.0
    %1630 = vmatprep.subr.mxu0 0.0
    %1631 = vmatpush1.msra.mxu0 0.0
    %1632 = vmatprep.subr.mxu0 0.0
    %1633 = vmatpush1.msra.mxu0 0.0
    %1634 = vmatprep.subr.mxu0 0.0
    %1635 = vmatpush1.msra.mxu0 0.0
    %1636 = vmatprep.subr.mxu0 0.0
    %1637 = vmatpush1.msra.mxu0 0.0
    %1638 = vmatprep.subr.mxu0 0.0
    %1639 = vmatpush1.msra.mxu0 0.0
    %1640 = vmatprep.subr.mxu0 0.0
    %1641 = vmatpush1.msra.mxu0 0.0
    %1642 = vmatprep.subr.mxu0 0.0
    %1643 = vmatpush1.msra.mxu0 0.0
    %1644 = vmatprep.subr.mxu0 0.0
    %1645 = vmatpush1.msra.mxu0 0.0
    %1646 = vmatprep.subr.mxu0 0.0
    %1647 = vmatpush1.msra.mxu0 0.0
    %1648 = vmatprep.subr.mxu0 0.0
    %1649 = vmatpush1.msra.mxu0 0.0
    %1650 = vmatprep.subr.mxu0 0.0
    %1651 = vmatpush1.msra.mxu0 0.0
    %1652 = vmatprep.subr.mxu0 0.0
    %1653 = vmatpush1.msra.mxu0 0.0
    %1654 = vmatprep.subr.mxu0 0.0
    %1655 = vmatpush1.msra.mxu0 0.0
    %1656 = vmatprep.subr.mxu0 0.0
    %1657 = vmatpush1.msra.mxu0 0.0
    %1658 = vmatprep.subr.mxu0 0.0
    %1659 = vmatpush1.msra.mxu0 0.0
    %1660 = vmatprep.subr.mxu0 0.0
    %1661 = vmatpush1.msra.mxu0 0.0
    %1662 = vmatprep.subr.mxu0 0.0
    %1663 = vmatpush1.msra.mxu0 0.0
    %1664 = vmatprep.subr.mxu0 0.0
    %1665 = vmatpush1.msra.mxu0 0.0
    %1666 = vmatprep.subr.mxu0 0.0
    %1667 = vmatpush1.msra.mxu0 0.0
    %1668 = vmatprep.subr.mxu0 0.0
    %1669 = vmatpush1.msra.mxu0 0.0
    %1670 = vmatprep.subr.mxu0 0.0
    %1671 = vmatpush1.msra.mxu0 0.0
    %1672 = vmatprep.subr.mxu0 0.0
    %1673 = vmatpush1.msra.mxu0 0.0
    %1674 = vmatprep.subr.mxu0 0.0
    %1675 = vmatpush1.msra.mxu0 0.0
    %1676 = vmatprep.subr.mxu0 0.0
    %1677 = vmatpush1.msra.mxu0 0.0
    %1678 = vmatprep.mubr.f32.mxu0 0.0
    %1679 = vmatmul.mubr.f32.gmra.mrb[0].mxu0 %v1612
    %v1680 = vpop.f32.mrb[0].mxu0
    %v1681 = vadd.f32 0.0, %v1680
    %v1682 = vpop.f32.mrb[0].mxu0
    %1683 = vdwg.mxu0
    %v1685 = vsel %vm1027, %v1462, 0
    %1687 = vmatprep.subr.mxu0 0.0
    %1688 = vmatpush1.msra.mxu0 %v83
    %1689 = vmatprep.subr.mxu0 0.0
    %1690 = vmatpush1.msra.mxu0 0.0
    %1691 = vmatprep.subr.mxu0 0.0
    %1692 = vmatpush1.msra.mxu0 0.0
    %1693 = vmatprep.subr.mxu0 0.0
    %1694 = vmatpush1.msra.mxu0 0.0
    %1695 = vmatprep.subr.mxu0 0.0
    %1696 = vmatpush1.msra.mxu0 0.0
    %1697 = vmatprep.subr.mxu0 0.0
    %1698 = vmatpush1.msra.mxu0 0.0
    %1699 = vmatprep.subr.mxu0 0.0
    %1700 = vmatpush1.msra.mxu0 0.0
    %1701 = vmatprep.subr.mxu0 0.0
    %1702 = vmatpush1.msra.mxu0 0.0
    %1703 = vmatprep.subr.mxu0 0.0
    %1704 = vmatpush1.msra.mxu0 0.0
    %1705 = vmatprep.subr.mxu0 0.0
    %1706 = vmatpush1.msra.mxu0 0.0
    %1707 = vmatprep.subr.mxu0 0.0
    %1708 = vmatpush1.msra.mxu0 0.0
    %1709 = vmatprep.subr.mxu0 0.0
    %1710 = vmatpush1.msra.mxu0 0.0
    %1711 = vmatprep.subr.mxu0 0.0
    %1712 = vmatpush1.msra.mxu0 0.0
    %1713 = vmatprep.subr.mxu0 0.0
    %1714 = vmatpush1.msra.mxu0 0.0
    %1715 = vmatprep.subr.mxu0 0.0
    %1716 = vmatpush1.msra.mxu0 0.0
    %1717 = vmatprep.subr.mxu0 0.0
    %1718 = vmatpush1.msra.mxu0 0.0
    %1719 = vmatprep.subr.mxu0 0.0
    %1720 = vmatpush1.msra.mxu0 0.0
    %1721 = vmatprep.subr.mxu0 0.0
    %1722 = vmatpush1.msra.mxu0 0.0
    %1723 = vmatprep.subr.mxu0 0.0
    %1724 = vmatpush1.msra.mxu0 0.0
    %1725 = vmatprep.subr.mxu0 0.0
    %1726 = vmatpush1.msra.mxu0 0.0
    %1727 = vmatprep.subr.mxu0 0.0
    %1728 = vmatpush1.msra.mxu0 0.0
    %1729 = vmatprep.subr.mxu0 0.0
    %1730 = vmatpush1.msra.mxu0 0.0
    %1731 = vmatprep.subr.mxu0 0.0
    %1732 = vmatpush1.msra.mxu0 0.0
    %1733 = vmatprep.subr.mxu0 0.0
    %1734 = vmatpush1.msra.mxu0 0.0
    %1735 = vmatprep.subr.mxu0 0.0
    %1736 = vmatpush1.msra.mxu0 0.0
    %1737 = vmatprep.subr.mxu0 0.0
    %1738 = vmatpush1.msra.mxu0 0.0
    %1739 = vmatprep.subr.mxu0 0.0
    %1740 = vmatpush1.msra.mxu0 0.0
    %1741 = vmatprep.subr.mxu0 0.0
    %1742 = vmatpush1.msra.mxu0 0.0
    %1743 = vmatprep.subr.mxu0 0.0
    %1744 = vmatpush1.msra.mxu0 0.0
    %1745 = vmatprep.subr.mxu0 0.0
    %1746 = vmatpush1.msra.mxu0 0.0
    %1747 = vmatprep.subr.mxu0 0.0
    %1748 = vmatpush1.msra.mxu0 0.0
    %1749 = vmatprep.subr.mxu0 0.0
    %1750 = vmatpush1.msra.mxu0 0.0
    %1751 = vmatprep.mubr.f32.mxu0 0.0
    %1752 = vmatmul.mubr.f32.gmra.mrb[0].mxu0 %v1685
    %v1753 = vpop.f32.mrb[0].mxu0
    %v1754 = vadd.f32 0.0, %v1753
    %v1755 = vpop.f32.mrb[0].mxu0
    %1756 = vdwg.mxu0
    %v1758 = vsel %vm1027, %v1535, 0
    %1760 = vmatprep.subr.mxu0 0.0
    %1761 = vmatpush1.msra.mxu0 %v84
    %1762 = vmatprep.subr.mxu0 0.0
    %1763 = vmatpush1.msra.mxu0 0.0
    %1764 = vmatprep.subr.mxu0 0.0
    %1765 = vmatpush1.msra.mxu0 0.0
    %1766 = vmatprep.subr.mxu0 0.0
    %1767 = vmatpush1.msra.mxu0 0.0
    %1768 = vmatprep.subr.mxu0 0.0
    %1769 = vmatpush1.msra.mxu0 0.0
    %1770 = vmatprep.subr.mxu0 0.0
    %1771 = vmatpush1.msra.mxu0 0.0
    %1772 = vmatprep.subr.mxu0 0.0
    %1773 = vmatpush1.msra.mxu0 0.0
    %1774 = vmatprep.subr.mxu0 0.0
    %1775 = vmatpush1.msra.mxu0 0.0
    %1776 = vmatprep.subr.mxu0 0.0
    %1777 = vmatpush1.msra.mxu0 0.0
    %1778 = vmatprep.subr.mxu0 0.0
    %1779 = vmatpush1.msra.mxu0 0.0
    %1780 = vmatprep.subr.mxu0 0.0
    %1781 = vmatpush1.msra.mxu0 0.0
    %1782 = vmatprep.subr.mxu0 0.0
    %1783 = vmatpush1.msra.mxu0 0.0
    %1784 = vmatprep.subr.mxu0 0.0
    %1785 = vmatpush1.msra.mxu0 0.0
    %1786 = vmatprep.subr.mxu0 0.0
    %1787 = vmatpush1.msra.mxu0 0.0
    %1788 = vmatprep.subr.mxu0 0.0
    %1789 = vmatpush1.msra.mxu0 0.0
    %1790 = vmatprep.subr.mxu0 0.0
    %1791 = vmatpush1.msra.mxu0 0.0
    %1792 = vmatprep.subr.mxu0 0.0
    %1793 = vmatpush1.msra.mxu0 0.0
    %1794 = vmatprep.subr.mxu0 0.0
    %1795 = vmatpush1.msra.mxu0 0.0
    %1796 = vmatprep.subr.mxu0 0.0
    %1797 = vmatpush1.msra.mxu0 0.0
    %1798 = vmatprep.subr.mxu0 0.0
    %1799 = vmatpush1.msra.mxu0 0.0
    %1800 = vmatprep.subr.mxu0 0.0
    %1801 = vmatpush1.msra.mxu0 0.0
    %1802 = vmatprep.subr.mxu0 0.0
    %1803 = vmatpush1.msra.mxu0 0.0
    %1804 = vmatprep.subr.mxu0 0.0
    %1805 = vmatpush1.msra.mxu0 0.0
    %1806 = vmatprep.subr.mxu0 0.0
    %1807 = vmatpush1.msra.mxu0 0.0
    %1808 = vmatprep.subr.mxu0 0.0
    %1809 = vmatpush1.msra.mxu0 0.0
    %1810 = vmatprep.subr.mxu0 0.0
    %1811 = vmatpush1.msra.mxu0 0.0
    %1812 = vmatprep.subr.mxu0 0.0
    %1813 = vmatpush1.msra.mxu0 0.0
    %1814 = vmatprep.subr.mxu0 0.0
    %1815 = vmatpush1.msra.mxu0 0.0
    %1816 = vmatprep.subr.mxu0 0.0
    %1817 = vmatpush1.msra.mxu0 0.0
    %1818 = vmatprep.subr.mxu0 0.0
    %1819 = vmatpush1.msra.mxu0 0.0
    %1820 = vmatprep.subr.mxu0 0.0
    %1821 = vmatpush1.msra.mxu0 0.0
    %1822 = vmatprep.subr.mxu0 0.0
    %1823 = vmatpush1.msra.mxu0 0.0
    %1824 = vmatprep.mubr.f32.mxu0 0.0
    %1825 = vmatmul.mubr.f32.gmra.mrb[0].mxu0 %v1758
    %v1826 = vpop.f32.mrb[0].mxu0
    %v1827 = vadd.f32 0.0, %v1826
    %v1828 = vpop.f32.mrb[0].mxu0
    %1829 = vdwg.mxu0
    %v1831 = vsel %vm1027, %v1608, 0
    %1833 = vmatprep.subr.mxu0 0.0
    %1834 = vmatpush1.msra.mxu0 %v85
    %1835 = vmatprep.subr.mxu0 0.0
    %1836 = vmatpush1.msra.mxu0 0.0
    %1837 = vmatprep.subr.mxu0 0.0
    %1838 = vmatpush1.msra.mxu0 0.0
    %1839 = vmatprep.subr.mxu0 0.0
    %1840 = vmatpush1.msra.mxu0 0.0
    %1841 = vmatprep.subr.mxu0 0.0
    %1842 = vmatpush1.msra.mxu0 0.0
    %1843 = vmatprep.subr.mxu0 0.0
    %1844 = vmatpush1.msra.mxu0 0.0
    %1845 = vmatprep.subr.mxu0 0.0
    %1846 = vmatpush1.msra.mxu0 0.0
    %1847 = vmatprep.subr.mxu0 0.0
    %1848 = vmatpush1.msra.mxu0 0.0
    %1849 = vmatprep.subr.mxu0 0.0
    %1850 = vmatpush1.msra.mxu0 0.0
    %1851 = vmatprep.subr.mxu0 0.0
    %1852 = vmatpush1.msra.mxu0 0.0
    %1853 = vmatprep.subr.mxu0 0.0
    %1854 = vmatpush1.msra.mxu0 0.0
    %1855 = vmatprep.subr.mxu0 0.0
    %1856 = vmatpush1.msra.mxu0 0.0
    %1857 = vmatprep.subr.mxu0 0.0
    %1858 = vmatpush1.msra.mxu0 0.0
    %1859 = vmatprep.subr.mxu0 0.0
    %1860 = vmatpush1.msra.mxu0 0.0
    %1861 = vmatprep.subr.mxu0 0.0
    %1862 = vmatpush1.msra.mxu0 0.0
    %1863 = vmatprep.subr.mxu0 0.0
    %1864 = vmatpush1.msra.mxu0 0.0
    %1865 = vmatprep.subr.mxu0 0.0
    %1866 = vmatpush1.msra.mxu0 0.0
    %1867 = vmatprep.subr.mxu0 0.0
    %1868 = vmatpush1.msra.mxu0 0.0
    %1869 = vmatprep.subr.mxu0 0.0
    %1870 = vmatpush1.msra.mxu0 0.0
    %1871 = vmatprep.subr.mxu0 0.0
    %1872 = vmatpush1.msra.mxu0 0.0
    %1873 = vmatprep.subr.mxu0 0.0
    %1874 = vmatpush1.msra.mxu0 0.0
    %1875 = vmatprep.subr.mxu0 0.0
    %1876 = vmatpush1.msra.mxu0 0.0
    %1877 = vmatprep.subr.mxu0 0.0
    %1878 = vmatpush1.msra.mxu0 0.0
    %1879 = vmatprep.subr.mxu0 0.0
    %1880 = vmatpush1.msra.mxu0 0.0
    %1881 = vmatprep.subr.mxu0 0.0
    %1882 = vmatpush1.msra.mxu0 0.0
    %1883 = vmatprep.subr.mxu0 0.0
    %1884 = vmatpush1.msra.mxu0 0.0
    %1885 = vmatprep.subr.mxu0 0.0
    %1886 = vmatpush1.msra.mxu0 0.0
    %1887 = vmatprep.subr.mxu0 0.0
    %1888 = vmatpush1.msra.mxu0 0.0
    %1889 = vmatprep.subr.mxu0 0.0
    %1890 = vmatpush1.msra.mxu0 0.0
    %1891 = vmatprep.subr.mxu0 0.0
    %1892 = vmatpush1.msra.mxu0 0.0
    %1893 = vmatprep.subr.mxu0 0.0
    %1894 = vmatpush1.msra.mxu0 0.0
    %1895 = vmatprep.subr.mxu0 0.0
    %1896 = vmatpush1.msra.mxu0 0.0
    %1897 = vmatprep.mubr.f32.mxu0 0.0
    %1898 = vmatmul.mubr.f32.gmra.mrb[0].mxu0 %v1831
    %v1899 = vpop.f32.mrb[0].mxu0
    %v1900 = vadd.f32 0.0, %v1899
    %v1901 = vpop.f32.mrb[0].mxu0
    %1902 = vdwg.mxu0
    %v1904 = vsel %vm1027, %v1681, 0
    %1906 = vmatprep.subr.mxu0 0.0
    %1907 = vmatpush1.msra.mxu0 %v86
    %1908 = vmatprep.subr.mxu0 0.0
    %1909 = vmatpush1.msra.mxu0 0.0
    %1910 = vmatprep.subr.mxu0 0.0
    %1911 = vmatpush1.msra.mxu0 0.0
    %1912 = vmatprep.subr.mxu0 0.0
    %1913 = vmatpush1.msra.mxu0 0.0
    %1914 = vmatprep.subr.mxu0 0.0
    %1915 = vmatpush1.msra.mxu0 0.0
    %1916 = vmatprep.subr.mxu0 0.0
    %1917 = vmatpush1.msra.mxu0 0.0
    %1918 = vmatprep.subr.mxu0 0.0
    %1919 = vmatpush1.msra.mxu0 0.0
    %1920 = vmatprep.subr.mxu0 0.0
    %1921 = vmatpush1.msra.mxu0 0.0
    %1922 = vmatprep.subr.mxu0 0.0
    %1923 = vmatpush1.msra.mxu0 0.0
    %1924 = vmatprep.subr.mxu0 0.0
    %1925 = vmatpush1.msra.mxu0 0.0
    %1926 = vmatprep.subr.mxu0 0.0
    %1927 = vmatpush1.msra.mxu0 0.0
    %1928 = vmatprep.subr.mxu0 0.0
    %1929 = vmatpush1.msra.mxu0 0.0
    %1930 = vmatprep.subr.mxu0 0.0
    %1931 = vmatpush1.msra.mxu0 0.0
    %1932 = vmatprep.subr.mxu0 0.0
    %1933 = vmatpush1.msra.mxu0 0.0
    %1934 = vmatprep.subr.mxu0 0.0
    %1935 = vmatpush1.msra.mxu0 0.0
    %1936 = vmatprep.subr.mxu0 0.0
    %1937 = vmatpush1.msra.mxu0 0.0
    %1938 = vmatprep.subr.mxu0 0.0
    %1939 = vmatpush1.msra.mxu0 0.0
    %1940 = vmatprep.subr.mxu0 0.0
    %1941 = vmatpush1.msra.mxu0 0.0
    %1942 = vmatprep.subr.mxu0 0.0
    %1943 = vmatpush1.msra.mxu0 0.0
    %1944 = vmatprep.subr.mxu0 0.0
    %1945 = vmatpush1.msra.mxu0 0.0
    %1946 = vmatprep.subr.mxu0 0.0
    %1947 = vmatpush1.msra.mxu0 0.0
    %1948 = vmatprep.subr.mxu0 0.0
    %1949 = vmatpush1.msra.mxu0 0.0
    %1950 = vmatprep.subr.mxu0 0.0
    %1951 = vmatpush1.msra.mxu0 0.0
    %1952 = vmatprep.subr.mxu0 0.0
    %1953 = vmatpush1.msra.mxu0 0.0
    %1954 = vmatprep.subr.mxu0 0.0
    %1955 = vmatpush1.msra.mxu0 0.0
    %1956 = vmatprep.subr.mxu0 0.0
    %1957 = vmatpush1.msra.mxu0 0.0
    %1958 = vmatprep.subr.mxu0 0.0
    %1959 = vmatpush1.msra.mxu0 0.0
    %1960 = vmatprep.subr.mxu0 0.0
    %1961 = vmatpush1.msra.mxu0 0.0
    %1962 = vmatprep.subr.mxu0 0.0
    %1963 = vmatpush1.msra.mxu0 0.0
    %1964 = vmatprep.subr.mxu0 0.0
    %1965 = vmatpush1.msra.mxu0 0.0
    %1966 = vmatprep.subr.mxu0 0.0
    %1967 = vmatpush1.msra.mxu0 0.0
    %1968 = vmatprep.subr.mxu0 0.0
    %1969 = vmatpush1.msra.mxu0 0.0
    %1970 = vmatprep.mubr.f32.mxu0 0.0
    %1971 = vmatmul.mubr.f32.gmra.mrb[0].mxu0 %v1904
    %v1972 = vpop.f32.mrb[0].mxu0
    %v1973 = vadd.f32 0.0, %v1972
    %v1974 = vpop.f32.mrb[0].mxu0
    %1975 = vdwg.mxu0
    %v1976 = vsel %vm129, %v1754, 0.0
    %v1977 = vsel %vm129, %v1827, 0.0
    %v1978 = vadd.f32 %v1976, %v1977
    %v1979 = vsel %vm129, %v1900, 0.0
    %v1980 = vadd.f32 %v1978, %v1979
    %v1981 = vsel %vm129, %v1973, 0.0
    %v1982 = vadd.f32 %v1980, %v1981
    %v1984 = vlaneseq
    %v1985 = vshrl.u32 %v1984, 7
    %v1986 = vsub.s32 0, %v1985
    %v1987 = vrot.slane %v101, %v1986
    %v1989 = vadd.f32 %v1982, %v1987
    %1990 = vst.msk [vmem:[#allocation2] sm:$0xff] %vm129, %v1989
    %s1991 = scalar_lea.vmem %s0, 8
    %v1992 = vld [vmem:[%s1991] sm:$0xff]
    %s1993 = scalar_lea.vmem %s1, 8
    %v1994 = vld [vmem:[%s1993] sm:$0xff]
    %s1995 = scalar_lea.vmem %s2, 8
    %v1996 = vld [vmem:[%s1995] sm:$0xff]
    %v1998 = vsel %vm129, %v1992, 0
    %2000 = vmatprep.subr.mxu0 0.0
    %2001 = vmatpush1.msra.mxu0 %v33
    %2002 = vmatprep.subr.mxu0 0.0
    %2003 = vmatpush1.msra.mxu0 %v34
    %2004 = vmatprep.subr.mxu0 0.0
    %2005 = vmatpush1.msra.mxu0 %v35
    %2006 = vmatprep.subr.mxu0 0.0
    %2007 = vmatpush1.msra.mxu0 %v36
    %2008 = vmatprep.subr.mxu0 0.0
    %2009 = vmatpush1.msra.mxu0 0.0
    %2010 = vmatprep.subr.mxu0 0.0
    %2011 = vmatpush1.msra.mxu0 0.0
    %2012 = vmatprep.subr.mxu0 0.0
    %2013 = vmatpush1.msra.mxu0 0.0
    %2014 = vmatprep.subr.mxu0 0.0
    %2015 = vmatpush1.msra.mxu0 0.0
    %2016 = vmatprep.subr.mxu0 0.0
    %2017 = vmatpush1.msra.mxu0 0.0
    %2018 = vmatprep.subr.mxu0 0.0
    %2019 = vmatpush1.msra.mxu0 0.0
    %2020 = vmatprep.subr.mxu0 0.0
    %2021 = vmatpush1.msra.mxu0 0.0
    %2022 = vmatprep.subr.mxu0 0.0
    %2023 = vmatpush1.msra.mxu0 0.0
    %2024 = vmatprep.subr.mxu0 0.0
    %2025 = vmatpush1.msra.mxu0 0.0
    %2026 = vmatprep.subr.mxu0 0.0
    %2027 = vmatpush1.msra.mxu0 0.0
    %2028 = vmatprep.subr.mxu0 0.0
    %2029 = vmatpush1.msra.mxu0 0.0
    %2030 = vmatprep.subr.mxu0 0.0
    %2031 = vmatpush1.msra.mxu0 0.0
    %2032 = vmatprep.subr.mxu0 0.0
    %2033 = vmatpush1.msra.mxu0 0.0
    %2034 = vmatprep.subr.mxu0 0.0
    %2035 = vmatpush1.msra.mxu0 0.0
    %2036 = vmatprep.subr.mxu0 0.0
    %2037 = vmatpush1.msra.mxu0 0.0
    %2038 = vmatprep.subr.mxu0 0.0
    %2039 = vmatpush1.msra.mxu0 0.0
    %2040 = vmatprep.subr.mxu0 0.0
    %2041 = vmatpush1.msra.mxu0 0.0
    %2042 = vmatprep.subr.mxu0 0.0
    %2043 = vmatpush1.msra.mxu0 0.0
    %2044 = vmatprep.subr.mxu0 0.0
    %2045 = vmatpush1.msra.mxu0 0.0
    %2046 = vmatprep.subr.mxu0 0.0
    %2047 = vmatpush1.msra.mxu0 0.0
    %2048 = vmatprep.subr.mxu0 0.0
    %2049 = vmatpush1.msra.mxu0 0.0
    %2050 = vmatprep.subr.mxu0 0.0
    %2051 = vmatpush1.msra.mxu0 0.0
    %2052 = vmatprep.subr.mxu0 0.0
    %2053 = vmatpush1.msra.mxu0 0.0
    %2054 = vmatprep.subr.mxu0 0.0
    %2055 = vmatpush1.msra.mxu0 0.0
    %2056 = vmatprep.subr.mxu0 0.0
    %2057 = vmatpush1.msra.mxu0 0.0
    %2058 = vmatprep.subr.mxu0 0.0
    %2059 = vmatpush1.msra.mxu0 0.0
    %2060 = vmatprep.subr.mxu0 0.0
    %2061 = vmatpush1.msra.mxu0 0.0
    %2062 = vmatprep.subr.mxu0 0.0
    %2063 = vmatpush1.msra.mxu0 0.0
    %2064 = vmatprep.mubr.f32.mxu0 0.0
    %2065 = vmatmul.mubr.f32.gmra.mrb[0].mxu0 %v1998
    %v2066 = vpop.f32.mrb[0].mxu0
    %v2067 = vadd.f32 %v112, %v2066
    %v2068 = vpop.f32.mrb[0].mxu0
    %2069 = vdwg.mxu0
    %2070 = vmatprep.subr.mxu0 0.0
    %2071 = vmatpush1.msra.mxu0 %v37
    %2072 = vmatprep.subr.mxu0 0.0
    %2073 = vmatpush1.msra.mxu0 %v38
    %2074 = vmatprep.subr.mxu0 0.0
    %2075 = vmatpush1.msra.mxu0 %v39
    %2076 = vmatprep.subr.mxu0 0.0
    %2077 = vmatpush1.msra.mxu0 %v40
    %2078 = vmatprep.subr.mxu0 0.0
    %2079 = vmatpush1.msra.mxu0 0.0
    %2080 = vmatprep.subr.mxu0 0.0
    %2081 = vmatpush1.msra.mxu0 0.0
    %2082 = vmatprep.subr.mxu0 0.0
    %2083 = vmatpush1.msra.mxu0 0.0
    %2084 = vmatprep.subr.mxu0 0.0
    %2085 = vmatpush1.msra.mxu0 0.0
    %2086 = vmatprep.subr.mxu0 0.0
    %2087 = vmatpush1.msra.mxu0 0.0
    %2088 = vmatprep.subr.mxu0 0.0
    %2089 = vmatpush1.msra.mxu0 0.0
    %2090 = vmatprep.subr.mxu0 0.0
    %2091 = vmatpush1.msra.mxu0 0.0
    %2092 = vmatprep.subr.mxu0 0.0
    %2093 = vmatpush1.msra.mxu0 0.0
    %2094 = vmatprep.subr.mxu0 0.0
    %2095 = vmatpush1.msra.mxu0 0.0
    %2096 = vmatprep.subr.mxu0 0.0
    %2097 = vmatpush1.msra.mxu0 0.0
    %2098 = vmatprep.subr.mxu0 0.0
    %2099 = vmatpush1.msra.mxu0 0.0
    %2100 = vmatprep.subr.mxu0 0.0
    %2101 = vmatpush1.msra.mxu0 0.0
    %2102 = vmatprep.subr.mxu0 0.0
    %2103 = vmatpush1.msra.mxu0 0.0
    %2104 = vmatprep.subr.mxu0 0.0
    %2105 = vmatpush1.msra.mxu0 0.0
    %2106 = vmatprep.subr.mxu0 0.0
    %2107 = vmatpush1.msra.mxu0 0.0
    %2108 = vmatprep.subr.mxu0 0.0
    %2109 = vmatpush1.msra.mxu0 0.0
    %2110 = vmatprep.subr.mxu0 0.0
    %2111 = vmatpush1.msra.mxu0 0.0
    %2112 = vmatprep.subr.mxu0 0.0
    %2113 = vmatpush1.msra.mxu0 0.0
    %2114 = vmatprep.subr.mxu0 0.0
    %2115 = vmatpush1.msra.mxu0 0.0
    %2116 = vmatprep.subr.mxu0 0.0
    %2117 = vmatpush1.msra.mxu0 0.0
    %2118 = vmatprep.subr.mxu0 0.0
    %2119 = vmatpush1.msra.mxu0 0.0
    %2120 = vmatprep.subr.mxu0 0.0
    %2121 = vmatpush1.msra.mxu0 0.0
    %2122 = vmatprep.subr.mxu0 0.0
    %2123 = vmatpush1.msra.mxu0 0.0
    %2124 = vmatprep.subr.mxu0 0.0
    %2125 = vmatpush1.msra.mxu0 0.0
    %2126 = vmatprep.subr.mxu0 0.0
    %2127 = vmatpush1.msra.mxu0 0.0
    %2128 = vmatprep.subr.mxu0 0.0
    %2129 = vmatpush1.msra.mxu0 0.0
    %2130 = vmatprep.subr.mxu0 0.0
    %2131 = vmatpush1.msra.mxu0 0.0
    %2132 = vmatprep.subr.mxu0 0.0
    %2133 = vmatpush1.msra.mxu0 0.0
    %2134 = vmatprep.mubr.f32.mxu0 0.0
    %2135 = vmatmul.mubr.f32.gmra.mrb[0].mxu0 %v1998
    %v2136 = vpop.f32.mrb[0].mxu0
    %v2137 = vadd.f32 %v116, %v2136
    %v2138 = vpop.f32.mrb[0].mxu0
    %2139 = vdwg.mxu0
    %2140 = vmatprep.subr.mxu0 0.0
    %2141 = vmatpush1.msra.mxu0 %v41
    %2142 = vmatprep.subr.mxu0 0.0
    %2143 = vmatpush1.msra.mxu0 %v42
    %2144 = vmatprep.subr.mxu0 0.0
    %2145 = vmatpush1.msra.mxu0 %v43
    %2146 = vmatprep.subr.mxu0 0.0
    %2147 = vmatpush1.msra.mxu0 %v44
    %2148 = vmatprep.subr.mxu0 0.0
    %2149 = vmatpush1.msra.mxu0 0.0
    %2150 = vmatprep.subr.mxu0 0.0
    %2151 = vmatpush1.msra.mxu0 0.0
    %2152 = vmatprep.subr.mxu0 0.0
    %2153 = vmatpush1.msra.mxu0 0.0
    %2154 = vmatprep.subr.mxu0 0.0
    %2155 = vmatpush1.msra.mxu0 0.0
    %2156 = vmatprep.subr.mxu0 0.0
    %2157 = vmatpush1.msra.mxu0 0.0
    %2158 = vmatprep.subr.mxu0 0.0
    %2159 = vmatpush1.msra.mxu0 0.0
    %2160 = vmatprep.subr.mxu0 0.0
    %2161 = vmatpush1.msra.mxu0 0.0
    %2162 = vmatprep.subr.mxu0 0.0
    %2163 = vmatpush1.msra.mxu0 0.0
    %2164 = vmatprep.subr.mxu0 0.0
    %2165 = vmatpush1.msra.mxu0 0.0
    %2166 = vmatprep.subr.mxu0 0.0
    %2167 = vmatpush1.msra.mxu0 0.0
    %2168 = vmatprep.subr.mxu0 0.0
    %2169 = vmatpush1.msra.mxu0 0.0
    %2170 = vmatprep.subr.mxu0 0.0
    %2171 = vmatpush1.msra.mxu0 0.0
    %2172 = vmatprep.subr.mxu0 0.0
    %2173 = vmatpush1.msra.mxu0 0.0
    %2174 = vmatprep.subr.mxu0 0.0
    %2175 = vmatpush1.msra.mxu0 0.0
    %2176 = vmatprep.subr.mxu0 0.0
    %2177 = vmatpush1.msra.mxu0 0.0
    %2178 = vmatprep.subr.mxu0 0.0
    %2179 = vmatpush1.msra.mxu0 0.0
    %2180 = vmatprep.subr.mxu0 0.0
    %2181 = vmatpush1.msra.mxu0 0.0
    %2182 = vmatprep.subr.mxu0 0.0
    %2183 = vmatpush1.msra.mxu0 0.0
    %2184 = vmatprep.subr.mxu0 0.0
    %2185 = vmatpush1.msra.mxu0 0.0
    %2186 = vmatprep.subr.mxu0 0.0
    %2187 = vmatpush1.msra.mxu0 0.0
    %2188 = vmatprep.subr.mxu0 0.0
    %2189 = vmatpush1.msra.mxu0 0.0
    %2190 = vmatprep.subr.mxu0 0.0
    %2191 = vmatpush1.msra.mxu0 0.0
    %2192 = vmatprep.subr.mxu0 0.0
    %2193 = vmatpush1.msra.mxu0 0.0
    %2194 = vmatprep.subr.mxu0 0.0
    %2195 = vmatpush1.msra.mxu0 0.0
    %2196 = vmatprep.subr.mxu0 0.0
    %2197 = vmatpush1.msra.mxu0 0.0
    %2198 = vmatprep.subr.mxu0 0.0
    %2199 = vmatpush1.msra.mxu0 0.0
    %2200 = vmatprep.subr.mxu0 0.0
    %2201 = vmatpush1.msra.mxu0 0.0
    %2202 = vmatprep.subr.mxu0 0.0
    %2203 = vmatpush1.msra.mxu0 0.0
    %2204 = vmatprep.mubr.f32.mxu0 0.0
    %2205 = vmatmul.mubr.f32.gmra.mrb[0].mxu0 %v1998
    %v2206 = vpop.f32.mrb[0].mxu0
    %v2207 = vadd.f32 %v120, %v2206
    %v2208 = vpop.f32.mrb[0].mxu0
    %2209 = vdwg.mxu0
    %2210 = vmatprep.subr.mxu0 0.0
    %2211 = vmatpush1.msra.mxu0 %v45
    %2212 = vmatprep.subr.mxu0 0.0
    %2213 = vmatpush1.msra.mxu0 %v46
    %2214 = vmatprep.subr.mxu0 0.0
    %2215 = vmatpush1.msra.mxu0 %v47
    %2216 = vmatprep.subr.mxu0 0.0
    %2217 = vmatpush1.msra.mxu0 %v48
    %2218 = vmatprep.subr.mxu0 0.0
    %2219 = vmatpush1.msra.mxu0 0.0
    %2220 = vmatprep.subr.mxu0 0.0
    %2221 = vmatpush1.msra.mxu0 0.0
    %2222 = vmatprep.subr.mxu0 0.0
    %2223 = vmatpush1.msra.mxu0 0.0
    %2224 = vmatprep.subr.mxu0 0.0
    %2225 = vmatpush1.msra.mxu0 0.0
    %2226 = vmatprep.subr.mxu0 0.0
    %2227 = vmatpush1.msra.mxu0 0.0
    %2228 = vmatprep.subr.mxu0 0.0
    %2229 = vmatpush1.msra.mxu0 0.0
    %2230 = vmatprep.subr.mxu0 0.0
    %2231 = vmatpush1.msra.mxu0 0.0
    %2232 = vmatprep.subr.mxu0 0.0
    %2233 = vmatpush1.msra.mxu0 0.0
    %2234 = vmatprep.subr.mxu0 0.0
    %2235 = vmatpush1.msra.mxu0 0.0
    %2236 = vmatprep.subr.mxu0 0.0
    %2237 = vmatpush1.msra.mxu0 0.0
    %2238 = vmatprep.subr.mxu0 0.0
    %2239 = vmatpush1.msra.mxu0 0.0
    %2240 = vmatprep.subr.mxu0 0.0
    %2241 = vmatpush1.msra.mxu0 0.0
    %2242 = vmatprep.subr.mxu0 0.0
    %2243 = vmatpush1.msra.mxu0 0.0
    %2244 = vmatprep.subr.mxu0 0.0
    %2245 = vmatpush1.msra.mxu0 0.0
    %2246 = vmatprep.subr.mxu0 0.0
    %2247 = vmatpush1.msra.mxu0 0.0
    %2248 = vmatprep.subr.mxu0 0.0
    %2249 = vmatpush1.msra.mxu0 0.0
    %2250 = vmatprep.subr.mxu0 0.0
    %2251 = vmatpush1.msra.mxu0 0.0
    %2252 = vmatprep.subr.mxu0 0.0
    %2253 = vmatpush1.msra.mxu0 0.0
    %2254 = vmatprep.subr.mxu0 0.0
    %2255 = vmatpush1.msra.mxu0 0.0
    %2256 = vmatprep.subr.mxu0 0.0
    %2257 = vmatpush1.msra.mxu0 0.0
    %2258 = vmatprep.subr.mxu0 0.0
    %2259 = vmatpush1.msra.mxu0 0.0
    %2260 = vmatprep.subr.mxu0 0.0
    %2261 = vmatpush1.msra.mxu0 0.0
    %2262 = vmatprep.subr.mxu0 0.0
    %2263 = vmatpush1.msra.mxu0 0.0
    %2264 = vmatprep.subr.mxu0 0.0
    %2265 = vmatpush1.msra.mxu0 0.0
    %2266 = vmatprep.subr.mxu0 0.0
    %2267 = vmatpush1.msra.mxu0 0.0
    %2268 = vmatprep.subr.mxu0 0.0
    %2269 = vmatpush1.msra.mxu0 0.0
    %2270 = vmatprep.subr.mxu0 0.0
    %2271 = vmatpush1.msra.mxu0 0.0
    %2272 = vmatprep.subr.mxu0 0.0
    %2273 = vmatpush1.msra.mxu0 0.0
    %2274 = vmatprep.mubr.f32.mxu0 0.0
    %2275 = vmatmul.mubr.f32.gmra.mrb[0].mxu0 %v1998
    %v2276 = vpop.f32.mrb[0].mxu0
    %v2277 = vadd.f32 %v124, %v2276
    %v2278 = vpop.f32.mrb[0].mxu0
    %2279 = vdwg.mxu0
    %v2281 = vsel %vm129, %v1994, 0
    %2283 = vmatprep.subr.mxu0 0.0
    %2284 = vmatpush1.msra.mxu0 %v50
    %2285 = vmatprep.subr.mxu0 0.0
    %2286 = vmatpush1.msra.mxu0 %v51
    %2287 = vmatprep.subr.mxu0 0.0
    %2288 = vmatpush1.msra.mxu0 %v52
    %2289 = vmatprep.subr.mxu0 0.0
    %2290 = vmatpush1.msra.mxu0 %v53
    %2291 = vmatprep.subr.mxu0 0.0
    %2292 = vmatpush1.msra.mxu0 0.0
    %2293 = vmatprep.subr.mxu0 0.0
    %2294 = vmatpush1.msra.mxu0 0.0
    %2295 = vmatprep.subr.mxu0 0.0
    %2296 = vmatpush1.msra.mxu0 0.0
    %2297 = vmatprep.subr.mxu0 0.0
    %2298 = vmatpush1.msra.mxu0 0.0
    %2299 = vmatprep.subr.mxu0 0.0
    %2300 = vmatpush1.msra.mxu0 0.0
    %2301 = vmatprep.subr.mxu0 0.0
    %2302 = vmatpush1.msra.mxu0 0.0
    %2303 = vmatprep.subr.mxu0 0.0
    %2304 = vmatpush1.msra.mxu0 0.0
    %2305 = vmatprep.subr.mxu0 0.0
    %2306 = vmatpush1.msra.mxu0 0.0
    %2307 = vmatprep.subr.mxu0 0.0
    %2308 = vmatpush1.msra.mxu0 0.0
    %2309 = vmatprep.subr.mxu0 0.0
    %2310 = vmatpush1.msra.mxu0 0.0
    %2311 = vmatprep.subr.mxu0 0.0
    %2312 = vmatpush1.msra.mxu0 0.0
    %2313 = vmatprep.subr.mxu0 0.0
    %2314 = vmatpush1.msra.mxu0 0.0
    %2315 = vmatprep.subr.mxu0 0.0
    %2316 = vmatpush1.msra.mxu0 0.0
    %2317 = vmatprep.subr.mxu0 0.0
    %2318 = vmatpush1.msra.mxu0 0.0
    %2319 = vmatprep.subr.mxu0 0.0
    %2320 = vmatpush1.msra.mxu0 0.0
    %2321 = vmatprep.subr.mxu0 0.0
    %2322 = vmatpush1.msra.mxu0 0.0
    %2323 = vmatprep.subr.mxu0 0.0
    %2324 = vmatpush1.msra.mxu0 0.0
    %2325 = vmatprep.subr.mxu0 0.0
    %2326 = vmatpush1.msra.mxu0 0.0
    %2327 = vmatprep.subr.mxu0 0.0
    %2328 = vmatpush1.msra.mxu0 0.0
    %2329 = vmatprep.subr.mxu0 0.0
    %2330 = vmatpush1.msra.mxu0 0.0
    %2331 = vmatprep.subr.mxu0 0.0
    %2332 = vmatpush1.msra.mxu0 0.0
    %2333 = vmatprep.subr.mxu0 0.0
    %2334 = vmatpush1.msra.mxu0 0.0
    %2335 = vmatprep.subr.mxu0 0.0
    %2336 = vmatpush1.msra.mxu0 0.0
    %2337 = vmatprep.subr.mxu0 0.0
    %2338 = vmatpush1.msra.mxu0 0.0
    %2339 = vmatprep.subr.mxu0 0.0
    %2340 = vmatpush1.msra.mxu0 0.0
    %2341 = vmatprep.subr.mxu0 0.0
    %2342 = vmatpush1.msra.mxu0 0.0
    %2343 = vmatprep.subr.mxu0 0.0
    %2344 = vmatpush1.msra.mxu0 0.0
    %2345 = vmatprep.subr.mxu0 0.0
    %2346 = vmatpush1.msra.mxu0 0.0
    %2347 = vmatprep.mubr.f32.mxu0 0.0
    %2348 = vmatmul.mubr.f32.gmra.mrb[0].mxu0 %v2281
    %v2349 = vpop.f32.mrb[0].mxu0
    %v2350 = vadd.f32 %v420, %v2349
    %v2351 = vpop.f32.mrb[0].mxu0
    %2352 = vdwg.mxu0
    %2353 = vmatprep.subr.mxu0 0.0
    %2354 = vmatpush1.msra.mxu0 %v54
    %2355 = vmatprep.subr.mxu0 0.0
    %2356 = vmatpush1.msra.mxu0 %v55
    %2357 = vmatprep.subr.mxu0 0.0
    %2358 = vmatpush1.msra.mxu0 %v56
    %2359 = vmatprep.subr.mxu0 0.0
    %2360 = vmatpush1.msra.mxu0 %v57
    %2361 = vmatprep.subr.mxu0 0.0
    %2362 = vmatpush1.msra.mxu0 0.0
    %2363 = vmatprep.subr.mxu0 0.0
    %2364 = vmatpush1.msra.mxu0 0.0
    %2365 = vmatprep.subr.mxu0 0.0
    %2366 = vmatpush1.msra.mxu0 0.0
    %2367 = vmatprep.subr.mxu0 0.0
    %2368 = vmatpush1.msra.mxu0 0.0
    %2369 = vmatprep.subr.mxu0 0.0
    %2370 = vmatpush1.msra.mxu0 0.0
    %2371 = vmatprep.subr.mxu0 0.0
    %2372 = vmatpush1.msra.mxu0 0.0
    %2373 = vmatprep.subr.mxu0 0.0
    %2374 = vmatpush1.msra.mxu0 0.0
    %2375 = vmatprep.subr.mxu0 0.0
    %2376 = vmatpush1.msra.mxu0 0.0
    %2377 = vmatprep.subr.mxu0 0.0
    %2378 = vmatpush1.msra.mxu0 0.0
    %2379 = vmatprep.subr.mxu0 0.0
    %2380 = vmatpush1.msra.mxu0 0.0
    %2381 = vmatprep.subr.mxu0 0.0
    %2382 = vmatpush1.msra.mxu0 0.0
    %2383 = vmatprep.subr.mxu0 0.0
    %2384 = vmatpush1.msra.mxu0 0.0
    %2385 = vmatprep.subr.mxu0 0.0
    %2386 = vmatpush1.msra.mxu0 0.0
    %2387 = vmatprep.subr.mxu0 0.0
    %2388 = vmatpush1.msra.mxu0 0.0
    %2389 = vmatprep.subr.mxu0 0.0
    %2390 = vmatpush1.msra.mxu0 0.0
    %2391 = vmatprep.subr.mxu0 0.0
    %2392 = vmatpush1.msra.mxu0 0.0
    %2393 = vmatprep.subr.mxu0 0.0
    %2394 = vmatpush1.msra.mxu0 0.0
    %2395 = vmatprep.subr.mxu0 0.0
    %2396 = vmatpush1.msra.mxu0 0.0
    %2397 = vmatprep.subr.mxu0 0.0
    %2398 = vmatpush1.msra.mxu0 0.0
    %2399 = vmatprep.subr.mxu0 0.0
    %2400 = vmatpush1.msra.mxu0 0.0
    %2401 = vmatprep.subr.mxu0 0.0
    %2402 = vmatpush1.msra.mxu0 0.0
    %2403 = vmatprep.subr.mxu0 0.0
    %2404 = vmatpush1.msra.mxu0 0.0
    %2405 = vmatprep.subr.mxu0 0.0
    %2406 = vmatpush1.msra.mxu0 0.0
    %2407 = vmatprep.subr.mxu0 0.0
    %2408 = vmatpush1.msra.mxu0 0.0
    %2409 = vmatprep.subr.mxu0 0.0
    %2410 = vmatpush1.msra.mxu0 0.0
    %2411 = vmatprep.subr.mxu0 0.0
    %2412 = vmatpush1.msra.mxu0 0.0
    %2413 = vmatprep.subr.mxu0 0.0
    %2414 = vmatpush1.msra.mxu0 0.0
    %2415 = vmatprep.subr.mxu0 0.0
    %2416 = vmatpush1.msra.mxu0 0.0
    %2417 = vmatprep.mubr.f32.mxu0 0.0
    %2418 = vmatmul.mubr.f32.gmra.mrb[0].mxu0 %v2281
    %v2419 = vpop.f32.mrb[0].mxu0
    %v2420 = vadd.f32 %v424, %v2419
    %v2421 = vpop.f32.mrb[0].mxu0
    %2422 = vdwg.mxu0
    %2423 = vmatprep.subr.mxu0 0.0
    %2424 = vmatpush1.msra.mxu0 %v58
    %2425 = vmatprep.subr.mxu0 0.0
    %2426 = vmatpush1.msra.mxu0 %v59
    %2427 = vmatprep.subr.mxu0 0.0
    %2428 = vmatpush1.msra.mxu0 %v60
    %2429 = vmatprep.subr.mxu0 0.0
    %2430 = vmatpush1.msra.mxu0 %v61
    %2431 = vmatprep.subr.mxu0 0.0
    %2432 = vmatpush1.msra.mxu0 0.0
    %2433 = vmatprep.subr.mxu0 0.0
    %2434 = vmatpush1.msra.mxu0 0.0
    %2435 = vmatprep.subr.mxu0 0.0
    %2436 = vmatpush1.msra.mxu0 0.0
    %2437 = vmatprep.subr.mxu0 0.0
    %2438 = vmatpush1.msra.mxu0 0.0
    %2439 = vmatprep.subr.mxu0 0.0
    %2440 = vmatpush1.msra.mxu0 0.0
    %2441 = vmatprep.subr.mxu0 0.0
    %2442 = vmatpush1.msra.mxu0 0.0
    %2443 = vmatprep.subr.mxu0 0.0
    %2444 = vmatpush1.msra.mxu0 0.0
    %2445 = vmatprep.subr.mxu0 0.0
    %2446 = vmatpush1.msra.mxu0 0.0
    %2447 = vmatprep.subr.mxu0 0.0
    %2448 = vmatpush1.msra.mxu0 0.0
    %2449 = vmatprep.subr.mxu0 0.0
    %2450 = vmatpush1.msra.mxu0 0.0
    %2451 = vmatprep.subr.mxu0 0.0
    %2452 = vmatpush1.msra.mxu0 0.0
    %2453 = vmatprep.subr.mxu0 0.0
    %2454 = vmatpush1.msra.mxu0 0.0
    %2455 = vmatprep.subr.mxu0 0.0
    %2456 = vmatpush1.msra.mxu0 0.0
    %2457 = vmatprep.subr.mxu0 0.0
    %2458 = vmatpush1.msra.mxu0 0.0
    %2459 = vmatprep.subr.mxu0 0.0
    %2460 = vmatpush1.msra.mxu0 0.0
    %2461 = vmatprep.subr.mxu0 0.0
    %2462 = vmatpush1.msra.mxu0 0.0
    %2463 = vmatprep.subr.mxu0 0.0
    %2464 = vmatpush1.msra.mxu0 0.0
    %2465 = vmatprep.subr.mxu0 0.0
    %2466 = vmatpush1.msra.mxu0 0.0
    %2467 = vmatprep.subr.mxu0 0.0
    %2468 = vmatpush1.msra.mxu0 0.0
    %2469 = vmatprep.subr.mxu0 0.0
    %2470 = vmatpush1.msra.mxu0 0.0
    %2471 = vmatprep.subr.mxu0 0.0
    %2472 = vmatpush1.msra.mxu0 0.0
    %2473 = vmatprep.subr.mxu0 0.0
    %2474 = vmatpush1.msra.mxu0 0.0
    %2475 = vmatprep.subr.mxu0 0.0
    %2476 = vmatpush1.msra.mxu0 0.0
    %2477 = vmatprep.subr.mxu0 0.0
    %2478 = vmatpush1.msra.mxu0 0.0
    %2479 = vmatprep.subr.mxu0 0.0
    %2480 = vmatpush1.msra.mxu0 0.0
    %2481 = vmatprep.subr.mxu0 0.0
    %2482 = vmatpush1.msra.mxu0 0.0
    %2483 = vmatprep.subr.mxu0 0.0
    %2484 = vmatpush1.msra.mxu0 0.0
    %2485 = vmatprep.subr.mxu0 0.0
    %2486 = vmatpush1.msra.mxu0 0.0
    %2487 = vmatprep.mubr.f32.mxu0 0.0
    %2488 = vmatmul.mubr.f32.gmra.mrb[0].mxu0 %v2281
    %v2489 = vpop.f32.mrb[0].mxu0
    %v2490 = vadd.f32 %v428, %v2489
    %v2491 = vpop.f32.mrb[0].mxu0
    %2492 = vdwg.mxu0
    %2493 = vmatprep.subr.mxu0 0.0
    %2494 = vmatpush1.msra.mxu0 %v62
    %2495 = vmatprep.subr.mxu0 0.0
    %2496 = vmatpush1.msra.mxu0 %v63
    %2497 = vmatprep.subr.mxu0 0.0
    %2498 = vmatpush1.msra.mxu0 %v64
    %2499 = vmatprep.subr.mxu0 0.0
    %2500 = vmatpush1.msra.mxu0 %v65
    %2501 = vmatprep.subr.mxu0 0.0
    %2502 = vmatpush1.msra.mxu0 0.0
    %2503 = vmatprep.subr.mxu0 0.0
    %2504 = vmatpush1.msra.mxu0 0.0
    %2505 = vmatprep.subr.mxu0 0.0
    %2506 = vmatpush1.msra.mxu0 0.0
    %2507 = vmatprep.subr.mxu0 0.0
    %2508 = vmatpush1.msra.mxu0 0.0
    %2509 = vmatprep.subr.mxu0 0.0
    %2510 = vmatpush1.msra.mxu0 0.0
    %2511 = vmatprep.subr.mxu0 0.0
    %2512 = vmatpush1.msra.mxu0 0.0
    %2513 = vmatprep.subr.mxu0 0.0
    %2514 = vmatpush1.msra.mxu0 0.0
    %2515 = vmatprep.subr.mxu0 0.0
    %2516 = vmatpush1.msra.mxu0 0.0
    %2517 = vmatprep.subr.mxu0 0.0
    %2518 = vmatpush1.msra.mxu0 0.0
    %2519 = vmatprep.subr.mxu0 0.0
    %2520 = vmatpush1.msra.mxu0 0.0
    %2521 = vmatprep.subr.mxu0 0.0
    %2522 = vmatpush1.msra.mxu0 0.0
    %2523 = vmatprep.subr.mxu0 0.0
    %2524 = vmatpush1.msra.mxu0 0.0
    %2525 = vmatprep.subr.mxu0 0.0
    %2526 = vmatpush1.msra.mxu0 0.0
    %2527 = vmatprep.subr.mxu0 0.0
    %2528 = vmatpush1.msra.mxu0 0.0
    %2529 = vmatprep.subr.mxu0 0.0
    %2530 = vmatpush1.msra.mxu0 0.0
    %2531 = vmatprep.subr.mxu0 0.0
    %2532 = vmatpush1.msra.mxu0 0.0
    %2533 = vmatprep.subr.mxu0 0.0
    %2534 = vmatpush1.msra.mxu0 0.0
    %2535 = vmatprep.subr.mxu0 0.0
    %2536 = vmatpush1.msra.mxu0 0.0
    %2537 = vmatprep.subr.mxu0 0.0
    %2538 = vmatpush1.msra.mxu0 0.0
    %2539 = vmatprep.subr.mxu0 0.0
    %2540 = vmatpush1.msra.mxu0 0.0
    %2541 = vmatprep.subr.mxu0 0.0
    %2542 = vmatpush1.msra.mxu0 0.0
    %2543 = vmatprep.subr.mxu0 0.0
    %2544 = vmatpush1.msra.mxu0 0.0
    %2545 = vmatprep.subr.mxu0 0.0
    %2546 = vmatpush1.msra.mxu0 0.0
    %2547 = vmatprep.subr.mxu0 0.0
    %2548 = vmatpush1.msra.mxu0 0.0
    %2549 = vmatprep.subr.mxu0 0.0
    %2550 = vmatpush1.msra.mxu0 0.0
    %2551 = vmatprep.subr.mxu0 0.0
    %2552 = vmatpush1.msra.mxu0 0.0
    %2553 = vmatprep.subr.mxu0 0.0
    %2554 = vmatpush1.msra.mxu0 0.0
    %2555 = vmatprep.subr.mxu0 0.0
    %2556 = vmatpush1.msra.mxu0 0.0
    %2557 = vmatprep.mubr.f32.mxu0 0.0
    %2558 = vmatmul.mubr.f32.gmra.mrb[0].mxu0 %v2281
    %v2559 = vpop.f32.mrb[0].mxu0
    %v2560 = vadd.f32 %v432, %v2559
    %v2561 = vpop.f32.mrb[0].mxu0
    %2562 = vdwg.mxu0
    %v2564 = vsel %vm129, %v1996, 0
    %2566 = vmatprep.subr.mxu0 0.0
    %2567 = vmatpush1.msra.mxu0 %v67
    %2568 = vmatprep.subr.mxu0 0.0
    %2569 = vmatpush1.msra.mxu0 %v68
    %2570 = vmatprep.subr.mxu0 0.0
    %2571 = vmatpush1.msra.mxu0 %v69
    %2572 = vmatprep.subr.mxu0 0.0
    %2573 = vmatpush1.msra.mxu0 %v70
    %2574 = vmatprep.subr.mxu0 0.0
    %2575 = vmatpush1.msra.mxu0 0.0
    %2576 = vmatprep.subr.mxu0 0.0
    %2577 = vmatpush1.msra.mxu0 0.0
    %2578 = vmatprep.subr.mxu0 0.0
    %2579 = vmatpush1.msra.mxu0 0.0
    %2580 = vmatprep.subr.mxu0 0.0
    %2581 = vmatpush1.msra.mxu0 0.0
    %2582 = vmatprep.subr.mxu0 0.0
    %2583 = vmatpush1.msra.mxu0 0.0
    %2584 = vmatprep.subr.mxu0 0.0
    %2585 = vmatpush1.msra.mxu0 0.0
    %2586 = vmatprep.subr.mxu0 0.0
    %2587 = vmatpush1.msra.mxu0 0.0
    %2588 = vmatprep.subr.mxu0 0.0
    %2589 = vmatpush1.msra.mxu0 0.0
    %2590 = vmatprep.subr.mxu0 0.0
    %2591 = vmatpush1.msra.mxu0 0.0
    %2592 = vmatprep.subr.mxu0 0.0
    %2593 = vmatpush1.msra.mxu0 0.0
    %2594 = vmatprep.subr.mxu0 0.0
    %2595 = vmatpush1.msra.mxu0 0.0
    %2596 = vmatprep.subr.mxu0 0.0
    %2597 = vmatpush1.msra.mxu0 0.0
    %2598 = vmatprep.subr.mxu0 0.0
    %2599 = vmatpush1.msra.mxu0 0.0
    %2600 = vmatprep.subr.mxu0 0.0
    %2601 = vmatpush1.msra.mxu0 0.0
    %2602 = vmatprep.subr.mxu0 0.0
    %2603 = vmatpush1.msra.mxu0 0.0
    %2604 = vmatprep.subr.mxu0 0.0
    %2605 = vmatpush1.msra.mxu0 0.0
    %2606 = vmatprep.subr.mxu0 0.0
    %2607 = vmatpush1.msra.mxu0 0.0
    %2608 = vmatprep.subr.mxu0 0.0
    %2609 = vmatpush1.msra.mxu0 0.0
    %2610 = vmatprep.subr.mxu0 0.0
    %2611 = vmatpush1.msra.mxu0 0.0
    %2612 = vmatprep.subr.mxu0 0.0
    %2613 = vmatpush1.msra.mxu0 0.0
    %2614 = vmatprep.subr.mxu0 0.0
    %2615 = vmatpush1.msra.mxu0 0.0
    %2616 = vmatprep.subr.mxu0 0.0
    %2617 = vmatpush1.msra.mxu0 0.0
    %2618 = vmatprep.subr.mxu0 0.0
    %2619 = vmatpush1.msra.mxu0 0.0
    %2620 = vmatprep.subr.mxu0 0.0
    %2621 = vmatpush1.msra.mxu0 0.0
    %2622 = vmatprep.subr.mxu0 0.0
    %2623 = vmatpush1.msra.mxu0 0.0
    %2624 = vmatprep.subr.mxu0 0.0
    %2625 = vmatpush1.msra.mxu0 0.0
    %2626 = vmatprep.subr.mxu0 0.0
    %2627 = vmatpush1.msra.mxu0 0.0
    %2628 = vmatprep.subr.mxu0 0.0
    %2629 = vmatpush1.msra.mxu0 0.0
    %2630 = vmatprep.mubr.f32.mxu0 0.0
    %2631 = vmatmul.mubr.f32.gmra.mrb[0].mxu0 %v2564
    %v2632 = vpop.f32.mrb[0].mxu0
    %v2633 = vadd.f32 %v727, %v2632
    %v2634 = vpop.f32.mrb[0].mxu0
    %2635 = vdwg.mxu0
    %2636 = vmatprep.subr.mxu0 0.0
    %2637 = vmatpush1.msra.mxu0 %v71
    %2638 = vmatprep.subr.mxu0 0.0
    %2639 = vmatpush1.msra.mxu0 %v72
    %2640 = vmatprep.subr.mxu0 0.0
    %2641 = vmatpush1.msra.mxu0 %v73
    %2642 = vmatprep.subr.mxu0 0.0
    %2643 = vmatpush1.msra.mxu0 %v74
    %2644 = vmatprep.subr.mxu0 0.0
    %2645 = vmatpush1.msra.mxu0 0.0
    %2646 = vmatprep.subr.mxu0 0.0
    %2647 = vmatpush1.msra.mxu0 0.0
    %2648 = vmatprep.subr.mxu0 0.0
    %2649 = vmatpush1.msra.mxu0 0.0
    %2650 = vmatprep.subr.mxu0 0.0
    %2651 = vmatpush1.msra.mxu0 0.0
    %2652 = vmatprep.subr.mxu0 0.0
    %2653 = vmatpush1.msra.mxu0 0.0
    %2654 = vmatprep.subr.mxu0 0.0
    %2655 = vmatpush1.msra.mxu0 0.0
    %2656 = vmatprep.subr.mxu0 0.0
    %2657 = vmatpush1.msra.mxu0 0.0
    %2658 = vmatprep.subr.mxu0 0.0
    %2659 = vmatpush1.msra.mxu0 0.0
    %2660 = vmatprep.subr.mxu0 0.0
    %2661 = vmatpush1.msra.mxu0 0.0
    %2662 = vmatprep.subr.mxu0 0.0
    %2663 = vmatpush1.msra.mxu0 0.0
    %2664 = vmatprep.subr.mxu0 0.0
    %2665 = vmatpush1.msra.mxu0 0.0
    %2666 = vmatprep.subr.mxu0 0.0
    %2667 = vmatpush1.msra.mxu0 0.0
    %2668 = vmatprep.subr.mxu0 0.0
    %2669 = vmatpush1.msra.mxu0 0.0
    %2670 = vmatprep.subr.mxu0 0.0
    %2671 = vmatpush1.msra.mxu0 0.0
    %2672 = vmatprep.subr.mxu0 0.0
    %2673 = vmatpush1.msra.mxu0 0.0
    %2674 = vmatprep.subr.mxu0 0.0
    %2675 = vmatpush1.msra.mxu0 0.0
    %2676 = vmatprep.subr.mxu0 0.0
    %2677 = vmatpush1.msra.mxu0 0.0
    %2678 = vmatprep.subr.mxu0 0.0
    %2679 = vmatpush1.msra.mxu0 0.0
    %2680 = vmatprep.subr.mxu0 0.0
    %2681 = vmatpush1.msra.mxu0 0.0
    %2682 = vmatprep.subr.mxu0 0.0
    %2683 = vmatpush1.msra.mxu0 0.0
    %2684 = vmatprep.subr.mxu0 0.0
    %2685 = vmatpush1.msra.mxu0 0.0
    %2686 = vmatprep.subr.mxu0 0.0
    %2687 = vmatpush1.msra.mxu0 0.0
    %2688 = vmatprep.subr.mxu0 0.0
    %2689 = vmatpush1.msra.mxu0 0.0
    %2690 = vmatprep.subr.mxu0 0.0
    %2691 = vmatpush1.msra.mxu0 0.0
    %2692 = vmatprep.subr.mxu0 0.0
    %2693 = vmatpush1.msra.mxu0 0.0
    %2694 = vmatprep.subr.mxu0 0.0
    %2695 = vmatpush1.msra.mxu0 0.0
    %2696 = vmatprep.subr.mxu0 0.0
    %2697 = vmatpush1.msra.mxu0 0.0
    %2698 = vmatprep.subr.mxu0 0.0
    %2699 = vmatpush1.msra.mxu0 0.0
    %2700 = vmatprep.mubr.f32.mxu0 0.0
    %2701 = vmatmul.mubr.f32.gmra.mrb[0].mxu0 %v2564
    %v2702 = vpop.f32.mrb[0].mxu0
    %v2703 = vadd.f32 %v731, %v2702
    %v2704 = vpop.f32.mrb[0].mxu0
    %2705 = vdwg.mxu0
    %2706 = vmatprep.subr.mxu0 0.0
    %2707 = vmatpush1.msra.mxu0 %v75
    %2708 = vmatprep.subr.mxu0 0.0
    %2709 = vmatpush1.msra.mxu0 %v76
    %2710 = vmatprep.subr.mxu0 0.0
    %2711 = vmatpush1.msra.mxu0 %v77
    %2712 = vmatprep.subr.mxu0 0.0
    %2713 = vmatpush1.msra.mxu0 %v78
    %2714 = vmatprep.subr.mxu0 0.0
    %2715 = vmatpush1.msra.mxu0 0.0
    %2716 = vmatprep.subr.mxu0 0.0
    %2717 = vmatpush1.msra.mxu0 0.0
    %2718 = vmatprep.subr.mxu0 0.0
    %2719 = vmatpush1.msra.mxu0 0.0
    %2720 = vmatprep.subr.mxu0 0.0
    %2721 = vmatpush1.msra.mxu0 0.0
    %2722 = vmatprep.subr.mxu0 0.0
    %2723 = vmatpush1.msra.mxu0 0.0
    %2724 = vmatprep.subr.mxu0 0.0
    %2725 = vmatpush1.msra.mxu0 0.0
    %2726 = vmatprep.subr.mxu0 0.0
    %2727 = vmatpush1.msra.mxu0 0.0
    %2728 = vmatprep.subr.mxu0 0.0
    %2729 = vmatpush1.msra.mxu0 0.0
    %2730 = vmatprep.subr.mxu0 0.0
    %2731 = vmatpush1.msra.mxu0 0.0
    %2732 = vmatprep.subr.mxu0 0.0
    %2733 = vmatpush1.msra.mxu0 0.0
    %2734 = vmatprep.subr.mxu0 0.0
    %2735 = vmatpush1.msra.mxu0 0.0
    %2736 = vmatprep.subr.mxu0 0.0
    %2737 = vmatpush1.msra.mxu0 0.0
    %2738 = vmatprep.subr.mxu0 0.0
    %2739 = vmatpush1.msra.mxu0 0.0
    %2740 = vmatprep.subr.mxu0 0.0
    %2741 = vmatpush1.msra.mxu0 0.0
    %2742 = vmatprep.subr.mxu0 0.0
    %2743 = vmatpush1.msra.mxu0 0.0
    %2744 = vmatprep.subr.mxu0 0.0
    %2745 = vmatpush1.msra.mxu0 0.0
    %2746 = vmatprep.subr.mxu0 0.0
    %2747 = vmatpush1.msra.mxu0 0.0
    %2748 = vmatprep.subr.mxu0 0.0
    %2749 = vmatpush1.msra.mxu0 0.0
    %2750 = vmatprep.subr.mxu0 0.0
    %2751 = vmatpush1.msra.mxu0 0.0
    %2752 = vmatprep.subr.mxu0 0.0
    %2753 = vmatpush1.msra.mxu0 0.0
    %2754 = vmatprep.subr.mxu0 0.0
    %2755 = vmatpush1.msra.mxu0 0.0
    %2756 = vmatprep.subr.mxu0 0.0
    %2757 = vmatpush1.msra.mxu0 0.0
    %2758 = vmatprep.subr.mxu0 0.0
    %2759 = vmatpush1.msra.mxu0 0.0
    %2760 = vmatprep.subr.mxu0 0.0
    %2761 = vmatpush1.msra.mxu0 0.0
    %2762 = vmatprep.subr.mxu0 0.0
    %2763 = vmatpush1.msra.mxu0 0.0
    %2764 = vmatprep.subr.mxu0 0.0
    %2765 = vmatpush1.msra.mxu0 0.0
    %2766 = vmatprep.subr.mxu0 0.0
    %2767 = vmatpush1.msra.mxu0 0.0
    %2768 = vmatprep.subr.mxu0 0.0
    %2769 = vmatpush1.msra.mxu0 0.0
    %2770 = vmatprep.mubr.f32.mxu0 0.0
    %2771 = vmatmul.mubr.f32.gmra.mrb[0].mxu0 %v2564
    %v2772 = vpop.f32.mrb[0].mxu0
    %v2773 = vadd.f32 %v735, %v2772
    %v2774 = vpop.f32.mrb[0].mxu0
    %2775 = vdwg.mxu0
    %2776 = vmatprep.subr.mxu0 0.0
    %2777 = vmatpush1.msra.mxu0 %v79
    %2778 = vmatprep.subr.mxu0 0.0
    %2779 = vmatpush1.msra.mxu0 %v80
    %2780 = vmatprep.subr.mxu0 0.0
    %2781 = vmatpush1.msra.mxu0 %v81
    %2782 = vmatprep.subr.mxu0 0.0
    %2783 = vmatpush1.msra.mxu0 %v82
    %2784 = vmatprep.subr.mxu0 0.0
    %2785 = vmatpush1.msra.mxu0 0.0
    %2786 = vmatprep.subr.mxu0 0.0
    %2787 = vmatpush1.msra.mxu0 0.0
    %2788 = vmatprep.subr.mxu0 0.0
    %2789 = vmatpush1.msra.mxu0 0.0
    %2790 = vmatprep.subr.mxu0 0.0
    %2791 = vmatpush1.msra.mxu0 0.0
    %2792 = vmatprep.subr.mxu0 0.0
    %2793 = vmatpush1.msra.mxu0 0.0
    %2794 = vmatprep.subr.mxu0 0.0
    %2795 = vmatpush1.msra.mxu0 0.0
    %2796 = vmatprep.subr.mxu0 0.0
    %2797 = vmatpush1.msra.mxu0 0.0
    %2798 = vmatprep.subr.mxu0 0.0
    %2799 = vmatpush1.msra.mxu0 0.0
    %2800 = vmatprep.subr.mxu0 0.0
    %2801 = vmatpush1.msra.mxu0 0.0
    %2802 = vmatprep.subr.mxu0 0.0
    %2803 = vmatpush1.msra.mxu0 0.0
    %2804 = vmatprep.subr.mxu0 0.0
    %2805 = vmatpush1.msra.mxu0 0.0
    %2806 = vmatprep.subr.mxu0 0.0
    %2807 = vmatpush1.msra.mxu0 0.0
    %2808 = vmatprep.subr.mxu0 0.0
    %2809 = vmatpush1.msra.mxu0 0.0
    %2810 = vmatprep.subr.mxu0 0.0
    %2811 = vmatpush1.msra.mxu0 0.0
    %2812 = vmatprep.subr.mxu0 0.0
    %2813 = vmatpush1.msra.mxu0 0.0
    %2814 = vmatprep.subr.mxu0 0.0
    %2815 = vmatpush1.msra.mxu0 0.0
    %2816 = vmatprep.subr.mxu0 0.0
    %2817 = vmatpush1.msra.mxu0 0.0
    %2818 = vmatprep.subr.mxu0 0.0
    %2819 = vmatpush1.msra.mxu0 0.0
    %2820 = vmatprep.subr.mxu0 0.0
    %2821 = vmatpush1.msra.mxu0 0.0
    %2822 = vmatprep.subr.mxu0 0.0
    %2823 = vmatpush1.msra.mxu0 0.0
    %2824 = vmatprep.subr.mxu0 0.0
    %2825 = vmatpush1.msra.mxu0 0.0
    %2826 = vmatprep.subr.mxu0 0.0
    %2827 = vmatpush1.msra.mxu0 0.0
    %2828 = vmatprep.subr.mxu0 0.0
    %2829 = vmatpush1.msra.mxu0 0.0
    %2830 = vmatprep.subr.mxu0 0.0
    %2831 = vmatpush1.msra.mxu0 0.0
    %2832 = vmatprep.subr.mxu0 0.0
    %2833 = vmatpush1.msra.mxu0 0.0
    %2834 = vmatprep.subr.mxu0 0.0
    %2835 = vmatpush1.msra.mxu0 0.0
    %2836 = vmatprep.subr.mxu0 0.0
    %2837 = vmatpush1.msra.mxu0 0.0
    %2838 = vmatprep.subr.mxu0 0.0
    %2839 = vmatpush1.msra.mxu0 0.0
    %2840 = vmatprep.mubr.f32.mxu0 0.0
    %2841 = vmatmul.mubr.f32.gmra.mrb[0].mxu0 %v2564
    %v2842 = vpop.f32.mrb[0].mxu0
    %v2843 = vadd.f32 %v739, %v2842
    %v2844 = vpop.f32.mrb[0].mxu0
    %2845 = vdwg.mxu0
    %v2847 = vsel %vm1027, %v2067, 0
    %v2850 = vsel %vm1027, %v2350, 0
    %2852 = vmatprep.subr.mxu0 0.0
    %2853 = vmatpush1.xpose.msra.mxu0 %v2850
    %2854 = vmatprep.subr.mxu0 0.0
    %2855 = vmatpush1.xpose.msra.mxu0 0.0
    %2856 = vmatprep.subr.mxu0 0.0
    %2857 = vmatpush1.xpose.msra.mxu0 0.0
    %2858 = vmatprep.subr.mxu0 0.0
    %2859 = vmatpush1.xpose.msra.mxu0 0.0
    %2860 = vmatprep.subr.mxu0 0.0
    %2861 = vmatpush1.xpose.msra.mxu0 0.0
    %2862 = vmatprep.subr.mxu0 0.0
    %2863 = vmatpush1.xpose.msra.mxu0 0.0
    %2864 = vmatprep.subr.mxu0 0.0
    %2865 = vmatpush1.xpose.msra.mxu0 0.0
    %2866 = vmatprep.subr.mxu0 0.0
    %2867 = vmatpush1.xpose.msra.mxu0 0.0
    %2868 = vmatprep.subr.mxu0 0.0
    %2869 = vmatpush1.xpose.msra.mxu0 0.0
    %2870 = vmatprep.subr.mxu0 0.0
    %2871 = vmatpush1.xpose.msra.mxu0 0.0
    %2872 = vmatprep.subr.mxu0 0.0
    %2873 = vmatpush1.xpose.msra.mxu0 0.0
    %2874 = vmatprep.subr.mxu0 0.0
    %2875 = vmatpush1.xpose.msra.mxu0 0.0
    %2876 = vmatprep.subr.mxu0 0.0
    %2877 = vmatpush1.xpose.msra.mxu0 0.0
    %2878 = vmatprep.subr.mxu0 0.0
    %2879 = vmatpush1.xpose.msra.mxu0 0.0
    %2880 = vmatprep.subr.mxu0 0.0
    %2881 = vmatpush1.xpose.msra.mxu0 0.0
    %2882 = vmatprep.subr.mxu0 0.0
    %2883 = vmatpush1.xpose.msra.mxu0 0.0
    %2884 = vmatprep.subr.mxu0 0.0
    %2885 = vmatpush1.xpose.msra.mxu0 0.0
    %2886 = vmatprep.subr.mxu0 0.0
    %2887 = vmatpush1.xpose.msra.mxu0 0.0
    %2888 = vmatprep.subr.mxu0 0.0
    %2889 = vmatpush1.xpose.msra.mxu0 0.0
    %2890 = vmatprep.subr.mxu0 0.0
    %2891 = vmatpush1.xpose.msra.mxu0 0.0
    %2892 = vmatprep.subr.mxu0 0.0
    %2893 = vmatpush1.xpose.msra.mxu0 0.0
    %2894 = vmatprep.subr.mxu0 0.0
    %2895 = vmatpush1.xpose.msra.mxu0 0.0
    %2896 = vmatprep.subr.mxu0 0.0
    %2897 = vmatpush1.xpose.msra.mxu0 0.0
    %2898 = vmatprep.subr.mxu0 0.0
    %2899 = vmatpush1.xpose.msra.mxu0 0.0
    %2900 = vmatprep.subr.mxu0 0.0
    %2901 = vmatpush1.xpose.msra.mxu0 0.0
    %2902 = vmatprep.subr.mxu0 0.0
    %2903 = vmatpush1.xpose.msra.mxu0 0.0
    %2904 = vmatprep.subr.mxu0 0.0
    %2905 = vmatpush1.xpose.msra.mxu0 0.0
    %2906 = vmatprep.subr.mxu0 0.0
    %2907 = vmatpush1.xpose.msra.mxu0 0.0
    %2908 = vmatprep.subr.mxu0 0.0
    %2909 = vmatpush1.xpose.msra.mxu0 0.0
    %2910 = vmatprep.subr.mxu0 0.0
    %2911 = vmatpush1.xpose.msra.mxu0 0.0
    %2912 = vmatprep.subr.mxu0 0.0
    %2913 = vmatpush1.xpose.msra.mxu0 0.0
    %2914 = vmatprep.subr.mxu0 0.0
    %2915 = vmatpush1.xpose.msra.mxu0 0.0
    %2916 = vmatprep.mubr.f32.mxu0 0.0
    %2917 = vmatmul.mubr.f32.gmra.mrb[0].mxu0 %v2847
    %v2918 = vpop.f32.mrb[0].mxu0
    %v2919 = vadd.f32 0.0, %v2918
    %v2920 = vpop.f32.mrb[0].mxu0
    %2921 = vdwg.mxu0
    %v2923 = vsel %vm1027, %v2137, 0
    %v2926 = vsel %vm1027, %v2420, 0
    %2928 = vmatprep.subr.mxu0 0.0
    %2929 = vmatpush1.xpose.msra.mxu0 %v2926
    %2930 = vmatprep.subr.mxu0 0.0
    %2931 = vmatpush1.xpose.msra.mxu0 0.0
    %2932 = vmatprep.subr.mxu0 0.0
    %2933 = vmatpush1.xpose.msra.mxu0 0.0
    %2934 = vmatprep.subr.mxu0 0.0
    %2935 = vmatpush1.xpose.msra.mxu0 0.0
    %2936 = vmatprep.subr.mxu0 0.0
    %2937 = vmatpush1.xpose.msra.mxu0 0.0
    %2938 = vmatprep.subr.mxu0 0.0
    %2939 = vmatpush1.xpose.msra.mxu0 0.0
    %2940 = vmatprep.subr.mxu0 0.0
    %2941 = vmatpush1.xpose.msra.mxu0 0.0
    %2942 = vmatprep.subr.mxu0 0.0
    %2943 = vmatpush1.xpose.msra.mxu0 0.0
    %2944 = vmatprep.subr.mxu0 0.0
    %2945 = vmatpush1.xpose.msra.mxu0 0.0
    %2946 = vmatprep.subr.mxu0 0.0
    %2947 = vmatpush1.xpose.msra.mxu0 0.0
    %2948 = vmatprep.subr.mxu0 0.0
    %2949 = vmatpush1.xpose.msra.mxu0 0.0
    %2950 = vmatprep.subr.mxu0 0.0
    %2951 = vmatpush1.xpose.msra.mxu0 0.0
    %2952 = vmatprep.subr.mxu0 0.0
    %2953 = vmatpush1.xpose.msra.mxu0 0.0
    %2954 = vmatprep.subr.mxu0 0.0
    %2955 = vmatpush1.xpose.msra.mxu0 0.0
    %2956 = vmatprep.subr.mxu0 0.0
    %2957 = vmatpush1.xpose.msra.mxu0 0.0
    %2958 = vmatprep.subr.mxu0 0.0
    %2959 = vmatpush1.xpose.msra.mxu0 0.0
    %2960 = vmatprep.subr.mxu0 0.0
    %2961 = vmatpush1.xpose.msra.mxu0 0.0
    %2962 = vmatprep.subr.mxu0 0.0
    %2963 = vmatpush1.xpose.msra.mxu0 0.0
    %2964 = vmatprep.subr.mxu0 0.0
    %2965 = vmatpush1.xpose.msra.mxu0 0.0
    %2966 = vmatprep.subr.mxu0 0.0
    %2967 = vmatpush1.xpose.msra.mxu0 0.0
    %2968 = vmatprep.subr.mxu0 0.0
    %2969 = vmatpush1.xpose.msra.mxu0 0.0
    %2970 = vmatprep.subr.mxu0 0.0
    %2971 = vmatpush1.xpose.msra.mxu0 0.0
    %2972 = vmatprep.subr.mxu0 0.0
    %2973 = vmatpush1.xpose.msra.mxu0 0.0
    %2974 = vmatprep.subr.mxu0 0.0
    %2975 = vmatpush1.xpose.msra.mxu0 0.0
    %2976 = vmatprep.subr.mxu0 0.0
    %2977 = vmatpush1.xpose.msra.mxu0 0.0
    %2978 = vmatprep.subr.mxu0 0.0
    %2979 = vmatpush1.xpose.msra.mxu0 0.0
    %2980 = vmatprep.subr.mxu0 0.0
    %2981 = vmatpush1.xpose.msra.mxu0 0.0
    %2982 = vmatprep.subr.mxu0 0.0
    %2983 = vmatpush1.xpose.msra.mxu0 0.0
    %2984 = vmatprep.subr.mxu0 0.0
    %2985 = vmatpush1.xpose.msra.mxu0 0.0
    %2986 = vmatprep.subr.mxu0 0.0
    %2987 = vmatpush1.xpose.msra.mxu0 0.0
    %2988 = vmatprep.subr.mxu0 0.0
    %2989 = vmatpush1.xpose.msra.mxu0 0.0
    %2990 = vmatprep.subr.mxu0 0.0
    %2991 = vmatpush1.xpose.msra.mxu0 0.0
    %2992 = vmatprep.mubr.f32.mxu0 0.0
    %2993 = vmatmul.mubr.f32.gmra.mrb[0].mxu0 %v2923
    %v2994 = vpop.f32.mrb[0].mxu0
    %v2995 = vadd.f32 0.0, %v2994
    %v2996 = vpop.f32.mrb[0].mxu0
    %2997 = vdwg.mxu0
    %v2999 = vsel %vm1027, %v2207, 0
    %v3002 = vsel %vm1027, %v2490, 0
    %3004 = vmatprep.subr.mxu0 0.0
    %3005 = vmatpush1.xpose.msra.mxu0 %v3002
    %3006 = vmatprep.subr.mxu0 0.0
    %3007 = vmatpush1.xpose.msra.mxu0 0.0
    %3008 = vmatprep.subr.mxu0 0.0
    %3009 = vmatpush1.xpose.msra.mxu0 0.0
    %3010 = vmatprep.subr.mxu0 0.0
    %3011 = vmatpush1.xpose.msra.mxu0 0.0
    %3012 = vmatprep.subr.mxu0 0.0
    %3013 = vmatpush1.xpose.msra.mxu0 0.0
    %3014 = vmatprep.subr.mxu0 0.0
    %3015 = vmatpush1.xpose.msra.mxu0 0.0
    %3016 = vmatprep.subr.mxu0 0.0
    %3017 = vmatpush1.xpose.msra.mxu0 0.0
    %3018 = vmatprep.subr.mxu0 0.0
    %3019 = vmatpush1.xpose.msra.mxu0 0.0
    %3020 = vmatprep.subr.mxu0 0.0
    %3021 = vmatpush1.xpose.msra.mxu0 0.0
    %3022 = vmatprep.subr.mxu0 0.0
    %3023 = vmatpush1.xpose.msra.mxu0 0.0
    %3024 = vmatprep.subr.mxu0 0.0
    %3025 = vmatpush1.xpose.msra.mxu0 0.0
    %3026 = vmatprep.subr.mxu0 0.0
    %3027 = vmatpush1.xpose.msra.mxu0 0.0
    %3028 = vmatprep.subr.mxu0 0.0
    %3029 = vmatpush1.xpose.msra.mxu0 0.0
    %3030 = vmatprep.subr.mxu0 0.0
    %3031 = vmatpush1.xpose.msra.mxu0 0.0
    %3032 = vmatprep.subr.mxu0 0.0
    %3033 = vmatpush1.xpose.msra.mxu0 0.0
    %3034 = vmatprep.subr.mxu0 0.0
    %3035 = vmatpush1.xpose.msra.mxu0 0.0
    %3036 = vmatprep.subr.mxu0 0.0
    %3037 = vmatpush1.xpose.msra.mxu0 0.0
    %3038 = vmatprep.subr.mxu0 0.0
    %3039 = vmatpush1.xpose.msra.mxu0 0.0
    %3040 = vmatprep.subr.mxu0 0.0
    %3041 = vmatpush1.xpose.msra.mxu0 0.0
    %3042 = vmatprep.subr.mxu0 0.0
    %3043 = vmatpush1.xpose.msra.mxu0 0.0
    %3044 = vmatprep.subr.mxu0 0.0
    %3045 = vmatpush1.xpose.msra.mxu0 0.0
    %3046 = vmatprep.subr.mxu0 0.0
    %3047 = vmatpush1.xpose.msra.mxu0 0.0
    %3048 = vmatprep.subr.mxu0 0.0
    %3049 = vmatpush1.xpose.msra.mxu0 0.0
    %3050 = vmatprep.subr.mxu0 0.0
    %3051 = vmatpush1.xpose.msra.mxu0 0.0
    %3052 = vmatprep.subr.mxu0 0.0
    %3053 = vmatpush1.xpose.msra.mxu0 0.0
    %3054 = vmatprep.subr.mxu0 0.0
    %3055 = vmatpush1.xpose.msra.mxu0 0.0
    %3056 = vmatprep.subr.mxu0 0.0
    %3057 = vmatpush1.xpose.msra.mxu0 0.0
    %3058 = vmatprep.subr.mxu0 0.0
    %3059 = vmatpush1.xpose.msra.mxu0 0.0
    %3060 = vmatprep.subr.mxu0 0.0
    %3061 = vmatpush1.xpose.msra.mxu0 0.0
    %3062 = vmatprep.subr.mxu0 0.0
    %3063 = vmatpush1.xpose.msra.mxu0 0.0
    %3064 = vmatprep.subr.mxu0 0.0
    %3065 = vmatpush1.xpose.msra.mxu0 0.0
    %3066 = vmatprep.subr.mxu0 0.0
    %3067 = vmatpush1.xpose.msra.mxu0 0.0
    %3068 = vmatprep.mubr.f32.mxu0 0.0
    %3069 = vmatmul.mubr.f32.gmra.mrb[0].mxu0 %v2999
    %v3070 = vpop.f32.mrb[0].mxu0
    %v3071 = vadd.f32 0.0, %v3070
    %v3072 = vpop.f32.mrb[0].mxu0
    %3073 = vdwg.mxu0
    %v3075 = vsel %vm1027, %v2277, 0
    %v3078 = vsel %vm1027, %v2560, 0
    %3080 = vmatprep.subr.mxu0 0.0
    %3081 = vmatpush1.xpose.msra.mxu0 %v3078
    %3082 = vmatprep.subr.mxu0 0.0
    %3083 = vmatpush1.xpose.msra.mxu0 0.0
    %3084 = vmatprep.subr.mxu0 0.0
    %3085 = vmatpush1.xpose.msra.mxu0 0.0
    %3086 = vmatprep.subr.mxu0 0.0
    %3087 = vmatpush1.xpose.msra.mxu0 0.0
    %3088 = vmatprep.subr.mxu0 0.0
    %3089 = vmatpush1.xpose.msra.mxu0 0.0
    %3090 = vmatprep.subr.mxu0 0.0
    %3091 = vmatpush1.xpose.msra.mxu0 0.0
    %3092 = vmatprep.subr.mxu0 0.0
    %3093 = vmatpush1.xpose.msra.mxu0 0.0
    %3094 = vmatprep.subr.mxu0 0.0
    %3095 = vmatpush1.xpose.msra.mxu0 0.0
    %3096 = vmatprep.subr.mxu0 0.0
    %3097 = vmatpush1.xpose.msra.mxu0 0.0
    %3098 = vmatprep.subr.mxu0 0.0
    %3099 = vmatpush1.xpose.msra.mxu0 0.0
    %3100 = vmatprep.subr.mxu0 0.0
    %3101 = vmatpush1.xpose.msra.mxu0 0.0
    %3102 = vmatprep.subr.mxu0 0.0
    %3103 = vmatpush1.xpose.msra.mxu0 0.0
    %3104 = vmatprep.subr.mxu0 0.0
    %3105 = vmatpush1.xpose.msra.mxu0 0.0
    %3106 = vmatprep.subr.mxu0 0.0
    %3107 = vmatpush1.xpose.msra.mxu0 0.0
    %3108 = vmatprep.subr.mxu0 0.0
    %3109 = vmatpush1.xpose.msra.mxu0 0.0
    %3110 = vmatprep.subr.mxu0 0.0
    %3111 = vmatpush1.xpose.msra.mxu0 0.0
    %3112 = vmatprep.subr.mxu0 0.0
    %3113 = vmatpush1.xpose.msra.mxu0 0.0
    %3114 = vmatprep.subr.mxu0 0.0
    %3115 = vmatpush1.xpose.msra.mxu0 0.0
    %3116 = vmatprep.subr.mxu0 0.0
    %3117 = vmatpush1.xpose.msra.mxu0 0.0
    %3118 = vmatprep.subr.mxu0 0.0
    %3119 = vmatpush1.xpose.msra.mxu0 0.0
    %3120 = vmatprep.subr.mxu0 0.0
    %3121 = vmatpush1.xpose.msra.mxu0 0.0
    %3122 = vmatprep.subr.mxu0 0.0
    %3123 = vmatpush1.xpose.msra.mxu0 0.0
    %3124 = vmatprep.subr.mxu0 0.0
    %3125 = vmatpush1.xpose.msra.mxu0 0.0
    %3126 = vmatprep.subr.mxu0 0.0
    %3127 = vmatpush1.xpose.msra.mxu0 0.0
    %3128 = vmatprep.subr.mxu0 0.0
    %3129 = vmatpush1.xpose.msra.mxu0 0.0
    %3130 = vmatprep.subr.mxu0 0.0
    %3131 = vmatpush1.xpose.msra.mxu0 0.0
    %3132 = vmatprep.subr.mxu0 0.0
    %3133 = vmatpush1.xpose.msra.mxu0 0.0
    %3134 = vmatprep.subr.mxu0 0.0
    %3135 = vmatpush1.xpose.msra.mxu0 0.0
    %3136 = vmatprep.subr.mxu0 0.0
    %3137 = vmatpush1.xpose.msra.mxu0 0.0
    %3138 = vmatprep.subr.mxu0 0.0
    %3139 = vmatpush1.xpose.msra.mxu0 0.0
    %3140 = vmatprep.subr.mxu0 0.0
    %3141 = vmatpush1.xpose.msra.mxu0 0.0
    %3142 = vmatprep.subr.mxu0 0.0
    %3143 = vmatpush1.xpose.msra.mxu0 0.0
    %3144 = vmatprep.mubr.f32.mxu0 0.0
    %3145 = vmatmul.mubr.f32.gmra.mrb[0].mxu0 %v3075
    %v3146 = vpop.f32.mrb[0].mxu0
    %v3147 = vadd.f32 0.0, %v3146
    %v3148 = vpop.f32.mrb[0].mxu0
    %3149 = vdwg.mxu0
    %s3150 = scalar_lea.vmem %s7, 1
    %v3151 = vld [vmem:[%s3150] sm:$0x1]
    %vm3152 = vcmp.eq.f32.partialorder %v3151, 0.0
    %v3153 = vsel %vm3152, 1, 0
    %v3154 = vlaneseq
    %v3155 = vshrl.u32 %v3154, 7
    %v3156 = vsub.s32 0, %v3155
    %v3157 = vrot.slane %v3153, %v3156
    %vm3158 = vcmp.eq.s32.totalorder %v3157, 1
    %v3159 = vsel %vm3158, -1e+09, %v2919
    %v3160 = vsel %vm3158, -1e+09, %v2995
    %v3161 = vsel %vm3158, -1e+09, %v3071
    %v3162 = vsel %vm3158, -1e+09, %v3147
    %v3163 = vsel %vm1027, %v3159, -inf
    %3164 = vmax.xlane.f32.xlu0 %v3163
    %v3165 = vpop.xlane.xlu0 %3164
    %v3166 = vsel %vm1027, %v3160, -inf
    %3167 = vmax.xlane.f32.xlu0 %v3166
    %v3168 = vpop.xlane.xlu0 %3167
    %v3169 = vsel %vm1027, %v3161, -inf
    %3170 = vmax.xlane.f32.xlu0 %v3169
    %v3171 = vpop.xlane.xlu0 %3170
    %v3172 = vsel %vm1027, %v3162, -inf
    %3173 = vmax.xlane.f32.xlu0 %v3172
    %v3174 = vpop.xlane.xlu0 %3173
    %v3175 = vsub.f32 %v3159, %v3165
    %v3176 = vsub.f32 %v3160, %v3168
    %v3177 = vsub.f32 %v3161, %v3171
    %v3178 = vsub.f32 %v3162, %v3174
    %v3179 = vmul.f32 %v3175, 1.442695
    %v3180 = vpow.pop %v3179
    %v3181 = vmul.f32 %v3176, 1.442695
    %v3182 = vpow.pop %v3181
    %v3183 = vmul.f32 %v3177, 1.442695
    %v3184 = vpow.pop %v3183
    %v3185 = vmul.f32 %v3178, 1.442695
    %v3186 = vpow.pop %v3185
    %v3187 = vsel %vm1027, %v3180, 0.0
    %3188 = vadd.xlane.f32.xlu0 %v3187
    %v3189 = vpop.xlane.xlu0 %3188
    %v3190 = vsel %vm1027, %v3182, 0.0
    %3191 = vadd.xlane.f32.xlu0 %v3190
    %v3192 = vpop.xlane.xlu0 %3191
    %v3193 = vsel %vm1027, %v3184, 0.0
    %3194 = vadd.xlane.f32.xlu0 %v3193
    %v3195 = vpop.xlane.xlu0 %3194
    %v3196 = vsel %vm1027, %v3186, 0.0
    %3197 = vadd.xlane.f32.xlu0 %v3196
    %v3198 = vpop.xlane.xlu0 %3197
    %v3199 = vrcp.pop %v3189
    %v3200 = vmul.f32 %v3180, %v3199
    %v3201 = vrcp.pop %v3192
    %v3202 = vmul.f32 %v3182, %v3201
    %v3203 = vrcp.pop %v3195
    %v3204 = vmul.f32 %v3184, %v3203
    %v3205 = vrcp.pop %v3198
    %v3206 = vmul.f32 %v3186, %v3205
    %s3207 = scalar_lea.vmem [#allocation4], 32
    %3208 = vst.msk [vmem:[%s3207] sm:$0xff] %vm1027, %v3200
    %3209 = vst.msk [vmem:[%s3207 + $0x8] sm:$0xff] %vm1027, %v3202
    %3210 = vst.msk [vmem:[%s3207 + $0x10] sm:$0xff] %vm1027, %v3204
    %3211 = vst.msk [vmem:[%s3207 + $0x18] sm:$0xff] %vm1027, %v3206
    %v3213 = vsel %vm1027, %v3200, 0
    %3215 = vmatprep.subr.mxu0 0.0
    %3216 = vmatpush1.msra.mxu0 %v2633
    %3217 = vmatprep.subr.mxu0 0.0
    %3218 = vmatpush1.msra.mxu0 0.0
    %3219 = vmatprep.subr.mxu0 0.0
    %3220 = vmatpush1.msra.mxu0 0.0
    %3221 = vmatprep.subr.mxu0 0.0
    %3222 = vmatpush1.msra.mxu0 0.0
    %3223 = vmatprep.subr.mxu0 0.0
    %3224 = vmatpush1.msra.mxu0 0.0
    %3225 = vmatprep.subr.mxu0 0.0
    %3226 = vmatpush1.msra.mxu0 0.0
    %3227 = vmatprep.subr.mxu0 0.0
    %3228 = vmatpush1.msra.mxu0 0.0
    %3229 = vmatprep.subr.mxu0 0.0
    %3230 = vmatpush1.msra.mxu0 0.0
    %3231 = vmatprep.subr.mxu0 0.0
    %3232 = vmatpush1.msra.mxu0 0.0
    %3233 = vmatprep.subr.mxu0 0.0
    %3234 = vmatpush1.msra.mxu0 0.0
    %3235 = vmatprep.subr.mxu0 0.0
    %3236 = vmatpush1.msra.mxu0 0.0
    %3237 = vmatprep.subr.mxu0 0.0
    %3238 = vmatpush1.msra.mxu0 0.0
    %3239 = vmatprep.subr.mxu0 0.0
    %3240 = vmatpush1.msra.mxu0 0.0
    %3241 = vmatprep.subr.mxu0 0.0
    %3242 = vmatpush1.msra.mxu0 0.0
    %3243 = vmatprep.subr.mxu0 0.0
    %3244 = vmatpush1.msra.mxu0 0.0
    %3245 = vmatprep.subr.mxu0 0.0
    %3246 = vmatpush1.msra.mxu0 0.0
    %3247 = vmatprep.subr.mxu0 0.0
    %3248 = vmatpush1.msra.mxu0 0.0
    %3249 = vmatprep.subr.mxu0 0.0
    %3250 = vmatpush1.msra.mxu0 0.0
    %3251 = vmatprep.subr.mxu0 0.0
    %3252 = vmatpush1.msra.mxu0 0.0
    %3253 = vmatprep.subr.mxu0 0.0
    %3254 = vmatpush1.msra.mxu0 0.0
    %3255 = vmatprep.subr.mxu0 0.0
    %3256 = vmatpush1.msra.mxu0 0.0
    %3257 = vmatprep.subr.mxu0 0.0
    %3258 = vmatpush1.msra.mxu0 0.0
    %3259 = vmatprep.subr.mxu0 0.0
    %3260 = vmatpush1.msra.mxu0 0.0
    %3261 = vmatprep.subr.mxu0 0.0
    %3262 = vmatpush1.msra.mxu0 0.0
    %3263 = vmatprep.subr.mxu0 0.0
    %3264 = vmatpush1.msra.mxu0 0.0
    %3265 = vmatprep.subr.mxu0 0.0
    %3266 = vmatpush1.msra.mxu0 0.0
    %3267 = vmatprep.subr.mxu0 0.0
    %3268 = vmatpush1.msra.mxu0 0.0
    %3269 = vmatprep.subr.mxu0 0.0
    %3270 = vmatpush1.msra.mxu0 0.0
    %3271 = vmatprep.subr.mxu0 0.0
    %3272 = vmatpush1.msra.mxu0 0.0
    %3273 = vmatprep.subr.mxu0 0.0
    %3274 = vmatpush1.msra.mxu0 0.0
    %3275 = vmatprep.subr.mxu0 0.0
    %3276 = vmatpush1.msra.mxu0 0.0
    %3277 = vmatprep.subr.mxu0 0.0
    %3278 = vmatpush1.msra.mxu0 0.0
    %3279 = vmatprep.mubr.f32.mxu0 0.0
    %3280 = vmatmul.mubr.f32.gmra.mrb[0].mxu0 %v3213
    %v3281 = vpop.f32.mrb[0].mxu0
    %v3282 = vadd.f32 0.0, %v3281
    %v3283 = vpop.f32.mrb[0].mxu0
    %3284 = vdwg.mxu0
    %v3286 = vsel %vm1027, %v3202, 0
    %3288 = vmatprep.subr.mxu0 0.0
    %3289 = vmatpush1.msra.mxu0 %v2703
    %3290 = vmatprep.subr.mxu0 0.0
    %3291 = vmatpush1.msra.mxu0 0.0
    %3292 = vmatprep.subr.mxu0 0.0
    %3293 = vmatpush1.msra.mxu0 0.0
    %3294 = vmatprep.subr.mxu0 0.0
    %3295 = vmatpush1.msra.mxu0 0.0
    %3296 = vmatprep.subr.mxu0 0.0
    %3297 = vmatpush1.msra.mxu0 0.0
    %3298 = vmatprep.subr.mxu0 0.0
    %3299 = vmatpush1.msra.mxu0 0.0
    %3300 = vmatprep.subr.mxu0 0.0
    %3301 = vmatpush1.msra.mxu0 0.0
    %3302 = vmatprep.subr.mxu0 0.0
    %3303 = vmatpush1.msra.mxu0 0.0
    %3304 = vmatprep.subr.mxu0 0.0
    %3305 = vmatpush1.msra.mxu0 0.0
    %3306 = vmatprep.subr.mxu0 0.0
    %3307 = vmatpush1.msra.mxu0 0.0
    %3308 = vmatprep.subr.mxu0 0.0
    %3309 = vmatpush1.msra.mxu0 0.0
    %3310 = vmatprep.subr.mxu0 0.0
    %3311 = vmatpush1.msra.mxu0 0.0
    %3312 = vmatprep.subr.mxu0 0.0
    %3313 = vmatpush1.msra.mxu0 0.0
    %3314 = vmatprep.subr.mxu0 0.0
    %3315 = vmatpush1.msra.mxu0 0.0
    %3316 = vmatprep.subr.mxu0 0.0
    %3317 = vmatpush1.msra.mxu0 0.0
    %3318 = vmatprep.subr.mxu0 0.0
    %3319 = vmatpush1.msra.mxu0 0.0
    %3320 = vmatprep.subr.mxu0 0.0
    %3321 = vmatpush1.msra.mxu0 0.0
    %3322 = vmatprep.subr.mxu0 0.0
    %3323 = vmatpush1.msra.mxu0 0.0
    %3324 = vmatprep.subr.mxu0 0.0
    %3325 = vmatpush1.msra.mxu0 0.0
    %3326 = vmatprep.subr.mxu0 0.0
    %3327 = vmatpush1.msra.mxu0 0.0
    %3328 = vmatprep.subr.mxu0 0.0
    %3329 = vmatpush1.msra.mxu0 0.0
    %3330 = vmatprep.subr.mxu0 0.0
    %3331 = vmatpush1.msra.mxu0 0.0
    %3332 = vmatprep.subr.mxu0 0.0
    %3333 = vmatpush1.msra.mxu0 0.0
    %3334 = vmatprep.subr.mxu0 0.0
    %3335 = vmatpush1.msra.mxu0 0.0
    %3336 = vmatprep.subr.mxu0 0.0
    %3337 = vmatpush1.msra.mxu0 0.0
    %3338 = vmatprep.subr.mxu0 0.0
    %3339 = vmatpush1.msra.mxu0 0.0
    %3340 = vmatprep.subr.mxu0 0.0
    %3341 = vmatpush1.msra.mxu0 0.0
    %3342 = vmatprep.subr.mxu0 0.0
    %3343 = vmatpush1.msra.mxu0 0.0
    %3344 = vmatprep.subr.mxu0 0.0
    %3345 = vmatpush1.msra.mxu0 0.0
    %3346 = vmatprep.subr.mxu0 0.0
    %3347 = vmatpush1.msra.mxu0 0.0
    %3348 = vmatprep.subr.mxu0 0.0
    %3349 = vmatpush1.msra.mxu0 0.0
    %3350 = vmatprep.subr.mxu0 0.0
    %3351 = vmatpush1.msra.mxu0 0.0
    %3352 = vmatprep.mubr.f32.mxu0 0.0
    %3353 = vmatmul.mubr.f32.gmra.mrb[0].mxu0 %v3286
    %v3354 = vpop.f32.mrb[0].mxu0
    %v3355 = vadd.f32 0.0, %v3354
    %v3356 = vpop.f32.mrb[0].mxu0
    %3357 = vdwg.mxu0
    %v3359 = vsel %vm1027, %v3204, 0
    %3361 = vmatprep.subr.mxu0 0.0
    %3362 = vmatpush1.msra.mxu0 %v2773
    %3363 = vmatprep.subr.mxu0 0.0
    %3364 = vmatpush1.msra.mxu0 0.0
    %3365 = vmatprep.subr.mxu0 0.0
    %3366 = vmatpush1.msra.mxu0 0.0
    %3367 = vmatprep.subr.mxu0 0.0
    %3368 = vmatpush1.msra.mxu0 0.0
    %3369 = vmatprep.subr.mxu0 0.0
    %3370 = vmatpush1.msra.mxu0 0.0
    %3371 = vmatprep.subr.mxu0 0.0
    %3372 = vmatpush1.msra.mxu0 0.0
    %3373 = vmatprep.subr.mxu0 0.0
    %3374 = vmatpush1.msra.mxu0 0.0
    %3375 = vmatprep.subr.mxu0 0.0
    %3376 = vmatpush1.msra.mxu0 0.0
    %3377 = vmatprep.subr.mxu0 0.0
    %3378 = vmatpush1.msra.mxu0 0.0
    %3379 = vmatprep.subr.mxu0 0.0
    %3380 = vmatpush1.msra.mxu0 0.0
    %3381 = vmatprep.subr.mxu0 0.0
    %3382 = vmatpush1.msra.mxu0 0.0
    %3383 = vmatprep.subr.mxu0 0.0
    %3384 = vmatpush1.msra.mxu0 0.0
    %3385 = vmatprep.subr.mxu0 0.0
    %3386 = vmatpush1.msra.mxu0 0.0
    %3387 = vmatprep.subr.mxu0 0.0
    %3388 = vmatpush1.msra.mxu0 0.0
    %3389 = vmatprep.subr.mxu0 0.0
    %3390 = vmatpush1.msra.mxu0 0.0
    %3391 = vmatprep.subr.mxu0 0.0
    %3392 = vmatpush1.msra.mxu0 0.0
    %3393 = vmatprep.subr.mxu0 0.0
    %3394 = vmatpush1.msra.mxu0 0.0
    %3395 = vmatprep.subr.mxu0 0.0
    %3396 = vmatpush1.msra.mxu0 0.0
    %3397 = vmatprep.subr.mxu0 0.0
    %3398 = vmatpush1.msra.mxu0 0.0
    %3399 = vmatprep.subr.mxu0 0.0
    %3400 = vmatpush1.msra.mxu0 0.0
    %3401 = vmatprep.subr.mxu0 0.0
    %3402 = vmatpush1.msra.mxu0 0.0
    %3403 = vmatprep.subr.mxu0 0.0
    %3404 = vmatpush1.msra.mxu0 0.0
    %3405 = vmatprep.subr.mxu0 0.0
    %3406 = vmatpush1.msra.mxu0 0.0
    %3407 = vmatprep.subr.mxu0 0.0
    %3408 = vmatpush1.msra.mxu0 0.0
    %3409 = vmatprep.subr.mxu0 0.0
    %3410 = vmatpush1.msra.mxu0 0.0
    %3411 = vmatprep.subr.mxu0 0.0
    %3412 = vmatpush1.msra.mxu0 0.0
    %3413 = vmatprep.subr.mxu0 0.0
    %3414 = vmatpush1.msra.mxu0 0.0
    %3415 = vmatprep.subr.mxu0 0.0
    %3416 = vmatpush1.msra.mxu0 0.0
    %3417 = vmatprep.subr.mxu0 0.0
    %3418 = vmatpush1.msra.mxu0 0.0
    %3419 = vmatprep.subr.mxu0 0.0
    %3420 = vmatpush1.msra.mxu0 0.0
    %3421 = vmatprep.subr.mxu0 0.0
    %3422 = vmatpush1.msra.mxu0 0.0
    %3423 = vmatprep.subr.mxu0 0.0
    %3424 = vmatpush1.msra.mxu0 0.0
    %3425 = vmatprep.mubr.f32.mxu0 0.0
    %3426 = vmatmul.mubr.f32.gmra.mrb[0].mxu0 %v3359
    %v3427 = vpop.f32.mrb[0].mxu0
    %v3428 = vadd.f32 0.0, %v3427
    %v3429 = vpop.f32.mrb[0].mxu0
    %3430 = vdwg.mxu0
    %v3432 = vsel %vm1027, %v3206, 0
    %3434 = vmatprep.subr.mxu0 0.0
    %3435 = vmatpush1.msra.mxu0 %v2843
    %3436 = vmatprep.subr.mxu0 0.0
    %3437 = vmatpush1.msra.mxu0 0.0
    %3438 = vmatprep.subr.mxu0 0.0
    %3439 = vmatpush1.msra.mxu0 0.0
    %3440 = vmatprep.subr.mxu0 0.0
    %3441 = vmatpush1.msra.mxu0 0.0
    %3442 = vmatprep.subr.mxu0 0.0
    %3443 = vmatpush1.msra.mxu0 0.0
    %3444 = vmatprep.subr.mxu0 0.0
    %3445 = vmatpush1.msra.mxu0 0.0
    %3446 = vmatprep.subr.mxu0 0.0
    %3447 = vmatpush1.msra.mxu0 0.0
    %3448 = vmatprep.subr.mxu0 0.0
    %3449 = vmatpush1.msra.mxu0 0.0
    %3450 = vmatprep.subr.mxu0 0.0
    %3451 = vmatpush1.msra.mxu0 0.0
    %3452 = vmatprep.subr.mxu0 0.0
    %3453 = vmatpush1.msra.mxu0 0.0
    %3454 = vmatprep.subr.mxu0 0.0
    %3455 = vmatpush1.msra.mxu0 0.0
    %3456 = vmatprep.subr.mxu0 0.0
    %3457 = vmatpush1.msra.mxu0 0.0
    %3458 = vmatprep.subr.mxu0 0.0
    %3459 = vmatpush1.msra.mxu0 0.0
    %3460 = vmatprep.subr.mxu0 0.0
    %3461 = vmatpush1.msra.mxu0 0.0
    %3462 = vmatprep.subr.mxu0 0.0
    %3463 = vmatpush1.msra.mxu0 0.0
    %3464 = vmatprep.subr.mxu0 0.0
    %3465 = vmatpush1.msra.mxu0 0.0
    %3466 = vmatprep.subr.mxu0 0.0
    %3467 = vmatpush1.msra.mxu0 0.0
    %3468 = vmatprep.subr.mxu0 0.0
    %3469 = vmatpush1.msra.mxu0 0.0
    %3470 = vmatprep.subr.mxu0 0.0
    %3471 = vmatpush1.msra.mxu0 0.0
    %3472 = vmatprep.subr.mxu0 0.0
    %3473 = vmatpush1.msra.mxu0 0.0
    %3474 = vmatprep.subr.mxu0 0.0
    %3475 = vmatpush1.msra.mxu0 0.0
    %3476 = vmatprep.subr.mxu0 0.0
    %3477 = vmatpush1.msra.mxu0 0.0
    %3478 = vmatprep.subr.mxu0 0.0
    %3479 = vmatpush1.msra.mxu0 0.0
    %3480 = vmatprep.subr.mxu0 0.0
    %3481 = vmatpush1.msra.mxu0 0.0
    %3482 = vmatprep.subr.mxu0 0.0
    %3483 = vmatpush1.msra.mxu0 0.0
    %3484 = vmatprep.subr.mxu0 0.0
    %3485 = vmatpush1.msra.mxu0 0.0
    %3486 = vmatprep.subr.mxu0 0.0
    %3487 = vmatpush1.msra.mxu0 0.0
    %3488 = vmatprep.subr.mxu0 0.0
    %3489 = vmatpush1.msra.mxu0 0.0
    %3490 = vmatprep.subr.mxu0 0.0
    %3491 = vmatpush1.msra.mxu0 0.0
    %3492 = vmatprep.subr.mxu0 0.0
    %3493 = vmatpush1.msra.mxu0 0.0
    %3494 = vmatprep.subr.mxu0 0.0
    %3495 = vmatpush1.msra.mxu0 0.0
    %3496 = vmatprep.subr.mxu0 0.0
    %3497 = vmatpush1.msra.mxu0 0.0
    %3498 = vmatprep.mubr.f32.mxu0 0.0
    %3499 = vmatmul.mubr.f32.gmra.mrb[0].mxu0 %v3432
    %v3500 = vpop.f32.mrb[0].mxu0
    %v3501 = vadd.f32 0.0, %v3500
    %v3502 = vpop.f32.mrb[0].mxu0
    %3503 = vdwg.mxu0
    %v3505 = vsel %vm1027, %v3282, 0
    %3507 = vmatprep.subr.mxu0 0.0
    %3508 = vmatpush1.msra.mxu0 %v83
    %3509 = vmatprep.subr.mxu0 0.0
    %3510 = vmatpush1.msra.mxu0 0.0
    %3511 = vmatprep.subr.mxu0 0.0
    %3512 = vmatpush1.msra.mxu0 0.0
    %3513 = vmatprep.subr.mxu0 0.0
    %3514 = vmatpush1.msra.mxu0 0.0
    %3515 = vmatprep.subr.mxu0 0.0
    %3516 = vmatpush1.msra.mxu0 0.0
    %3517 = vmatprep.subr.mxu0 0.0
    %3518 = vmatpush1.msra.mxu0 0.0
    %3519 = vmatprep.subr.mxu0 0.0
    %3520 = vmatpush1.msra.mxu0 0.0
    %3521 = vmatprep.subr.mxu0 0.0
    %3522 = vmatpush1.msra.mxu0 0.0
    %3523 = vmatprep.subr.mxu0 0.0
    %3524 = vmatpush1.msra.mxu0 0.0
    %3525 = vmatprep.subr.mxu0 0.0
    %3526 = vmatpush1.msra.mxu0 0.0
    %3527 = vmatprep.subr.mxu0 0.0
    %3528 = vmatpush1.msra.mxu0 0.0
    %3529 = vmatprep.subr.mxu0 0.0
    %3530 = vmatpush1.msra.mxu0 0.0
    %3531 = vmatprep.subr.mxu0 0.0
    %3532 = vmatpush1.msra.mxu0 0.0
    %3533 = vmatprep.subr.mxu0 0.0
    %3534 = vmatpush1.msra.mxu0 0.0
    %3535 = vmatprep.subr.mxu0 0.0
    %3536 = vmatpush1.msra.mxu0 0.0
    %3537 = vmatprep.subr.mxu0 0.0
    %3538 = vmatpush1.msra.mxu0 0.0
    %3539 = vmatprep.subr.mxu0 0.0
    %3540 = vmatpush1.msra.mxu0 0.0
    %3541 = vmatprep.subr.mxu0 0.0
    %3542 = vmatpush1.msra.mxu0 0.0
    %3543 = vmatprep.subr.mxu0 0.0
    %3544 = vmatpush1.msra.mxu0 0.0
    %3545 = vmatprep.subr.mxu0 0.0
    %3546 = vmatpush1.msra.mxu0 0.0
    %3547 = vmatprep.subr.mxu0 0.0
    %3548 = vmatpush1.msra.mxu0 0.0
    %3549 = vmatprep.subr.mxu0 0.0
    %3550 = vmatpush1.msra.mxu0 0.0
    %3551 = vmatprep.subr.mxu0 0.0
    %3552 = vmatpush1.msra.mxu0 0.0
    %3553 = vmatprep.subr.mxu0 0.0
    %3554 = vmatpush1.msra.mxu0 0.0
    %3555 = vmatprep.subr.mxu0 0.0
    %3556 = vmatpush1.msra.mxu0 0.0
    %3557 = vmatprep.subr.mxu0 0.0
    %3558 = vmatpush1.msra.mxu0 0.0
    %3559 = vmatprep.subr.mxu0 0.0
    %3560 = vmatpush1.msra.mxu0 0.0
    %3561 = vmatprep.subr.mxu0 0.0
    %3562 = vmatpush1.msra.mxu0 0.0
    %3563 = vmatprep.subr.mxu0 0.0
    %3564 = vmatpush1.msra.mxu0 0.0
    %3565 = vmatprep.subr.mxu0 0.0
    %3566 = vmatpush1.msra.mxu0 0.0
    %3567 = vmatprep.subr.mxu0 0.0
    %3568 = vmatpush1.msra.mxu0 0.0
    %3569 = vmatprep.subr.mxu0 0.0
    %3570 = vmatpush1.msra.mxu0 0.0
    %3571 = vmatprep.mubr.f32.mxu0 0.0
    %3572 = vmatmul.mubr.f32.gmra.mrb[0].mxu0 %v3505
    %v3573 = vpop.f32.mrb[0].mxu0
    %v3574 = vadd.f32 0.0, %v3573
    %v3575 = vpop.f32.mrb[0].mxu0
    %3576 = vdwg.mxu0
    %v3578 = vsel %vm1027, %v3355, 0
    %3580 = vmatprep.subr.mxu0 0.0
    %3581 = vmatpush1.msra.mxu0 %v84
    %3582 = vmatprep.subr.mxu0 0.0
    %3583 = vmatpush1.msra.mxu0 0.0
    %3584 = vmatprep.subr.mxu0 0.0
    %3585 = vmatpush1.msra.mxu0 0.0
    %3586 = vmatprep.subr.mxu0 0.0
    %3587 = vmatpush1.msra.mxu0 0.0
    %3588 = vmatprep.subr.mxu0 0.0
    %3589 = vmatpush1.msra.mxu0 0.0
    %3590 = vmatprep.subr.mxu0 0.0
    %3591 = vmatpush1.msra.mxu0 0.0
    %3592 = vmatprep.subr.mxu0 0.0
    %3593 = vmatpush1.msra.mxu0 0.0
    %3594 = vmatprep.subr.mxu0 0.0
    %3595 = vmatpush1.msra.mxu0 0.0
    %3596 = vmatprep.subr.mxu0 0.0
    %3597 = vmatpush1.msra.mxu0 0.0
    %3598 = vmatprep.subr.mxu0 0.0
    %3599 = vmatpush1.msra.mxu0 0.0
    %3600 = vmatprep.subr.mxu0 0.0
    %3601 = vmatpush1.msra.mxu0 0.0
    %3602 = vmatprep.subr.mxu0 0.0
    %3603 = vmatpush1.msra.mxu0 0.0
    %3604 = vmatprep.subr.mxu0 0.0
    %3605 = vmatpush1.msra.mxu0 0.0
    %3606 = vmatprep.subr.mxu0 0.0
    %3607 = vmatpush1.msra.mxu0 0.0
    %3608 = vmatprep.subr.mxu0 0.0
    %3609 = vmatpush1.msra.mxu0 0.0
    %3610 = vmatprep.subr.mxu0 0.0
    %3611 = vmatpush1.msra.mxu0 0.0
    %3612 = vmatprep.subr.mxu0 0.0
    %3613 = vmatpush1.msra.mxu0 0.0
    %3614 = vmatprep.subr.mxu0 0.0
    %3615 = vmatpush1.msra.mxu0 0.0
    %3616 = vmatprep.subr.mxu0 0.0
    %3617 = vmatpush1.msra.mxu0 0.0
    %3618 = vmatprep.subr.mxu0 0.0
    %3619 = vmatpush1.msra.mxu0 0.0
    %3620 = vmatprep.subr.mxu0 0.0
    %3621 = vmatpush1.msra.mxu0 0.0
    %3622 = vmatprep.subr.mxu0 0.0
    %3623 = vmatpush1.msra.mxu0 0.0
    %3624 = vmatprep.subr.mxu0 0.0
    %3625 = vmatpush1.msra.mxu0 0.0
    %3626 = vmatprep.subr.mxu0 0.0
    %3627 = vmatpush1.msra.mxu0 0.0
    %3628 = vmatprep.subr.mxu0 0.0
    %3629 = vmatpush1.msra.mxu0 0.0
    %3630 = vmatprep.subr.mxu0 0.0
    %3631 = vmatpush1.msra.mxu0 0.0
    %3632 = vmatprep.subr.mxu0 0.0
    %3633 = vmatpush1.msra.mxu0 0.0
    %3634 = vmatprep.subr.mxu0 0.0
    %3635 = vmatpush1.msra.mxu0 0.0
    %3636 = vmatprep.subr.mxu0 0.0
    %3637 = vmatpush1.msra.mxu0 0.0
    %3638 = vmatprep.subr.mxu0 0.0
    %3639 = vmatpush1.msra.mxu0 0.0
    %3640 = vmatprep.subr.mxu0 0.0
    %3641 = vmatpush1.msra.mxu0 0.0
    %3642 = vmatprep.subr.mxu0 0.0
    %3643 = vmatpush1.msra.mxu0 0.0
    %3644 = vmatprep.mubr.f32.mxu0 0.0
    %3645 = vmatmul.mubr.f32.gmra.mrb[0].mxu0 %v3578
    %v3646 = vpop.f32.mrb[0].mxu0
    %v3647 = vadd.f32 0.0, %v3646
    %v3648 = vpop.f32.mrb[0].mxu0
    %3649 = vdwg.mxu0
    %v3651 = vsel %vm1027, %v3428, 0
    %3653 = vmatprep.subr.mxu0 0.0
    %3654 = vmatpush1.msra.mxu0 %v85
    %3655 = vmatprep.subr.mxu0 0.0
    %3656 = vmatpush1.msra.mxu0 0.0
    %3657 = vmatprep.subr.mxu0 0.0
    %3658 = vmatpush1.msra.mxu0 0.0
    %3659 = vmatprep.subr.mxu0 0.0
    %3660 = vmatpush1.msra.mxu0 0.0
    %3661 = vmatprep.subr.mxu0 0.0
    %3662 = vmatpush1.msra.mxu0 0.0
    %3663 = vmatprep.subr.mxu0 0.0
    %3664 = vmatpush1.msra.mxu0 0.0
    %3665 = vmatprep.subr.mxu0 0.0
    %3666 = vmatpush1.msra.mxu0 0.0
    %3667 = vmatprep.subr.mxu0 0.0
    %3668 = vmatpush1.msra.mxu0 0.0
    %3669 = vmatprep.subr.mxu0 0.0
    %3670 = vmatpush1.msra.mxu0 0.0
    %3671 = vmatprep.subr.mxu0 0.0
    %3672 = vmatpush1.msra.mxu0 0.0
    %3673 = vmatprep.subr.mxu0 0.0
    %3674 = vmatpush1.msra.mxu0 0.0
    %3675 = vmatprep.subr.mxu0 0.0
    %3676 = vmatpush1.msra.mxu0 0.0
    %3677 = vmatprep.subr.mxu0 0.0
    %3678 = vmatpush1.msra.mxu0 0.0
    %3679 = vmatprep.subr.mxu0 0.0
    %3680 = vmatpush1.msra.mxu0 0.0
    %3681 = vmatprep.subr.mxu0 0.0
    %3682 = vmatpush1.msra.mxu0 0.0
    %3683 = vmatprep.subr.mxu0 0.0
    %3684 = vmatpush1.msra.mxu0 0.0
    %3685 = vmatprep.subr.mxu0 0.0
    %3686 = vmatpush1.msra.mxu0 0.0
    %3687 = vmatprep.subr.mxu0 0.0
    %3688 = vmatpush1.msra.mxu0 0.0
    %3689 = vmatprep.subr.mxu0 0.0
    %3690 = vmatpush1.msra.mxu0 0.0
    %3691 = vmatprep.subr.mxu0 0.0
    %3692 = vmatpush1.msra.mxu0 0.0
    %3693 = vmatprep.subr.mxu0 0.0
    %3694 = vmatpush1.msra.mxu0 0.0
    %3695 = vmatprep.subr.mxu0 0.0
    %3696 = vmatpush1.msra.mxu0 0.0
    %3697 = vmatprep.subr.mxu0 0.0
    %3698 = vmatpush1.msra.mxu0 0.0
    %3699 = vmatprep.subr.mxu0 0.0
    %3700 = vmatpush1.msra.mxu0 0.0
    %3701 = vmatprep.subr.mxu0 0.0
    %3702 = vmatpush1.msra.mxu0 0.0
    %3703 = vmatprep.subr.mxu0 0.0
    %3704 = vmatpush1.msra.mxu0 0.0
    %3705 = vmatprep.subr.mxu0 0.0
    %3706 = vmatpush1.msra.mxu0 0.0
    %3707 = vmatprep.subr.mxu0 0.0
    %3708 = vmatpush1.msra.mxu0 0.0
    %3709 = vmatprep.subr.mxu0 0.0
    %3710 = vmatpush1.msra.mxu0 0.0
    %3711 = vmatprep.subr.mxu0 0.0
    %3712 = vmatpush1.msra.mxu0 0.0
    %3713 = vmatprep.subr.mxu0 0.0
    %3714 = vmatpush1.msra.mxu0 0.0
    %3715 = vmatprep.subr.mxu0 0.0
    %3716 = vmatpush1.msra.mxu0 0.0
    %3717 = vmatprep.mubr.f32.mxu0 0.0
    %3718 = vmatmul.mubr.f32.gmra.mrb[0].mxu0 %v3651
    %v3719 = vpop.f32.mrb[0].mxu0
    %v3720 = vadd.f32 0.0, %v3719
    %v3721 = vpop.f32.mrb[0].mxu0
    %3722 = vdwg.mxu0
    %v3724 = vsel %vm1027, %v3501, 0
    %3726 = vmatprep.subr.mxu0 0.0
    %3727 = vmatpush1.msra.mxu0 %v86
    %3728 = vmatprep.subr.mxu0 0.0
    %3729 = vmatpush1.msra.mxu0 0.0
    %3730 = vmatprep.subr.mxu0 0.0
    %3731 = vmatpush1.msra.mxu0 0.0
    %3732 = vmatprep.subr.mxu0 0.0
    %3733 = vmatpush1.msra.mxu0 0.0
    %3734 = vmatprep.subr.mxu0 0.0
    %3735 = vmatpush1.msra.mxu0 0.0
    %3736 = vmatprep.subr.mxu0 0.0
    %3737 = vmatpush1.msra.mxu0 0.0
    %3738 = vmatprep.subr.mxu0 0.0
    %3739 = vmatpush1.msra.mxu0 0.0
    %3740 = vmatprep.subr.mxu0 0.0
    %3741 = vmatpush1.msra.mxu0 0.0
    %3742 = vmatprep.subr.mxu0 0.0
    %3743 = vmatpush1.msra.mxu0 0.0
    %3744 = vmatprep.subr.mxu0 0.0
    %3745 = vmatpush1.msra.mxu0 0.0
    %3746 = vmatprep.subr.mxu0 0.0
    %3747 = vmatpush1.msra.mxu0 0.0
    %3748 = vmatprep.subr.mxu0 0.0
    %3749 = vmatpush1.msra.mxu0 0.0
    %3750 = vmatprep.subr.mxu0 0.0
    %3751 = vmatpush1.msra.mxu0 0.0
    %3752 = vmatprep.subr.mxu0 0.0
    %3753 = vmatpush1.msra.mxu0 0.0
    %3754 = vmatprep.subr.mxu0 0.0
    %3755 = vmatpush1.msra.mxu0 0.0
    %3756 = vmatprep.subr.mxu0 0.0
    %3757 = vmatpush1.msra.mxu0 0.0
    %3758 = vmatprep.subr.mxu0 0.0
    %3759 = vmatpush1.msra.mxu0 0.0
    %3760 = vmatprep.subr.mxu0 0.0
    %3761 = vmatpush1.msra.mxu0 0.0
    %3762 = vmatprep.subr.mxu0 0.0
    %3763 = vmatpush1.msra.mxu0 0.0
    %3764 = vmatprep.subr.mxu0 0.0
    %3765 = vmatpush1.msra.mxu0 0.0
    %3766 = vmatprep.subr.mxu0 0.0
    %3767 = vmatpush1.msra.mxu0 0.0
    %3768 = vmatprep.subr.mxu0 0.0
    %3769 = vmatpush1.msra.mxu0 0.0
    %3770 = vmatprep.subr.mxu0 0.0
    %3771 = vmatpush1.msra.mxu0 0.0
    %3772 = vmatprep.subr.mxu0 0.0
    %3773 = vmatpush1.msra.mxu0 0.0
    %3774 = vmatprep.subr.mxu0 0.0
    %3775 = vmatpush1.msra.mxu0 0.0
    %3776 = vmatprep.subr.mxu0 0.0
    %3777 = vmatpush1.msra.mxu0 0.0
    %3778 = vmatprep.subr.mxu0 0.0
    %3779 = vmatpush1.msra.mxu0 0.0
    %3780 = vmatprep.subr.mxu0 0.0
    %3781 = vmatpush1.msra.mxu0 0.0
    %3782 = vmatprep.subr.mxu0 0.0
    %3783 = vmatpush1.msra.mxu0 0.0
    %3784 = vmatprep.subr.mxu0 0.0
    %3785 = vmatpush1.msra.mxu0 0.0
    %3786 = vmatprep.subr.mxu0 0.0
    %3787 = vmatpush1.msra.mxu0 0.0
    %3788 = vmatprep.subr.mxu0 0.0
    %3789 = vmatpush1.msra.mxu0 0.0
    %3790 = vmatprep.mubr.f32.mxu0 0.0
    %3791 = vmatmul.mubr.f32.gmra.mrb[0].mxu0 %v3724
    %v3792 = vpop.f32.mrb[0].mxu0
    %v3793 = vadd.f32 0.0, %v3792
    %v3794 = vpop.f32.mrb[0].mxu0
    %3795 = vdwg.mxu0
    %v3796 = vsel %vm129, %v3574, 0.0
    %v3797 = vsel %vm129, %v3647, 0.0
    %v3798 = vadd.f32 %v3796, %v3797
    %v3799 = vsel %vm129, %v3720, 0.0
    %v3800 = vadd.f32 %v3798, %v3799
    %v3801 = vsel %vm129, %v3793, 0.0
    %v3802 = vadd.f32 %v3800, %v3801
    %v3803 = vadd.f32 %v3802, %v1987
    %s3804 = scalar_lea.vmem [#allocation2], 8
    %3805 = vst.msk [vmem:[%s3804] sm:$0xff] %vm129, %v3803
    // Predicated region
    $region34: #{tpu_custom_call.1} parent=1 // pred_check
      _
    $region35: #{tpu_custom_call.1} parent=1 // pred_check_branch
      %3807 = sbr.rel (0) target = $region37
    $region36: #{tpu_custom_call.1} parent=1 // pred_region
      %s3809 = ssub.s32 256, 256
      %3810 = vsyncadd [#allocation3], %s3809
      %s3811 = sshll.u32 [#allocation2], 4
      %s3812 = int_to_ptr.vmem [resolvable:$true] %s3811
      %3817 = dma.vmem_to_hbm [thread:$0]  %s3812, 256, %s8, [#allocation3], 128, 128, 8
    $region37: #{tpu_custom_call.1} parent=1 // pred_fallthru
      _
    // Predicated region
    $region38: #{tpu_custom_call.1} parent=1 // pred_check
      _
    $region39: #{tpu_custom_call.1} parent=1 // pred_check_branch
      %3819 = sbr.rel (0) target = $region41
    $region40: #{tpu_custom_call.1} parent=1 // pred_region
      %s3821 = ssub.s32 1024, 1024
      %3822 = vsyncadd [#allocation5], %s3821
      %s3823 = sshll.u32 [#allocation4], 4
      %s3824 = int_to_ptr.vmem [resolvable:$true] %s3823
      %3829 = dma.vmem_to_hbm [thread:$0]  %s3824, 1024, %s9, [#allocation5], 128, 128, 8
    $region41: #{tpu_custom_call.1} parent=1 // pred_fallthru
      _
    // Predicated region
    $region42: #{tpu_custom_call.1} parent=1 // pred_check
      _
    $region43: #{tpu_custom_call.1} parent=1 // pred_check_branch
      %3831 = sbr.rel (0) target = $region45
    $region44: #{tpu_custom_call.1} parent=1 // pred_region
      %3832 = dma.done [#allocation3], 256
    $region45: #{tpu_custom_call.1} parent=1 // pred_fallthru
      _
    // Predicated region
    $region46: #{tpu_custom_call.1} parent=1 // pred_check
      _
    $region47: #{tpu_custom_call.1} parent=1 // pred_check_branch
      %3834 = sbr.rel (0) target = $region49
    $region48: #{tpu_custom_call.1} parent=1 // pred_region
      %3835 = dma.done [#allocation5], 1024
    $region49: #{tpu_custom_call.1} parent=1 // pred_fallthru
      _
    %3836 = vsyncpa [#allocation3], 1
    %3837 = vsyncpa [#allocation5], 1

</llo_original>
